<compile_context>
chip_gen: v5e
topology: v5e:2x2
jax: 0.10.0
libtpu: 0.0.40
codegen_flags: <defaults>
</compile_context>

<pallas_src>
import functools

import jax
import jax.numpy as jnp
from jax.experimental import pallas as pl
from jax.experimental.pallas import tpu as pltpu

POOL = 16          # AvgPool2d kernel/stride (1, 16)
BN_EPS = 1e-5      # nn.BatchNorm2d default eps


# ----------------------------------------------------------------------------
# Fused kernel: conv(Toeplitz matmul) + bias + ReLU + (pool+BN folded) fc1 + ReLU + fc2
# ----------------------------------------------------------------------------
def _fused_kernel(x_ref, wt_ref, cb_ref, w1_ref, b1_ref, w2_ref, b2_ref, o_ref,
                  *, L, hidden):
    # x_ref : (1, L, T)           wt_ref: (T, NC)        cb_ref: (1, NC)
    # w1_ref: (L, hidden, NC)     b1_ref: (1, hidden)
    # w2_ref: (hidden, C)         b2_ref: (1, C)         o_ref : (1, 1, C)
    x = x_ref[0]                                                        # (L, T)

    # All three conv branches in one MXU matmul; columns ordered (chan, branch, time).
    conv = jnp.dot(x, wt_ref[...], preferred_element_type=jnp.float32)  # (L, NC)
    conv = jnp.maximum(conv + cb_ref[...], 0.0)                         # bias + ReLU

    # fc1 with AvgPool(1,16) and BatchNorm folded into w1 (built in the wrapper).
    # The contraction over the EEG-electrode axis L is unrolled (L is tiny).
    h = jnp.zeros((1, hidden), jnp.float32)
    for l in range(L):
        h = h + jax.lax.dot_general(
            conv[l:l + 1, :], w1_ref[l],
            dimension_numbers=(((1,), (1,)), ((), ())),   # (1,NC) x (hidden,NC)^T
            preferred_element_type=jnp.float32)
    h = jnp.maximum(h + b1_ref[...], 0.0)                               # fc1 bias + ReLU

    out = jnp.dot(h, w2_ref[...], preferred_element_type=jnp.float32) + b2_ref[...]
    o_ref[0] = out.astype(o_ref.dtype)


# ----------------------------------------------------------------------------
# Wrapper: build Toeplitz conv matrix, fold pool+BN into fc1, single pallas_call
# ----------------------------------------------------------------------------
def _branch_toeplitz(w, T, Wc_eff):
    """Toeplitz matrix of a valid 1-D cross-correlation -> (T, num_T, Wc_eff)."""
    num_T, k = w.shape
    t = jnp.arange(T)[:, None]                    # (T, 1)
    wi = jnp.arange(Wc_eff)[None, :]              # (1, Wc_eff)
    j = t - wi                                    # tap index
    valid = (j >= 0) & (j < k)
    jc = jnp.clip(j, 0, k - 1)
    vals = jnp.where(valid[None, :, :], w[:, jc], 0.0)   # (num_T, T, Wc_eff)
    return jnp.transpose(vals, (1, 0, 2))                # (T, num_T, Wc_eff)


def tception_forward(x4, params):
    x = x4[:, 0]                                  # squeeze channel: (B, L, T)
    B, L, T = x.shape
    num_T = params["conv1_w"].shape[0]
    hidden = params["fc1_w"].shape[1]
    C = params["fc2_w"].shape[1]

    ks = [params[f"conv{i}_w"].shape[1] for i in (1, 2, 3)]
    Wps = [(T - k + 1) // POOL for k in ks]       # pooled widths (floor mode)
    Wc_effs = [POOL * wp for wp in Wps]           # conv cols that survive pooling
    Wcat = sum(Wps)                               # concatenated pooled width
    NC = num_T * sum(Wc_effs)                     # conv matmul output width (lane dense)
    F = num_T * L * Wcat
    assert params["fc1_w"].shape[0] == F

    # ---- conv as one MXU matmul: combined Toeplitz weights, columns (c, branch, w) ----
    blocks = [_branch_toeplitz(params[f"conv{i}_w"], T, wce)
              for i, wce in zip((1, 2, 3), Wc_effs)]
    wt_all = jnp.concatenate(blocks, axis=-1).reshape(T, NC)            # (T, NC)
    cb_all = jnp.concatenate(
        [jnp.broadcast_to(params[f"conv{i}_b"][:, None], (num_T, wce))
         for i, wce in zip((1, 2, 3), Wc_effs)], axis=-1).reshape(1, NC)

    # ---- fold eval-mode BatchNorm2d + AvgPool(1,16) into fc1 ----
    inv_std = 1.0 / jnp.sqrt(params["bn_var"] + BN_EPS)
    scale_c = params["bn_gamma"] * inv_std
    shift_c = params["bn_beta"] - params["bn_mean"] * scale_c

    w1 = params["fc1_w"].reshape(num_T, L, Wcat, hidden) * scale_c[:, None, None, None]
    w1 = jnp.transpose(w1, (1, 3, 0, 2))                   # (L, hidden, num_T, Wcat)
    w1c = jnp.repeat(w1, POOL, axis=3) * (1.0 / POOL)      # expand each pooled col to 16 conv cols
    w1c = w1c.reshape(L, hidden, NC)                       # lane-dense last dim

    shift_f = jnp.broadcast_to(shift_c[:, None, None], (num_T, L, Wcat)).reshape(F)
    b1p = (params["fc1_b"] + shift_f @ params["fc1_w"]).reshape(1, hidden)

    kernel = functools.partial(_fused_kernel, L=L, hidden=hidden)
    out3 = pl.pallas_call(
        kernel,
        out_shape=jax.ShapeDtypeStruct((B, 1, C), x.dtype),
        grid=(B,),
        in_specs=[
            pl.BlockSpec((1, L, T), lambda b: (b, 0, 0)),          # per-batch block
            pl.BlockSpec((T, NC), lambda b: (0, 0)),               # Toeplitz conv weights
            pl.BlockSpec((1, NC), lambda b: (0, 0)),               # conv bias
            pl.BlockSpec((L, hidden, NC), lambda b: (0, 0, 0)),    # fc1 (pool+BN folded)
            pl.BlockSpec((1, hidden), lambda b: (0, 0)),           # fc1 bias (BN folded)
            pl.BlockSpec((hidden, C), lambda b: (0, 0)),           # fc2 weight
            pl.BlockSpec((1, C), lambda b: (0, 0)),                # fc2 bias
        ],
        out_specs=pl.BlockSpec((1, 1, C), lambda b: (b, 0, 0)),
        compiler_params=pltpu.CompilerParams(dimension_semantics=("parallel",)),
    )(x, wt_all, cb_all, w1c, b1p, params["fc2_w"], params["fc2_b"].reshape(1, C))
    return out3[:, 0, :]


# ----------------------------------------------------------------------------
# Pure-JAX reference for verification
# ----------------------------------------------------------------------------
def reference_forward(x4, params):
    x = x4[:, 0]
    hp = jax.lax.Precision.HIGHEST

    def branch(w, b):
        k = w.shape[1]
        Wc = x.shape[-1] - k + 1
        cols = jnp.stack([x[:, :, j:j + Wc] for j in range(k)], axis=-1)  # (B,L,Wc,k)
        conv = jnp.einsum("blwk,ck->bclw", cols, w, precision=hp) + b[None, :, None, None]
        conv = jnp.maximum(conv, 0.0)
        Wp = Wc // POOL
        Bb, Cc, Ll, _ = conv.shape
        return conv[..., :Wp * POOL].reshape(Bb, Cc, Ll, Wp, POOL).mean(-1)

    outs = [branch(params[f"conv{i}_w"], params[f"conv{i}_b"]) for i in (1, 2, 3)]
    out = jnp.concatenate(outs, axis=-1)
    inv_std = 1.0 / jnp.sqrt(params["bn_var"] + BN_EPS)
    out = ((out - params["bn_mean"][None, :, None, None]) * inv_std[None, :, None, None]
           * params["bn_gamma"][None, :, None, None] + params["bn_beta"][None, :, None, None])
    flat = out.reshape(out.shape[0], -1)
    h = jnp.maximum(jnp.dot(flat, params["fc1_w"], precision=hp) + params["fc1_b"], 0.0)
    return jnp.dot(h, params["fc2_w"], precision=hp) + params["fc2_b"]


if __name__ == "__main__":
    # Shapes consistent with Tception(num_classes=3, input_size=(4,128),
    # sampling_rate=64, num_T=8, hidden=32, dropout_rate=0.5)
    B = 2
    L, T = 4, 128
    sampling_rate = 64
    num_T = 8
    hidden = 32
    num_classes = 3

    inception_window = [0.5, 0.25, 0.125]
    ks = [int(w * sampling_rate) for w in inception_window]          # [32, 16, 8]
    Wps = [(T - k + 1) // POOL for k in ks]                          # [6, 7, 7]
    F = num_T * L * sum(Wps)                                         # 640

    key = jax.random.PRNGKey(0)
    keys = jax.random.split(key, 16)
    params = {
        "conv1_w": 0.1 * jax.random.normal(keys[0], (num_T, ks[0]), jnp.float32),
        "conv1_b": 0.1 * jax.random.normal(keys[1], (num_T,), jnp.float32),
        "conv2_w": 0.1 * jax.random.normal(keys[2], (num_T, ks[1]), jnp.float32),
        "conv2_b": 0.1 * jax.random.normal(keys[3], (num_T,), jnp.float32),
        "conv3_w": 0.1 * jax.random.normal(keys[4], (num_T, ks[2]), jnp.float32),
        "conv3_b": 0.1 * jax.random.normal(keys[5], (num_T,), jnp.float32),
        "bn_gamma": 1.0 + 0.1 * jax.random.normal(keys[6], (num_T,), jnp.float32),
        "bn_beta": 0.1 * jax.random.normal(keys[7], (num_T,), jnp.float32),
        "bn_mean": 0.1 * jax.random.normal(keys[8], (num_T,), jnp.float32),
        "bn_var": jax.random.uniform(keys[9], (num_T,), jnp.float32, 0.5, 1.5),
        "fc1_w": 0.05 * jax.random.normal(keys[10], (F, hidden), jnp.float32),
        "fc1_b": 0.05 * jax.random.normal(keys[11], (hidden,), jnp.float32),
        "fc2_w": 0.05 * jax.random.normal(keys[12], (hidden, num_classes), jnp.float32),
        "fc2_b": 0.05 * jax.random.normal(keys[13], (num_classes,), jnp.float32),
    }

    x4 = jax.random.normal(keys[15], (B, 1, L, T), jnp.float32)      # PyTorch NCHW input

    fwd = jax.jit(tception_forward)
    out = fwd(x4, params)
    out = jax.block_until_ready(out)
    assert out.shape == (B, num_classes)

    ref = reference_forward(x4, params)
    assert bool(jnp.all(jnp.isfinite(out)))
    assert bool(jnp.allclose(out, ref, rtol=1e-2, atol=1e-2)), (out, ref)

    print("KERNEL_OK")
</pallas_src>

<mosaic_0001>
module attributes {stable_mosaic.version = 11 : i64} {
  func.func @_fused_kernel(%arg0: i32, %arg1: memref<1x4x128xf32, #tpu.memory_space<vmem>>, %arg2: memref<128x2560xf32, #tpu.memory_space<vmem>>, %arg3: memref<1x2560xf32, #tpu.memory_space<vmem>>, %arg4: memref<4x32x2560xf32, #tpu.memory_space<vmem>>, %arg5: memref<1x32xf32, #tpu.memory_space<vmem>>, %arg6: memref<32x3xf32, #tpu.memory_space<vmem>>, %arg7: memref<1x3xf32, #tpu.memory_space<vmem>>, %arg8: memref<1x1x3xf32, #tpu.memory_space<vmem>>) attributes {dimension_semantics = [#tpu.dimension_semantics<parallel>], iteration_bounds = array<i64: 2>, scalar_prefetch = 0 : i64, scratch_operands = 0 : i64, tpu.core_type = #tpu.core_type<tc>, window_params = [{transform_indices = @transform_0, window_bounds = array<i64: 1, 4, 128>}, {pipeline_mode = #tpu.pipeline_mode<synchronous>, transform_indices = @transform_1, window_bounds = array<i64: 128, 2560>}, {pipeline_mode = #tpu.pipeline_mode<synchronous>, transform_indices = @transform_2, window_bounds = array<i64: 1, 2560>}, {pipeline_mode = #tpu.pipeline_mode<synchronous>, transform_indices = @transform_3, window_bounds = array<i64: 4, 32, 2560>}, {pipeline_mode = #tpu.pipeline_mode<synchronous>, transform_indices = @transform_4, window_bounds = array<i64: 1, 32>}, {pipeline_mode = #tpu.pipeline_mode<synchronous>, transform_indices = @transform_5, window_bounds = array<i64: 32, 3>}, {pipeline_mode = #tpu.pipeline_mode<synchronous>, transform_indices = @transform_6, window_bounds = array<i64: 1, 3>}, {transform_indices = @transform_7, window_bounds = array<i64: 1, 1, 3>}]} {
    %c0 = arith.constant 0 : index
    %c0_0 = arith.constant 0 : index
    %c0_1 = arith.constant 0 : index
    %0 = vector.load %arg1[%c0, %c0_0, %c0_1] : memref<1x4x128xf32, #tpu.memory_space<vmem>>, vector<1x4x128xf32>
    %1 = vector.shape_cast %0 : vector<1x4x128xf32> to vector<4x128xf32>
    %c0_2 = arith.constant 0 : index
    %c0_3 = arith.constant 0 : index
    %2 = vector.load %arg2[%c0_2, %c0_3] : memref<128x2560xf32, #tpu.memory_space<vmem>>, vector<128x2560xf32>
    %cst = arith.constant dense<0.000000e+00> : vector<4x2560xf32>
    %3 = tpu.matmul %1, %2, %cst {dimension_numbers = #tpu.dot_dimension_numbers<[1], [0], [0], [1], [0, 0, 1, 1], [], []>} : vector<4x128xf32>, vector<128x2560xf32>, vector<4x2560xf32> -> vector<4x2560xf32>
    %c0_4 = arith.constant 0 : index
    %c0_5 = arith.constant 0 : index
    %4 = vector.load %arg3[%c0_4, %c0_5] : memref<1x2560xf32, #tpu.memory_space<vmem>>, vector<1x2560xf32>
    %5 = vector.broadcast %4 : vector<1x2560xf32> to vector<4x2560xf32>
    %6 = arith.addf %3, %5 : vector<4x2560xf32>
    %cst_6 = arith.constant 0.000000e+00 : f32
    %7 = vector.broadcast %cst_6 : f32 to vector<4x2560xf32>
    %8 = arith.maximumf %6, %7 : vector<4x2560xf32>
    %cst_7 = arith.constant 0.000000e+00 : f32
    %9 = vector.broadcast %cst_7 : f32 to vector<1x32xf32>
    %10 = vector.extract_strided_slice %8 {offsets = [0, 0], sizes = [1, 2560], strides = [1, 1]} : vector<4x2560xf32> to vector<1x2560xf32>
    %c0_8 = arith.constant 0 : index
    %c0_9 = arith.constant 0 : index
    %c0_10 = arith.constant 0 : index
    %11 = vector.load %arg4[%c0_8, %c0_9, %c0_10] : memref<4x32x2560xf32, #tpu.memory_space<vmem>>, vector<1x32x2560xf32>
    %12 = vector.shape_cast %11 : vector<1x32x2560xf32> to vector<32x2560xf32>
    %cst_11 = arith.constant dense<0.000000e+00> : vector<1x32xf32>
    %13 = tpu.matmul %10, %12, %cst_11 {dimension_numbers = #tpu.dot_dimension_numbers<[1], [1], [0], [0], [0, 0, 1, 0], [], []>} : vector<1x2560xf32>, vector<32x2560xf32>, vector<1x32xf32> -> vector<1x32xf32>
    %14 = arith.addf %9, %13 : vector<1x32xf32>
    %15 = vector.extract_strided_slice %8 {offsets = [1, 0], sizes = [1, 2560], strides = [1, 1]} : vector<4x2560xf32> to vector<1x2560xf32>
    %c1 = arith.constant 1 : index
    %c0_12 = arith.constant 0 : index
    %c0_13 = arith.constant 0 : index
    %16 = vector.load %arg4[%c1, %c0_12, %c0_13] : memref<4x32x2560xf32, #tpu.memory_space<vmem>>, vector<1x32x2560xf32>
    %17 = vector.shape_cast %16 : vector<1x32x2560xf32> to vector<32x2560xf32>
    %cst_14 = arith.constant dense<0.000000e+00> : vector<1x32xf32>
    %18 = tpu.matmul %15, %17, %cst_14 {dimension_numbers = #tpu.dot_dimension_numbers<[1], [1], [0], [0], [0, 0, 1, 0], [], []>} : vector<1x2560xf32>, vector<32x2560xf32>, vector<1x32xf32> -> vector<1x32xf32>
    %19 = arith.addf %14, %18 : vector<1x32xf32>
    %20 = vector.extract_strided_slice %8 {offsets = [2, 0], sizes = [1, 2560], strides = [1, 1]} : vector<4x2560xf32> to vector<1x2560xf32>
    %c2 = arith.constant 2 : index
    %c0_15 = arith.constant 0 : index
    %c0_16 = arith.constant 0 : index
    %21 = vector.load %arg4[%c2, %c0_15, %c0_16] : memref<4x32x2560xf32, #tpu.memory_space<vmem>>, vector<1x32x2560xf32>
    %22 = vector.shape_cast %21 : vector<1x32x2560xf32> to vector<32x2560xf32>
    %cst_17 = arith.constant dense<0.000000e+00> : vector<1x32xf32>
    %23 = tpu.matmul %20, %22, %cst_17 {dimension_numbers = #tpu.dot_dimension_numbers<[1], [1], [0], [0], [0, 0, 1, 0], [], []>} : vector<1x2560xf32>, vector<32x2560xf32>, vector<1x32xf32> -> vector<1x32xf32>
    %24 = arith.addf %19, %23 : vector<1x32xf32>
    %25 = vector.extract_strided_slice %8 {offsets = [3, 0], sizes = [1, 2560], strides = [1, 1]} : vector<4x2560xf32> to vector<1x2560xf32>
    %c3 = arith.constant 3 : index
    %c0_18 = arith.constant 0 : index
    %c0_19 = arith.constant 0 : index
    %26 = vector.load %arg4[%c3, %c0_18, %c0_19] : memref<4x32x2560xf32, #tpu.memory_space<vmem>>, vector<1x32x2560xf32>
    %27 = vector.shape_cast %26 : vector<1x32x2560xf32> to vector<32x2560xf32>
    %cst_20 = arith.constant dense<0.000000e+00> : vector<1x32xf32>
    %28 = tpu.matmul %25, %27, %cst_20 {dimension_numbers = #tpu.dot_dimension_numbers<[1], [1], [0], [0], [0, 0, 1, 0], [], []>} : vector<1x2560xf32>, vector<32x2560xf32>, vector<1x32xf32> -> vector<1x32xf32>
    %29 = arith.addf %24, %28 : vector<1x32xf32>
    %c0_21 = arith.constant 0 : index
    %c0_22 = arith.constant 0 : index
    %30 = vector.load %arg5[%c0_21, %c0_22] : memref<1x32xf32, #tpu.memory_space<vmem>>, vector<1x32xf32>
    %31 = arith.addf %29, %30 : vector<1x32xf32>
    %cst_23 = arith.constant 0.000000e+00 : f32
    %32 = vector.broadcast %cst_23 : f32 to vector<1x32xf32>
    %33 = arith.maximumf %31, %32 : vector<1x32xf32>
    %c0_24 = arith.constant 0 : index
    %c0_25 = arith.constant 0 : index
    %34 = vector.load %arg6[%c0_24, %c0_25] : memref<32x3xf32, #tpu.memory_space<vmem>>, vector<32x3xf32>
    %cst_26 = arith.constant dense<0.000000e+00> : vector<1x3xf32>
    %35 = tpu.matmul %33, %34, %cst_26 {dimension_numbers = #tpu.dot_dimension_numbers<[1], [0], [0], [1], [0, 0, 1, 1], [], []>} : vector<1x32xf32>, vector<32x3xf32>, vector<1x3xf32> -> vector<1x3xf32>
    %c0_27 = arith.constant 0 : index
    %c0_28 = arith.constant 0 : index
    %36 = vector.load %arg7[%c0_27, %c0_28] : memref<1x3xf32, #tpu.memory_space<vmem>>, vector<1x3xf32>
    %37 = arith.addf %35, %36 : vector<1x3xf32>
    %c0_29 = arith.constant 0 : index
    %c0_30 = arith.constant 0 : index
    %c0_31 = arith.constant 0 : index
    %38 = vector.load %arg8[%c0_29, %c0_30, %c0_31] : memref<1x1x3xf32, #tpu.memory_space<vmem>>, vector<1x1x3xf32>
    %39 = vector.shape_cast %38 : vector<1x1x3xf32> to vector<1x3xf32>
    %40 = vector.shape_cast %37 : vector<1x3xf32> to vector<1x1x3xf32>
    tpu.vector_store %arg8[%c0_29, %c0_30, %c0_31], %40 {strides = array<i32>} : memref<1x1x3xf32, #tpu.memory_space<vmem>>, vector<1x1x3xf32>,
    return
  }
  func.func @transform_0(%arg0: i32) -> (i32, i32, i32) {
    %c0_i32 = arith.constant 0 : i32
    %c0_i32_0 = arith.constant 0 : i32
    %c0_i32_1 = arith.constant 0 : i32
    return %arg0, %c0_i32, %c0_i32_0 : i32, i32, i32
  }
  func.func @transform_1(%arg0: i32) -> (i32, i32) {
    %c0_i32 = arith.constant 0 : i32
    %c0_i32_0 = arith.constant 0 : i32
    %c0_i32_1 = arith.constant 0 : i32
    return %c0_i32, %c0_i32_0 : i32, i32
  }
  func.func @transform_2(%arg0: i32) -> (i32, i32) {
    %c0_i32 = arith.constant 0 : i32
    %c0_i32_0 = arith.constant 0 : i32
    %c0_i32_1 = arith.constant 0 : i32
    return %c0_i32, %c0_i32_0 : i32, i32
  }
  func.func @transform_3(%arg0: i32) -> (i32, i32, i32) {
    %c0_i32 = arith.constant 0 : i32
    %c0_i32_0 = arith.constant 0 : i32
    %c0_i32_1 = arith.constant 0 : i32
    %c0_i32_2 = arith.constant 0 : i32
    return %c0_i32, %c0_i32_0, %c0_i32_1 : i32, i32, i32
  }
  func.func @transform_4(%arg0: i32) -> (i32, i32) {
    %c0_i32 = arith.constant 0 : i32
    %c0_i32_0 = arith.constant 0 : i32
    %c0_i32_1 = arith.constant 0 : i32
    return %c0_i32, %c0_i32_0 : i32, i32
  }
  func.func @transform_5(%arg0: i32) -> (i32, i32) {
    %c0_i32 = arith.constant 0 : i32
    %c0_i32_0 = arith.constant 0 : i32
    %c0_i32_1 = arith.constant 0 : i32
    return %c0_i32, %c0_i32_0 : i32, i32
  }
  func.func @transform_6(%arg0: i32) -> (i32, i32) {
    %c0_i32 = arith.constant 0 : i32
    %c0_i32_0 = arith.constant 0 : i32
    %c0_i32_1 = arith.constant 0 : i32
    return %c0_i32, %c0_i32_0 : i32, i32
  }
  func.func @transform_7(%arg0: i32) -> (i32, i32, i32) {
    %c0_i32 = arith.constant 0 : i32
    %c0_i32_0 = arith.constant 0 : i32
    %c0_i32_1 = arith.constant 0 : i32
    return %arg0, %c0_i32, %c0_i32_0 : i32, i32, i32
  }
}

</mosaic_0001>

<llo_original>
// kernel: tception_forward.1
$region0: #{tception_forward.1}
  #allocation0 [shape = 'u32[]', space=smem, size = 0x4, offset = 0x4, fixed_abs, tag = 'smem constant byte address 0x4 - core index']
  #allocation1 [shape = 'u32[72,128]{1,0:T(1,128)}', space=vmem, size = 0x9000, scoped, tag = 'internal scratch']
  %s0 = inlined_call_operand.vmem [shape: f32[2,4,128], index: 0, kind: input, shape index: {}]
  %s1 = inlined_call_operand.vmem [shape: f32[128,2560], index: 1, kind: input, shape index: {}]
  %s2 = inlined_call_operand.vmem [shape: f32[1,2560], index: 2, kind: input, shape index: {}]
  %s3 = inlined_call_operand.vmem [shape: f32[4,32,2560], index: 3, kind: input, shape index: {}]
  %s4 = inlined_call_operand.vmem [shape: f32[1,32], index: 4, kind: input, shape index: {}]
  %s5 = inlined_call_operand.vmem [shape: f32[32,3], index: 5, kind: input, shape index: {}]
  %s6 = inlined_call_operand.vmem [shape: f32[1,3], index: 6, kind: input, shape index: {}]
  %s7 = inlined_call_operand.hbm [shape: f32[2,1,3], index: 7, kind: output, shape index: {}]
  %s8 = sld [smem:[#allocation0]]
  $region61: #{tception_forward.1} parent=0
    _
  %s10 = ssub.s32 1, %s8
  %s11 = scalar_select 0, %s10, %s8
  $region1: #{tception_forward.1} parent=0
    #allocation2 [shape = 'u8[1024]{0}', space=vmem, size = 0x400, scoped, tag = 'output window, operand 0']
    #allocation3 [shape = 's32[2]{0}', space=sflag, size = 0x8, scoped, tag = 'scoped memory for tception_forward.1']
    %12 = vsyncpa [#allocation3], 0
    %s13 = scalar_lea.sflag [#allocation3], 1
    %14 = vsyncpa %s13, 0
    loop: start=0, step=1, limit=4
    $region2: #{tception_forward.1} parent=1 // loop_pre_header
      _
    $region3: #{tception_forward.1} parent=1 // loop_header
      %s16 = sphi 0, %s20
      %p17 = scmp.ge.s32.totalorder %s16, 4
      %s26 = sphi 0, %s28
      %s29 = sphi 0, %s26
      %s30 = sphi 0, %s29
      %s46 = sphi 0, %s30
      %s50 = sphi 0, %s50
      %s52 = sphi 0, %s50
      %s53 = sphi 0, %s52
      %s67 = sphi 0, %s53
      %s71 = sphi 0, %s71
      %s73 = sphi 0, %s71
      %s74 = sphi 0, %s73
      %s88 = sphi 0, %s74
      %s92 = sphi 0, %s92
      %s94 = sphi 0, %s92
      %s95 = sphi 0, %s94
      %s109 = sphi 0, %s95
      %s113 = sphi 0, %s113
      %s115 = sphi 0, %s113
      %s116 = sphi 0, %s115
      %s130 = sphi 0, %s116
      %s134 = sphi 0, %s134
      %s136 = sphi 0, %s134
      %s137 = sphi 0, %s136
      %s151 = sphi 0, %s137
      %s155 = sphi 0, %s155
      %s157 = sphi 0, %s155
      %s158 = sphi 0, %s157
      %s172 = sphi 0, %s158
      %s178 = sphi 0, %s180
      %s181 = sphi 0, %s178
      %s182 = sphi 0, %s181
      %s198 = sphi 0, %s182
    $region4: #{tception_forward.1} parent=1 // loop_header_branch
      %19 = sbr.rel (%p17) target = $region8
    $region5: #{tception_forward.1} parent=1 // loop_body
      %s21 = ssub.s32 %s16, 1
      %s22 = ssub.s32 %s16, 2
      %s23 = sadd.s32 %s16, 1
      %s24 = ssub.s32 %s16, %s23
      %p25 = scmp.eq.s32.totalorder %s24, 0
      %s27 = sadd.s32 %s26, 1
      %s28 = scalar_select %p25, %s26, %s27
      %p31 = pneg %p25
      %p32 = scmp.eq.s32.totalorder %s16, 1
      %p33 = por %p31, %p32
      %p34 = scmp.ne.s32.totalorder %s26, %s29
      %p35 = scmp.eq.s32.totalorder %s16, 0
      %p36 = por %p34, %p35
      %p37 = scmp.ne.s32.totalorder %s26, %s29
      %p38 = scmp.eq.s32.totalorder %s21, 1
      %p39 = por %p37, %p38
      %p40 = scmp.ne.s32.totalorder %s29, %s30
      %p41 = scmp.eq.s32.totalorder %s21, 0
      %p42 = por %p40, %p41
      %p43 = scmp.ne.s32.totalorder %s29, %s30
      %p44 = scmp.eq.s32.totalorder %s22, 1
      %p45 = por %p43, %p44
      %p47 = scmp.ne.s32.totalorder %s30, %s46
      %p48 = scmp.eq.s32.totalorder %s22, 0
      %p49 = por %p47, %p48
      %s51 = sadd.s32 %s50, 1
      %p54 = scmp.eq.s32.totalorder %s16, 1
      %p55 = scmp.ne.s32.totalorder %s50, %s52
      %p56 = scmp.eq.s32.totalorder %s16, 0
      %p57 = por %p55, %p56
      %p58 = scmp.ne.s32.totalorder %s50, %s52
      %p59 = scmp.eq.s32.totalorder %s21, 1
      %p60 = por %p58, %p59
      %p61 = scmp.ne.s32.totalorder %s52, %s53
      %p62 = scmp.eq.s32.totalorder %s21, 0
      %p63 = por %p61, %p62
      %p64 = scmp.ne.s32.totalorder %s52, %s53
      %p65 = scmp.eq.s32.totalorder %s22, 1
      %p66 = por %p64, %p65
      %p68 = scmp.ne.s32.totalorder %s53, %s67
      %p69 = scmp.eq.s32.totalorder %s22, 0
      %p70 = por %p68, %p69
      %s72 = sadd.s32 %s71, 1
      %p75 = scmp.eq.s32.totalorder %s16, 1
      %p76 = scmp.ne.s32.totalorder %s71, %s73
      %p77 = scmp.eq.s32.totalorder %s16, 0
      %p78 = por %p76, %p77
      %p79 = scmp.ne.s32.totalorder %s71, %s73
      %p80 = scmp.eq.s32.totalorder %s21, 1
      %p81 = por %p79, %p80
      %p82 = scmp.ne.s32.totalorder %s73, %s74
      %p83 = scmp.eq.s32.totalorder %s21, 0
      %p84 = por %p82, %p83
      %p85 = scmp.ne.s32.totalorder %s73, %s74
      %p86 = scmp.eq.s32.totalorder %s22, 1
      %p87 = por %p85, %p86
      %p89 = scmp.ne.s32.totalorder %s74, %s88
      %p90 = scmp.eq.s32.totalorder %s22, 0
      %p91 = por %p89, %p90
      %s93 = sadd.s32 %s92, 1
      %p96 = scmp.eq.s32.totalorder %s16, 1
      %p97 = scmp.ne.s32.totalorder %s92, %s94
      %p98 = scmp.eq.s32.totalorder %s16, 0
      %p99 = por %p97, %p98
      %p100 = scmp.ne.s32.totalorder %s92, %s94
      %p101 = scmp.eq.s32.totalorder %s21, 1
      %p102 = por %p100, %p101
      %p103 = scmp.ne.s32.totalorder %s94, %s95
      %p104 = scmp.eq.s32.totalorder %s21, 0
      %p105 = por %p103, %p104
      %p106 = scmp.ne.s32.totalorder %s94, %s95
      %p107 = scmp.eq.s32.totalorder %s22, 1
      %p108 = por %p106, %p107
      %p110 = scmp.ne.s32.totalorder %s95, %s109
      %p111 = scmp.eq.s32.totalorder %s22, 0
      %p112 = por %p110, %p111
      %s114 = sadd.s32 %s113, 1
      %p117 = scmp.eq.s32.totalorder %s16, 1
      %p118 = scmp.ne.s32.totalorder %s113, %s115
      %p119 = scmp.eq.s32.totalorder %s16, 0
      %p120 = por %p118, %p119
      %p121 = scmp.ne.s32.totalorder %s113, %s115
      %p122 = scmp.eq.s32.totalorder %s21, 1
      %p123 = por %p121, %p122
      %p124 = scmp.ne.s32.totalorder %s115, %s116
      %p125 = scmp.eq.s32.totalorder %s21, 0
      %p126 = por %p124, %p125
      %p127 = scmp.ne.s32.totalorder %s115, %s116
      %p128 = scmp.eq.s32.totalorder %s22, 1
      %p129 = por %p127, %p128
      %p131 = scmp.ne.s32.totalorder %s116, %s130
      %p132 = scmp.eq.s32.totalorder %s22, 0
      %p133 = por %p131, %p132
      %s135 = sadd.s32 %s134, 1
      %p138 = scmp.eq.s32.totalorder %s16, 1
      %p139 = scmp.ne.s32.totalorder %s134, %s136
      %p140 = scmp.eq.s32.totalorder %s16, 0
      %p141 = por %p139, %p140
      %p142 = scmp.ne.s32.totalorder %s134, %s136
      %p143 = scmp.eq.s32.totalorder %s21, 1
      %p144 = por %p142, %p143
      %p145 = scmp.ne.s32.totalorder %s136, %s137
      %p146 = scmp.eq.s32.totalorder %s21, 0
      %p147 = por %p145, %p146
      %p148 = scmp.ne.s32.totalorder %s136, %s137
      %p149 = scmp.eq.s32.totalorder %s22, 1
      %p150 = por %p148, %p149
      %p152 = scmp.ne.s32.totalorder %s137, %s151
      %p153 = scmp.eq.s32.totalorder %s22, 0
      %p154 = por %p152, %p153
      %s156 = sadd.s32 %s155, 1
      %p159 = scmp.eq.s32.totalorder %s16, 1
      %p160 = scmp.ne.s32.totalorder %s155, %s157
      %p161 = scmp.eq.s32.totalorder %s16, 0
      %p162 = por %p160, %p161
      %p163 = scmp.ne.s32.totalorder %s155, %s157
      %p164 = scmp.eq.s32.totalorder %s21, 1
      %p165 = por %p163, %p164
      %p166 = scmp.ne.s32.totalorder %s157, %s158
      %p167 = scmp.eq.s32.totalorder %s21, 0
      %p168 = por %p166, %p167
      %p169 = scmp.ne.s32.totalorder %s157, %s158
      %p170 = scmp.eq.s32.totalorder %s22, 1
      %p171 = por %p169, %p170
      %p173 = scmp.ne.s32.totalorder %s158, %s172
      %p174 = scmp.eq.s32.totalorder %s22, 0
      %p175 = por %p173, %p174
      %s176 = ssub.s32 %s16, %s23
      %p177 = scmp.eq.s32.totalorder %s176, 0
      %s179 = sadd.s32 %s178, 1
      %s180 = scalar_select %p177, %s178, %s179
      %p183 = pneg %p177
      %p184 = scmp.eq.s32.totalorder %s16, 1
      %p185 = por %p183, %p184
      %p186 = scmp.ne.s32.totalorder %s178, %s181
      %p187 = scmp.eq.s32.totalorder %s16, 0
      %p188 = por %p186, %p187
      %p189 = scmp.ne.s32.totalorder %s178, %s181
      %p190 = scmp.eq.s32.totalorder %s21, 1
      %p191 = por %p189, %p190
      %p192 = scmp.ne.s32.totalorder %s181, %s182
      %p193 = scmp.eq.s32.totalorder %s21, 0
      %p194 = por %p192, %p193
      %p195 = scmp.ne.s32.totalorder %s181, %s182
      %p196 = scmp.eq.s32.totalorder %s22, 1
      %p197 = por %p195, %p196
      %p199 = scmp.ne.s32.totalorder %s182, %s198
      %p200 = scmp.eq.s32.totalorder %s22, 0
      %p201 = por %p199, %p200
      %p202 = scmp.le.s32.totalorder 1, %s16
      %p203 = scmp.lt.s32.totalorder %s16, 3
      %p204 = pnand %p202, %p203
      %p205 = pneg %p204
      // Predicated region
      $region9: #{tception_forward.1} parent=5 // pred_check
        _
      $region10: #{tception_forward.1} parent=5 // pred_check_branch
        %207 = sbr.rel (%p204) target = $region12
      $region11: #{tception_forward.1} parent=5 // pred_region
        %s208 = ssub.s32 %s16, 1
        // Predicated region
        $region13: #{tception_forward.1} parent=11 // pred_check
          %p209 = pneg %p63
        $region14: #{tception_forward.1} parent=11 // pred_check_branch
          %211 = sbr.rel (%p209) target = $region16
        $region15: #{tception_forward.1} parent=11 // pred_region
          _
        $region16: #{tception_forward.1} parent=11 // pred_fallthru
          _
        // Predicated region
        $region17: #{tception_forward.1} parent=11 // pred_check
          %p212 = pneg %p84
        $region18: #{tception_forward.1} parent=11 // pred_check_branch
          %214 = sbr.rel (%p212) target = $region20
        $region19: #{tception_forward.1} parent=11 // pred_region
          _
        $region20: #{tception_forward.1} parent=11 // pred_fallthru
          _
        // Predicated region
        $region21: #{tception_forward.1} parent=11 // pred_check
          %p215 = pneg %p105
        $region22: #{tception_forward.1} parent=11 // pred_check_branch
          %217 = sbr.rel (%p215) target = $region24
        $region23: #{tception_forward.1} parent=11 // pred_region
          _
        $region24: #{tception_forward.1} parent=11 // pred_fallthru
          _
        // Predicated region
        $region25: #{tception_forward.1} parent=11 // pred_check
          %p218 = pneg %p126
        $region26: #{tception_forward.1} parent=11 // pred_check_branch
          %220 = sbr.rel (%p218) target = $region28
        $region27: #{tception_forward.1} parent=11 // pred_region
          _
        $region28: #{tception_forward.1} parent=11 // pred_fallthru
          _
        // Predicated region
        $region29: #{tception_forward.1} parent=11 // pred_check
          %p221 = pneg %p147
        $region30: #{tception_forward.1} parent=11 // pred_check_branch
          %223 = sbr.rel (%p221) target = $region32
        $region31: #{tception_forward.1} parent=11 // pred_region
          _
        $region32: #{tception_forward.1} parent=11 // pred_fallthru
          _
        // Predicated region
        $region33: #{tception_forward.1} parent=11 // pred_check
          %p224 = pneg %p168
        $region34: #{tception_forward.1} parent=11 // pred_check_branch
          %226 = sbr.rel (%p224) target = $region36
        $region35: #{tception_forward.1} parent=11 // pred_region
          _
        $region36: #{tception_forward.1} parent=11 // pred_fallthru
          _
      $region12: #{tception_forward.1} parent=5 // pred_fallthru
        _
      %p227 = scmp.lt.s32.totalorder %s16, 2
      // Predicated region
      $region37: #{tception_forward.1} parent=5 // pred_check
        %p228 = pneg %p227
      $region38: #{tception_forward.1} parent=5 // pred_check_branch
        %230 = sbr.rel (%p228) target = $region40
      $region39: #{tception_forward.1} parent=5 // pred_region
        // Predicated region
        $region41: #{tception_forward.1} parent=39 // pred_check
          %p231 = pneg %p36
        $region42: #{tception_forward.1} parent=39 // pred_check_branch
          %233 = sbr.rel (%p231) target = $region44
        $region43: #{tception_forward.1} parent=39 // pred_region
          %p234 = scmp.lt.s32.totalorder %s16, 1
          %s235 = scalar_select %p234, %s16, 1
          %s236 = smul.addr %s235, 4
          %s237 = scalar_lea.vmem %s0, %s236
        $region44: #{tception_forward.1} parent=39 // pred_fallthru
          _
      $region40: #{tception_forward.1} parent=5 // pred_fallthru
        _
      %p238 = scmp.le.s32.totalorder 1, %s16
      %p239 = scmp.lt.s32.totalorder %s16, 3
      %p240 = pnand %p238, %p239
      %p241 = pneg %p240
      // Predicated region
      $region45: #{tception_forward.1} parent=5 // pred_check
        _
      $region46: #{tception_forward.1} parent=5 // pred_check_branch
        %243 = sbr.rel (%p240) target = $region48
      $region47: #{tception_forward.1} parent=5 // pred_region
        %s244 = ssub.s32 %s16, 1
        %p245 = scmp.lt.s32.totalorder %s21, 1
        %s246 = scalar_select %p245, %s21, 1
        %s247 = smul.addr %s246, 4
        %s248 = scalar_lea.vmem %s0, %s247
        %p249 = pneg %p42
        %p250 = pneg %p39
        %p251 = pneg %p63
        %p252 = pneg %p60
        %p253 = pneg %p84
        %p254 = pneg %p81
        %p255 = pneg %p105
        %p256 = pneg %p102
        %p257 = pneg %p126
        %p258 = pneg %p123
        %p259 = pneg %p147
        %p260 = pneg %p144
        %p261 = pneg %p168
        %p262 = pneg %p165
        %p263 = pneg %p194
        %p264 = pneg %p191
        %s265 = sand.u32 %s181, 1
        %s266 = scalar_lea.sflag [#allocation3], %s265
        %s267 = sand.u32 %s181, 1
        %s268 = scalar_lea.vmem [#allocation2], %s267
        %p269 = scmp.lt.s32.totalorder %s21, 1
        %s270 = scalar_select %p269, %s21, 1
        %s271 = smul.addr %s270, 4
        %s272 = scalar_lea.vmem %s0, %s271
        %v273 = vld [vmem:[%s272] sm:$0xf]
        %v274 = vld [vmem:[%s1] sm:$0xff]
        %v275 = vld [vmem:[%s1 + $0x8] sm:$0xff]
        %v276 = vld [vmem:[%s1 + $0x10] sm:$0xff]
        %v277 = vld [vmem:[%s1 + $0x18] sm:$0xff]
        %v278 = vld [vmem:[%s1 + $0x20] sm:$0xff]
        %v279 = vld [vmem:[%s1 + $0x28] sm:$0xff]
        %v280 = vld [vmem:[%s1 + $0x30] sm:$0xff]
        %v281 = vld [vmem:[%s1 + $0x38] sm:$0xff]
        %v282 = vld [vmem:[%s1 + $0x40] sm:$0xff]
        %v283 = vld [vmem:[%s1 + $0x48] sm:$0xff]
        %v284 = vld [vmem:[%s1 + $0x50] sm:$0xff]
        %v285 = vld [vmem:[%s1 + $0x58] sm:$0xff]
        %v286 = vld [vmem:[%s1 + $0x60] sm:$0xff]
        %v287 = vld [vmem:[%s1 + $0x68] sm:$0xff]
        %v288 = vld [vmem:[%s1 + $0x70] sm:$0xff]
        %v289 = vld [vmem:[%s1 + $0x78] sm:$0xff]
        %v290 = vld [vmem:[%s1 + $0x80] sm:$0xff]
        %v291 = vld [vmem:[%s1 + $0x88] sm:$0xff]
        %v292 = vld [vmem:[%s1 + $0x90] sm:$0xff]
        %v293 = vld [vmem:[%s1 + $0x98] sm:$0xff]
        %v294 = vld [vmem:[%s1 + $0xa0] sm:$0xff]
        %v295 = vld [vmem:[%s1 + $0xa8] sm:$0xff]
        %v296 = vld [vmem:[%s1 + $0xb0] sm:$0xff]
        %v297 = vld [vmem:[%s1 + $0xb8] sm:$0xff]
        %v298 = vld [vmem:[%s1 + $0xc0] sm:$0xff]
        %v299 = vld [vmem:[%s1 + $0xc8] sm:$0xff]
        %v300 = vld [vmem:[%s1 + $0xd0] sm:$0xff]
        %v301 = vld [vmem:[%s1 + $0xd8] sm:$0xff]
        %v302 = vld [vmem:[%s1 + $0xe0] sm:$0xff]
        %v303 = vld [vmem:[%s1 + $0xe8] sm:$0xff]
        %v304 = vld [vmem:[%s1 + $0xf0] sm:$0xff]
        %v305 = vld [vmem:[%s1 + $0xf8] sm:$0xff]
        %v306 = vld [vmem:[%s1 + $0x100] sm:$0xff]
        %v307 = vld [vmem:[%s1 + $0x108] sm:$0xff]
        %v308 = vld [vmem:[%s1 + $0x110] sm:$0xff]
        %v309 = vld [vmem:[%s1 + $0x118] sm:$0xff]
        %v310 = vld [vmem:[%s1 + $0x120] sm:$0xff]
        %v311 = vld [vmem:[%s1 + $0x128] sm:$0xff]
        %v312 = vld [vmem:[%s1 + $0x130] sm:$0xff]
        %v313 = vld [vmem:[%s1 + $0x138] sm:$0xff]
        %v314 = vld [vmem:[%s1 + $0x140] sm:$0xff]
        %v315 = vld [vmem:[%s1 + $0x148] sm:$0xff]
        %v316 = vld [vmem:[%s1 + $0x150] sm:$0xff]
        %v317 = vld [vmem:[%s1 + $0x158] sm:$0xff]
        %v318 = vld [vmem:[%s1 + $0x160] sm:$0xff]
        %v319 = vld [vmem:[%s1 + $0x168] sm:$0xff]
        %v320 = vld [vmem:[%s1 + $0x170] sm:$0xff]
        %v321 = vld [vmem:[%s1 + $0x178] sm:$0xff]
        %v322 = vld [vmem:[%s1 + $0x180] sm:$0xff]
        %v323 = vld [vmem:[%s1 + $0x188] sm:$0xff]
        %v324 = vld [vmem:[%s1 + $0x190] sm:$0xff]
        %v325 = vld [vmem:[%s1 + $0x198] sm:$0xff]
        %v326 = vld [vmem:[%s1 + $0x1a0] sm:$0xff]
        %v327 = vld [vmem:[%s1 + $0x1a8] sm:$0xff]
        %v328 = vld [vmem:[%s1 + $0x1b0] sm:$0xff]
        %v329 = vld [vmem:[%s1 + $0x1b8] sm:$0xff]
        %v330 = vld [vmem:[%s1 + $0x1c0] sm:$0xff]
        %v331 = vld [vmem:[%s1 + $0x1c8] sm:$0xff]
        %v332 = vld [vmem:[%s1 + $0x1d0] sm:$0xff]
        %v333 = vld [vmem:[%s1 + $0x1d8] sm:$0xff]
        %v334 = vld [vmem:[%s1 + $0x1e0] sm:$0xff]
        %v335 = vld [vmem:[%s1 + $0x1e8] sm:$0xff]
        %v336 = vld [vmem:[%s1 + $0x1f0] sm:$0xff]
        %v337 = vld [vmem:[%s1 + $0x1f8] sm:$0xff]
        %v338 = vld [vmem:[%s1 + $0x200] sm:$0xff]
        %v339 = vld [vmem:[%s1 + $0x208] sm:$0xff]
        %v340 = vld [vmem:[%s1 + $0x210] sm:$0xff]
        %v341 = vld [vmem:[%s1 + $0x218] sm:$0xff]
        %v342 = vld [vmem:[%s1 + $0x220] sm:$0xff]
        %v343 = vld [vmem:[%s1 + $0x228] sm:$0xff]
        %v344 = vld [vmem:[%s1 + $0x230] sm:$0xff]
        %v345 = vld [vmem:[%s1 + $0x238] sm:$0xff]
        %v346 = vld [vmem:[%s1 + $0x240] sm:$0xff]
        %v347 = vld [vmem:[%s1 + $0x248] sm:$0xff]
        %v348 = vld [vmem:[%s1 + $0x250] sm:$0xff]
        %v349 = vld [vmem:[%s1 + $0x258] sm:$0xff]
        %v350 = vld [vmem:[%s1 + $0x260] sm:$0xff]
        %v351 = vld [vmem:[%s1 + $0x268] sm:$0xff]
        %v352 = vld [vmem:[%s1 + $0x270] sm:$0xff]
        %v353 = vld [vmem:[%s1 + $0x278] sm:$0xff]
        %v354 = vld [vmem:[%s1 + $0x280] sm:$0xff]
        %v355 = vld [vmem:[%s1 + $0x288] sm:$0xff]
        %v356 = vld [vmem:[%s1 + $0x290] sm:$0xff]
        %v357 = vld [vmem:[%s1 + $0x298] sm:$0xff]
        %v358 = vld [vmem:[%s1 + $0x2a0] sm:$0xff]
        %v359 = vld [vmem:[%s1 + $0x2a8] sm:$0xff]
        %v360 = vld [vmem:[%s1 + $0x2b0] sm:$0xff]
        %v361 = vld [vmem:[%s1 + $0x2b8] sm:$0xff]
        %v362 = vld [vmem:[%s1 + $0x2c0] sm:$0xff]
        %v363 = vld [vmem:[%s1 + $0x2c8] sm:$0xff]
        %v364 = vld [vmem:[%s1 + $0x2d0] sm:$0xff]
        %v365 = vld [vmem:[%s1 + $0x2d8] sm:$0xff]
        %v366 = vld [vmem:[%s1 + $0x2e0] sm:$0xff]
        %v367 = vld [vmem:[%s1 + $0x2e8] sm:$0xff]
        %v368 = vld [vmem:[%s1 + $0x2f0] sm:$0xff]
        %v369 = vld [vmem:[%s1 + $0x2f8] sm:$0xff]
        %v370 = vld [vmem:[%s1 + $0x300] sm:$0xff]
        %v371 = vld [vmem:[%s1 + $0x308] sm:$0xff]
        %v372 = vld [vmem:[%s1 + $0x310] sm:$0xff]
        %v373 = vld [vmem:[%s1 + $0x318] sm:$0xff]
        %v374 = vld [vmem:[%s1 + $0x320] sm:$0xff]
        %v375 = vld [vmem:[%s1 + $0x328] sm:$0xff]
        %v376 = vld [vmem:[%s1 + $0x330] sm:$0xff]
        %v377 = vld [vmem:[%s1 + $0x338] sm:$0xff]
        %v378 = vld [vmem:[%s1 + $0x340] sm:$0xff]
        %v379 = vld [vmem:[%s1 + $0x348] sm:$0xff]
        %v380 = vld [vmem:[%s1 + $0x350] sm:$0xff]
        %v381 = vld [vmem:[%s1 + $0x358] sm:$0xff]
        %v382 = vld [vmem:[%s1 + $0x360] sm:$0xff]
        %v383 = vld [vmem:[%s1 + $0x368] sm:$0xff]
        %v384 = vld [vmem:[%s1 + $0x370] sm:$0xff]
        %v385 = vld [vmem:[%s1 + $0x378] sm:$0xff]
        %v386 = vld [vmem:[%s1 + $0x380] sm:$0xff]
        %v387 = vld [vmem:[%s1 + $0x388] sm:$0xff]
        %v388 = vld [vmem:[%s1 + $0x390] sm:$0xff]
        %v389 = vld [vmem:[%s1 + $0x398] sm:$0xff]
        %v390 = vld [vmem:[%s1 + $0x3a0] sm:$0xff]
        %v391 = vld [vmem:[%s1 + $0x3a8] sm:$0xff]
        %v392 = vld [vmem:[%s1 + $0x3b0] sm:$0xff]
        %v393 = vld [vmem:[%s1 + $0x3b8] sm:$0xff]
        %v394 = vld [vmem:[%s1 + $0x3c0] sm:$0xff]
        %v395 = vld [vmem:[%s1 + $0x3c8] sm:$0xff]
        %v396 = vld [vmem:[%s1 + $0x3d0] sm:$0xff]
        %v397 = vld [vmem:[%s1 + $0x3d8] sm:$0xff]
        %v398 = vld [vmem:[%s1 + $0x3e0] sm:$0xff]
        %v399 = vld [vmem:[%s1 + $0x3e8] sm:$0xff]
        %v400 = vld [vmem:[%s1 + $0x3f0] sm:$0xff]
        %v401 = vld [vmem:[%s1 + $0x3f8] sm:$0xff]
        %v402 = vld [vmem:[%s1 + $0x400] sm:$0xff]
        %v403 = vld [vmem:[%s1 + $0x408] sm:$0xff]
        %v404 = vld [vmem:[%s1 + $0x410] sm:$0xff]
        %v405 = vld [vmem:[%s1 + $0x418] sm:$0xff]
        %v406 = vld [vmem:[%s1 + $0x420] sm:$0xff]
        %v407 = vld [vmem:[%s1 + $0x428] sm:$0xff]
        %v408 = vld [vmem:[%s1 + $0x430] sm:$0xff]
        %v409 = vld [vmem:[%s1 + $0x438] sm:$0xff]
        %v410 = vld [vmem:[%s1 + $0x440] sm:$0xff]
        %v411 = vld [vmem:[%s1 + $0x448] sm:$0xff]
        %v412 = vld [vmem:[%s1 + $0x450] sm:$0xff]
        %v413 = vld [vmem:[%s1 + $0x458] sm:$0xff]
        %v414 = vld [vmem:[%s1 + $0x460] sm:$0xff]
        %v415 = vld [vmem:[%s1 + $0x468] sm:$0xff]
        %v416 = vld [vmem:[%s1 + $0x470] sm:$0xff]
        %v417 = vld [vmem:[%s1 + $0x478] sm:$0xff]
        %v418 = vld [vmem:[%s1 + $0x480] sm:$0xff]
        %v419 = vld [vmem:[%s1 + $0x488] sm:$0xff]
        %v420 = vld [vmem:[%s1 + $0x490] sm:$0xff]
        %v421 = vld [vmem:[%s1 + $0x498] sm:$0xff]
        %v422 = vld [vmem:[%s1 + $0x4a0] sm:$0xff]
        %v423 = vld [vmem:[%s1 + $0x4a8] sm:$0xff]
        %v424 = vld [vmem:[%s1 + $0x4b0] sm:$0xff]
        %v425 = vld [vmem:[%s1 + $0x4b8] sm:$0xff]
        %v426 = vld [vmem:[%s1 + $0x4c0] sm:$0xff]
        %v427 = vld [vmem:[%s1 + $0x4c8] sm:$0xff]
        %v428 = vld [vmem:[%s1 + $0x4d0] sm:$0xff]
        %v429 = vld [vmem:[%s1 + $0x4d8] sm:$0xff]
        %v430 = vld [vmem:[%s1 + $0x4e0] sm:$0xff]
        %v431 = vld [vmem:[%s1 + $0x4e8] sm:$0xff]
        %v432 = vld [vmem:[%s1 + $0x4f0] sm:$0xff]
        %v433 = vld [vmem:[%s1 + $0x4f8] sm:$0xff]
        %v434 = vld [vmem:[%s1 + $0x500] sm:$0xff]
        %v435 = vld [vmem:[%s1 + $0x508] sm:$0xff]
        %v436 = vld [vmem:[%s1 + $0x510] sm:$0xff]
        %v437 = vld [vmem:[%s1 + $0x518] sm:$0xff]
        %v438 = vld [vmem:[%s1 + $0x520] sm:$0xff]
        %v439 = vld [vmem:[%s1 + $0x528] sm:$0xff]
        %v440 = vld [vmem:[%s1 + $0x530] sm:$0xff]
        %v441 = vld [vmem:[%s1 + $0x538] sm:$0xff]
        %v442 = vld [vmem:[%s1 + $0x540] sm:$0xff]
        %v443 = vld [vmem:[%s1 + $0x548] sm:$0xff]
        %v444 = vld [vmem:[%s1 + $0x550] sm:$0xff]
        %v445 = vld [vmem:[%s1 + $0x558] sm:$0xff]
        %v446 = vld [vmem:[%s1 + $0x560] sm:$0xff]
        %v447 = vld [vmem:[%s1 + $0x568] sm:$0xff]
        %v448 = vld [vmem:[%s1 + $0x570] sm:$0xff]
        %v449 = vld [vmem:[%s1 + $0x578] sm:$0xff]
        %v450 = vld [vmem:[%s1 + $0x580] sm:$0xff]
        %v451 = vld [vmem:[%s1 + $0x588] sm:$0xff]
        %v452 = vld [vmem:[%s1 + $0x590] sm:$0xff]
        %v453 = vld [vmem:[%s1 + $0x598] sm:$0xff]
        %v454 = vld [vmem:[%s1 + $0x5a0] sm:$0xff]
        %v455 = vld [vmem:[%s1 + $0x5a8] sm:$0xff]
        %v456 = vld [vmem:[%s1 + $0x5b0] sm:$0xff]
        %v457 = vld [vmem:[%s1 + $0x5b8] sm:$0xff]
        %v458 = vld [vmem:[%s1 + $0x5c0] sm:$0xff]
        %v459 = vld [vmem:[%s1 + $0x5c8] sm:$0xff]
        %v460 = vld [vmem:[%s1 + $0x5d0] sm:$0xff]
        %v461 = vld [vmem:[%s1 + $0x5d8] sm:$0xff]
        %v462 = vld [vmem:[%s1 + $0x5e0] sm:$0xff]
        %v463 = vld [vmem:[%s1 + $0x5e8] sm:$0xff]
        %v464 = vld [vmem:[%s1 + $0x5f0] sm:$0xff]
        %v465 = vld [vmem:[%s1 + $0x5f8] sm:$0xff]
        %v466 = vld [vmem:[%s1 + $0x600] sm:$0xff]
        %v467 = vld [vmem:[%s1 + $0x608] sm:$0xff]
        %v468 = vld [vmem:[%s1 + $0x610] sm:$0xff]
        %v469 = vld [vmem:[%s1 + $0x618] sm:$0xff]
        %v470 = vld [vmem:[%s1 + $0x620] sm:$0xff]
        %v471 = vld [vmem:[%s1 + $0x628] sm:$0xff]
        %v472 = vld [vmem:[%s1 + $0x630] sm:$0xff]
        %v473 = vld [vmem:[%s1 + $0x638] sm:$0xff]
        %v474 = vld [vmem:[%s1 + $0x640] sm:$0xff]
        %v475 = vld [vmem:[%s1 + $0x648] sm:$0xff]
        %v476 = vld [vmem:[%s1 + $0x650] sm:$0xff]
        %v477 = vld [vmem:[%s1 + $0x658] sm:$0xff]
        %v478 = vld [vmem:[%s1 + $0x660] sm:$0xff]
        %v479 = vld [vmem:[%s1 + $0x668] sm:$0xff]
        %v480 = vld [vmem:[%s1 + $0x670] sm:$0xff]
        %v481 = vld [vmem:[%s1 + $0x678] sm:$0xff]
        %v482 = vld [vmem:[%s1 + $0x680] sm:$0xff]
        %v483 = vld [vmem:[%s1 + $0x688] sm:$0xff]
        %v484 = vld [vmem:[%s1 + $0x690] sm:$0xff]
        %v485 = vld [vmem:[%s1 + $0x698] sm:$0xff]
        %v486 = vld [vmem:[%s1 + $0x6a0] sm:$0xff]
        %v487 = vld [vmem:[%s1 + $0x6a8] sm:$0xff]
        %v488 = vld [vmem:[%s1 + $0x6b0] sm:$0xff]
        %v489 = vld [vmem:[%s1 + $0x6b8] sm:$0xff]
        %v490 = vld [vmem:[%s1 + $0x6c0] sm:$0xff]
        %v491 = vld [vmem:[%s1 + $0x6c8] sm:$0xff]
        %v492 = vld [vmem:[%s1 + $0x6d0] sm:$0xff]
        %v493 = vld [vmem:[%s1 + $0x6d8] sm:$0xff]
        %v494 = vld [vmem:[%s1 + $0x6e0] sm:$0xff]
        %v495 = vld [vmem:[%s1 + $0x6e8] sm:$0xff]
        %v496 = vld [vmem:[%s1 + $0x6f0] sm:$0xff]
        %v497 = vld [vmem:[%s1 + $0x6f8] sm:$0xff]
        %v498 = vld [vmem:[%s1 + $0x700] sm:$0xff]
        %v499 = vld [vmem:[%s1 + $0x708] sm:$0xff]
        %v500 = vld [vmem:[%s1 + $0x710] sm:$0xff]
        %v501 = vld [vmem:[%s1 + $0x718] sm:$0xff]
        %v502 = vld [vmem:[%s1 + $0x720] sm:$0xff]
        %v503 = vld [vmem:[%s1 + $0x728] sm:$0xff]
        %v504 = vld [vmem:[%s1 + $0x730] sm:$0xff]
        %v505 = vld [vmem:[%s1 + $0x738] sm:$0xff]
        %v506 = vld [vmem:[%s1 + $0x740] sm:$0xff]
        %v507 = vld [vmem:[%s1 + $0x748] sm:$0xff]
        %v508 = vld [vmem:[%s1 + $0x750] sm:$0xff]
        %v509 = vld [vmem:[%s1 + $0x758] sm:$0xff]
        %v510 = vld [vmem:[%s1 + $0x760] sm:$0xff]
        %v511 = vld [vmem:[%s1 + $0x768] sm:$0xff]
        %v512 = vld [vmem:[%s1 + $0x770] sm:$0xff]
        %v513 = vld [vmem:[%s1 + $0x778] sm:$0xff]
        %v514 = vld [vmem:[%s1 + $0x780] sm:$0xff]
        %v515 = vld [vmem:[%s1 + $0x788] sm:$0xff]
        %v516 = vld [vmem:[%s1 + $0x790] sm:$0xff]
        %v517 = vld [vmem:[%s1 + $0x798] sm:$0xff]
        %v518 = vld [vmem:[%s1 + $0x7a0] sm:$0xff]
        %v519 = vld [vmem:[%s1 + $0x7a8] sm:$0xff]
        %v520 = vld [vmem:[%s1 + $0x7b0] sm:$0xff]
        %v521 = vld [vmem:[%s1 + $0x7b8] sm:$0xff]
        %v522 = vld [vmem:[%s1 + $0x7c0] sm:$0xff]
        %v523 = vld [vmem:[%s1 + $0x7c8] sm:$0xff]
        %v524 = vld [vmem:[%s1 + $0x7d0] sm:$0xff]
        %v525 = vld [vmem:[%s1 + $0x7d8] sm:$0xff]
        %v526 = vld [vmem:[%s1 + $0x7e0] sm:$0xff]
        %v527 = vld [vmem:[%s1 + $0x7e8] sm:$0xff]
        %v528 = vld [vmem:[%s1 + $0x7f0] sm:$0xff]
        %v529 = vld [vmem:[%s1 + $0x7f8] sm:$0xff]
        %v530 = vld [vmem:[%s1 + $0x800] sm:$0xff]
        %v531 = vld [vmem:[%s1 + $0x808] sm:$0xff]
        %v532 = vld [vmem:[%s1 + $0x810] sm:$0xff]
        %v533 = vld [vmem:[%s1 + $0x818] sm:$0xff]
        %v534 = vld [vmem:[%s1 + $0x820] sm:$0xff]
        %v535 = vld [vmem:[%s1 + $0x828] sm:$0xff]
        %v536 = vld [vmem:[%s1 + $0x830] sm:$0xff]
        %v537 = vld [vmem:[%s1 + $0x838] sm:$0xff]
        %v538 = vld [vmem:[%s1 + $0x840] sm:$0xff]
        %v539 = vld [vmem:[%s1 + $0x848] sm:$0xff]
        %v540 = vld [vmem:[%s1 + $0x850] sm:$0xff]
        %v541 = vld [vmem:[%s1 + $0x858] sm:$0xff]
        %v542 = vld [vmem:[%s1 + $0x860] sm:$0xff]
        %v543 = vld [vmem:[%s1 + $0x868] sm:$0xff]
        %v544 = vld [vmem:[%s1 + $0x870] sm:$0xff]
        %v545 = vld [vmem:[%s1 + $0x878] sm:$0xff]
        %v546 = vld [vmem:[%s1 + $0x880] sm:$0xff]
        %v547 = vld [vmem:[%s1 + $0x888] sm:$0xff]
        %v548 = vld [vmem:[%s1 + $0x890] sm:$0xff]
        %v549 = vld [vmem:[%s1 + $0x898] sm:$0xff]
        %v550 = vld [vmem:[%s1 + $0x8a0] sm:$0xff]
        %v551 = vld [vmem:[%s1 + $0x8a8] sm:$0xff]
        %v552 = vld [vmem:[%s1 + $0x8b0] sm:$0xff]
        %v553 = vld [vmem:[%s1 + $0x8b8] sm:$0xff]
        %v554 = vld [vmem:[%s1 + $0x8c0] sm:$0xff]
        %v555 = vld [vmem:[%s1 + $0x8c8] sm:$0xff]
        %v556 = vld [vmem:[%s1 + $0x8d0] sm:$0xff]
        %v557 = vld [vmem:[%s1 + $0x8d8] sm:$0xff]
        %v558 = vld [vmem:[%s1 + $0x8e0] sm:$0xff]
        %v559 = vld [vmem:[%s1 + $0x8e8] sm:$0xff]
        %v560 = vld [vmem:[%s1 + $0x8f0] sm:$0xff]
        %v561 = vld [vmem:[%s1 + $0x8f8] sm:$0xff]
        %v562 = vld [vmem:[%s1 + $0x900] sm:$0xff]
        %v563 = vld [vmem:[%s1 + $0x908] sm:$0xff]
        %v564 = vld [vmem:[%s1 + $0x910] sm:$0xff]
        %v565 = vld [vmem:[%s1 + $0x918] sm:$0xff]
        %v566 = vld [vmem:[%s1 + $0x920] sm:$0xff]
        %v567 = vld [vmem:[%s1 + $0x928] sm:$0xff]
        %v568 = vld [vmem:[%s1 + $0x930] sm:$0xff]
        %v569 = vld [vmem:[%s1 + $0x938] sm:$0xff]
        %v570 = vld [vmem:[%s1 + $0x940] sm:$0xff]
        %v571 = vld [vmem:[%s1 + $0x948] sm:$0xff]
        %v572 = vld [vmem:[%s1 + $0x950] sm:$0xff]
        %v573 = vld [vmem:[%s1 + $0x958] sm:$0xff]
        %v574 = vld [vmem:[%s1 + $0x960] sm:$0xff]
        %v575 = vld [vmem:[%s1 + $0x968] sm:$0xff]
        %v576 = vld [vmem:[%s1 + $0x970] sm:$0xff]
        %v577 = vld [vmem:[%s1 + $0x978] sm:$0xff]
        %v578 = vld [vmem:[%s1 + $0x980] sm:$0xff]
        %v579 = vld [vmem:[%s1 + $0x988] sm:$0xff]
        %v580 = vld [vmem:[%s1 + $0x990] sm:$0xff]
        %v581 = vld [vmem:[%s1 + $0x998] sm:$0xff]
        %v582 = vld [vmem:[%s1 + $0x9a0] sm:$0xff]
        %v583 = vld [vmem:[%s1 + $0x9a8] sm:$0xff]
        %v584 = vld [vmem:[%s1 + $0x9b0] sm:$0xff]
        %v585 = vld [vmem:[%s1 + $0x9b8] sm:$0xff]
        %v586 = vld [vmem:[%s1 + $0x9c0] sm:$0xff]
        %v587 = vld [vmem:[%s1 + $0x9c8] sm:$0xff]
        %v588 = vld [vmem:[%s1 + $0x9d0] sm:$0xff]
        %v589 = vld [vmem:[%s1 + $0x9d8] sm:$0xff]
        %v590 = vld [vmem:[%s1 + $0x9e0] sm:$0xff]
        %v591 = vld [vmem:[%s1 + $0x9e8] sm:$0xff]
        %v592 = vld [vmem:[%s1 + $0x9f0] sm:$0xff]
        %v593 = vld [vmem:[%s1 + $0x9f8] sm:$0xff]
        %v594 = vld [vmem:[%s2] sm:$0xff]
        %v595 = vld [vmem:[%s2 + $0x8] sm:$0xff]
        %v596 = vld [vmem:[%s2 + $0x10] sm:$0xf]
        %v600 = vperm.slane %v594, 0
        %v601 = vperm.slane %v594, 1
        %v602 = vperm.slane %v594, 2
        %v603 = vperm.slane %v594, 3
        %v604 = vperm.slane %v594, 4
        %v605 = vperm.slane %v594, 5
        %v606 = vperm.slane %v594, 6
        %v607 = vperm.slane %v594, 7
        %v608 = vperm.slane %v595, 0
        %v609 = vperm.slane %v595, 1
        %v610 = vperm.slane %v595, 2
        %v611 = vperm.slane %v595, 3
        %v612 = vperm.slane %v595, 4
        %v613 = vperm.slane %v595, 5
        %v614 = vperm.slane %v595, 6
        %v615 = vperm.slane %v595, 7
        %v616 = vperm.slane %v596, 0
        %v617 = vperm.slane %v596, 1
        %v618 = vperm.slane %v596, 2
        %v619 = vperm.slane %v596, 3
        %640 = vmatpush.msra.mxu0 %v574
        %641 = vmatpush.msra.mxu0 %v554
        %642 = vmatpush.msra.mxu0 %v534
        %643 = vmatpush.msra.mxu0 %v514
        %644 = vmatpush.msra.mxu0 %v494
        %645 = vmatpush.msra.mxu0 %v474
        %646 = vmatpush.msra.mxu0 %v454
        %647 = vmatpush.msra.mxu0 %v434
        %648 = vmatpush.msra.mxu0 %v414
        %649 = vmatpush.msra.mxu0 %v394
        %650 = vmatpush.msra.mxu0 %v374
        %651 = vmatpush.msra.mxu0 %v354
        %652 = vmatpush.msra.mxu0 %v334
        %653 = vmatpush.msra.mxu0 %v314
        %654 = vmatpush.msra.mxu0 %v294
        %655 = vmatpush.msra.mxu0 %v274
        %656 = vmatmul.f32.gmra.mxu0 %v273
        %v657 = vpop.f32.mrf.mxu0
        %v658 = vadd.f32 %v600, %v657
        %659 = vdwg.mxu0
        %660 = vmatpush.msra.mxu0 %v575
        %661 = vmatpush.msra.mxu0 %v555
        %662 = vmatpush.msra.mxu0 %v535
        %663 = vmatpush.msra.mxu0 %v515
        %664 = vmatpush.msra.mxu0 %v495
        %665 = vmatpush.msra.mxu0 %v475
        %666 = vmatpush.msra.mxu0 %v455
        %667 = vmatpush.msra.mxu0 %v435
        %668 = vmatpush.msra.mxu0 %v415
        %669 = vmatpush.msra.mxu0 %v395
        %670 = vmatpush.msra.mxu0 %v375
        %671 = vmatpush.msra.mxu0 %v355
        %672 = vmatpush.msra.mxu0 %v335
        %673 = vmatpush.msra.mxu0 %v315
        %674 = vmatpush.msra.mxu0 %v295
        %675 = vmatpush.msra.mxu0 %v275
        %676 = vmatmul.f32.gmra.mxu0 %v273
        %v677 = vpop.f32.mrf.mxu0
        %v678 = vadd.f32 %v601, %v677
        %679 = vdwg.mxu0
        %680 = vmatpush.msra.mxu0 %v576
        %681 = vmatpush.msra.mxu0 %v556
        %682 = vmatpush.msra.mxu0 %v536
        %683 = vmatpush.msra.mxu0 %v516
        %684 = vmatpush.msra.mxu0 %v496
        %685 = vmatpush.msra.mxu0 %v476
        %686 = vmatpush.msra.mxu0 %v456
        %687 = vmatpush.msra.mxu0 %v436
        %688 = vmatpush.msra.mxu0 %v416
        %689 = vmatpush.msra.mxu0 %v396
        %690 = vmatpush.msra.mxu0 %v376
        %691 = vmatpush.msra.mxu0 %v356
        %692 = vmatpush.msra.mxu0 %v336
        %693 = vmatpush.msra.mxu0 %v316
        %694 = vmatpush.msra.mxu0 %v296
        %695 = vmatpush.msra.mxu0 %v276
        %696 = vmatmul.f32.gmra.mxu0 %v273
        %v697 = vpop.f32.mrf.mxu0
        %v698 = vadd.f32 %v602, %v697
        %699 = vdwg.mxu0
        %700 = vmatpush.msra.mxu0 %v577
        %701 = vmatpush.msra.mxu0 %v557
        %702 = vmatpush.msra.mxu0 %v537
        %703 = vmatpush.msra.mxu0 %v517
        %704 = vmatpush.msra.mxu0 %v497
        %705 = vmatpush.msra.mxu0 %v477
        %706 = vmatpush.msra.mxu0 %v457
        %707 = vmatpush.msra.mxu0 %v437
        %708 = vmatpush.msra.mxu0 %v417
        %709 = vmatpush.msra.mxu0 %v397
        %710 = vmatpush.msra.mxu0 %v377
        %711 = vmatpush.msra.mxu0 %v357
        %712 = vmatpush.msra.mxu0 %v337
        %713 = vmatpush.msra.mxu0 %v317
        %714 = vmatpush.msra.mxu0 %v297
        %715 = vmatpush.msra.mxu0 %v277
        %716 = vmatmul.f32.gmra.mxu0 %v273
        %v717 = vpop.f32.mrf.mxu0
        %v718 = vadd.f32 %v603, %v717
        %719 = vdwg.mxu0
        %720 = vmatpush.msra.mxu0 %v578
        %721 = vmatpush.msra.mxu0 %v558
        %722 = vmatpush.msra.mxu0 %v538
        %723 = vmatpush.msra.mxu0 %v518
        %724 = vmatpush.msra.mxu0 %v498
        %725 = vmatpush.msra.mxu0 %v478
        %726 = vmatpush.msra.mxu0 %v458
        %727 = vmatpush.msra.mxu0 %v438
        %728 = vmatpush.msra.mxu0 %v418
        %729 = vmatpush.msra.mxu0 %v398
        %730 = vmatpush.msra.mxu0 %v378
        %731 = vmatpush.msra.mxu0 %v358
        %732 = vmatpush.msra.mxu0 %v338
        %733 = vmatpush.msra.mxu0 %v318
        %734 = vmatpush.msra.mxu0 %v298
        %735 = vmatpush.msra.mxu0 %v278
        %736 = vmatmul.f32.gmra.mxu0 %v273
        %v737 = vpop.f32.mrf.mxu0
        %v738 = vadd.f32 %v604, %v737
        %739 = vdwg.mxu0
        %740 = vmatpush.msra.mxu0 %v579
        %741 = vmatpush.msra.mxu0 %v559
        %742 = vmatpush.msra.mxu0 %v539
        %743 = vmatpush.msra.mxu0 %v519
        %744 = vmatpush.msra.mxu0 %v499
        %745 = vmatpush.msra.mxu0 %v479
        %746 = vmatpush.msra.mxu0 %v459
        %747 = vmatpush.msra.mxu0 %v439
        %748 = vmatpush.msra.mxu0 %v419
        %749 = vmatpush.msra.mxu0 %v399
        %750 = vmatpush.msra.mxu0 %v379
        %751 = vmatpush.msra.mxu0 %v359
        %752 = vmatpush.msra.mxu0 %v339
        %753 = vmatpush.msra.mxu0 %v319
        %754 = vmatpush.msra.mxu0 %v299
        %755 = vmatpush.msra.mxu0 %v279
        %756 = vmatmul.f32.gmra.mxu0 %v273
        %v757 = vpop.f32.mrf.mxu0
        %v758 = vadd.f32 %v605, %v757
        %759 = vdwg.mxu0
        %760 = vmatpush.msra.mxu0 %v580
        %761 = vmatpush.msra.mxu0 %v560
        %762 = vmatpush.msra.mxu0 %v540
        %763 = vmatpush.msra.mxu0 %v520
        %764 = vmatpush.msra.mxu0 %v500
        %765 = vmatpush.msra.mxu0 %v480
        %766 = vmatpush.msra.mxu0 %v460
        %767 = vmatpush.msra.mxu0 %v440
        %768 = vmatpush.msra.mxu0 %v420
        %769 = vmatpush.msra.mxu0 %v400
        %770 = vmatpush.msra.mxu0 %v380
        %771 = vmatpush.msra.mxu0 %v360
        %772 = vmatpush.msra.mxu0 %v340
        %773 = vmatpush.msra.mxu0 %v320
        %774 = vmatpush.msra.mxu0 %v300
        %775 = vmatpush.msra.mxu0 %v280
        %776 = vmatmul.f32.gmra.mxu0 %v273
        %v777 = vpop.f32.mrf.mxu0
        %v778 = vadd.f32 %v606, %v777
        %779 = vdwg.mxu0
        %780 = vmatpush.msra.mxu0 %v581
        %781 = vmatpush.msra.mxu0 %v561
        %782 = vmatpush.msra.mxu0 %v541
        %783 = vmatpush.msra.mxu0 %v521
        %784 = vmatpush.msra.mxu0 %v501
        %785 = vmatpush.msra.mxu0 %v481
        %786 = vmatpush.msra.mxu0 %v461
        %787 = vmatpush.msra.mxu0 %v441
        %788 = vmatpush.msra.mxu0 %v421
        %789 = vmatpush.msra.mxu0 %v401
        %790 = vmatpush.msra.mxu0 %v381
        %791 = vmatpush.msra.mxu0 %v361
        %792 = vmatpush.msra.mxu0 %v341
        %793 = vmatpush.msra.mxu0 %v321
        %794 = vmatpush.msra.mxu0 %v301
        %795 = vmatpush.msra.mxu0 %v281
        %796 = vmatmul.f32.gmra.mxu0 %v273
        %v797 = vpop.f32.mrf.mxu0
        %v798 = vadd.f32 %v607, %v797
        %799 = vdwg.mxu0
        %800 = vmatpush.msra.mxu0 %v582
        %801 = vmatpush.msra.mxu0 %v562
        %802 = vmatpush.msra.mxu0 %v542
        %803 = vmatpush.msra.mxu0 %v522
        %804 = vmatpush.msra.mxu0 %v502
        %805 = vmatpush.msra.mxu0 %v482
        %806 = vmatpush.msra.mxu0 %v462
        %807 = vmatpush.msra.mxu0 %v442
        %808 = vmatpush.msra.mxu0 %v422
        %809 = vmatpush.msra.mxu0 %v402
        %810 = vmatpush.msra.mxu0 %v382
        %811 = vmatpush.msra.mxu0 %v362
        %812 = vmatpush.msra.mxu0 %v342
        %813 = vmatpush.msra.mxu0 %v322
        %814 = vmatpush.msra.mxu0 %v302
        %815 = vmatpush.msra.mxu0 %v282
        %816 = vmatmul.f32.gmra.mxu0 %v273
        %v817 = vpop.f32.mrf.mxu0
        %v818 = vadd.f32 %v608, %v817
        %819 = vdwg.mxu0
        %820 = vmatpush.msra.mxu0 %v583
        %821 = vmatpush.msra.mxu0 %v563
        %822 = vmatpush.msra.mxu0 %v543
        %823 = vmatpush.msra.mxu0 %v523
        %824 = vmatpush.msra.mxu0 %v503
        %825 = vmatpush.msra.mxu0 %v483
        %826 = vmatpush.msra.mxu0 %v463
        %827 = vmatpush.msra.mxu0 %v443
        %828 = vmatpush.msra.mxu0 %v423
        %829 = vmatpush.msra.mxu0 %v403
        %830 = vmatpush.msra.mxu0 %v383
        %831 = vmatpush.msra.mxu0 %v363
        %832 = vmatpush.msra.mxu0 %v343
        %833 = vmatpush.msra.mxu0 %v323
        %834 = vmatpush.msra.mxu0 %v303
        %835 = vmatpush.msra.mxu0 %v283
        %836 = vmatmul.f32.gmra.mxu0 %v273
        %v837 = vpop.f32.mrf.mxu0
        %v838 = vadd.f32 %v609, %v837
        %839 = vdwg.mxu0
        %840 = vmatpush.msra.mxu0 %v584
        %841 = vmatpush.msra.mxu0 %v564
        %842 = vmatpush.msra.mxu0 %v544
        %843 = vmatpush.msra.mxu0 %v524
        %844 = vmatpush.msra.mxu0 %v504
        %845 = vmatpush.msra.mxu0 %v484
        %846 = vmatpush.msra.mxu0 %v464
        %847 = vmatpush.msra.mxu0 %v444
        %848 = vmatpush.msra.mxu0 %v424
        %849 = vmatpush.msra.mxu0 %v404
        %850 = vmatpush.msra.mxu0 %v384
        %851 = vmatpush.msra.mxu0 %v364
        %852 = vmatpush.msra.mxu0 %v344
        %853 = vmatpush.msra.mxu0 %v324
        %854 = vmatpush.msra.mxu0 %v304
        %855 = vmatpush.msra.mxu0 %v284
        %856 = vmatmul.f32.gmra.mxu0 %v273
        %v857 = vpop.f32.mrf.mxu0
        %v858 = vadd.f32 %v610, %v857
        %859 = vdwg.mxu0
        %860 = vmatpush.msra.mxu0 %v585
        %861 = vmatpush.msra.mxu0 %v565
        %862 = vmatpush.msra.mxu0 %v545
        %863 = vmatpush.msra.mxu0 %v525
        %864 = vmatpush.msra.mxu0 %v505
        %865 = vmatpush.msra.mxu0 %v485
        %866 = vmatpush.msra.mxu0 %v465
        %867 = vmatpush.msra.mxu0 %v445
        %868 = vmatpush.msra.mxu0 %v425
        %869 = vmatpush.msra.mxu0 %v405
        %870 = vmatpush.msra.mxu0 %v385
        %871 = vmatpush.msra.mxu0 %v365
        %872 = vmatpush.msra.mxu0 %v345
        %873 = vmatpush.msra.mxu0 %v325
        %874 = vmatpush.msra.mxu0 %v305
        %875 = vmatpush.msra.mxu0 %v285
        %876 = vmatmul.f32.gmra.mxu0 %v273
        %v877 = vpop.f32.mrf.mxu0
        %v878 = vadd.f32 %v611, %v877
        %879 = vdwg.mxu0
        %880 = vmatpush.msra.mxu0 %v586
        %881 = vmatpush.msra.mxu0 %v566
        %882 = vmatpush.msra.mxu0 %v546
        %883 = vmatpush.msra.mxu0 %v526
        %884 = vmatpush.msra.mxu0 %v506
        %885 = vmatpush.msra.mxu0 %v486
        %886 = vmatpush.msra.mxu0 %v466
        %887 = vmatpush.msra.mxu0 %v446
        %888 = vmatpush.msra.mxu0 %v426
        %889 = vmatpush.msra.mxu0 %v406
        %890 = vmatpush.msra.mxu0 %v386
        %891 = vmatpush.msra.mxu0 %v366
        %892 = vmatpush.msra.mxu0 %v346
        %893 = vmatpush.msra.mxu0 %v326
        %894 = vmatpush.msra.mxu0 %v306
        %895 = vmatpush.msra.mxu0 %v286
        %896 = vmatmul.f32.gmra.mxu0 %v273
        %v897 = vpop.f32.mrf.mxu0
        %v898 = vadd.f32 %v612, %v897
        %899 = vdwg.mxu0
        %900 = vmatpush.msra.mxu0 %v587
        %901 = vmatpush.msra.mxu0 %v567
        %902 = vmatpush.msra.mxu0 %v547
        %903 = vmatpush.msra.mxu0 %v527
        %904 = vmatpush.msra.mxu0 %v507
        %905 = vmatpush.msra.mxu0 %v487
        %906 = vmatpush.msra.mxu0 %v467
        %907 = vmatpush.msra.mxu0 %v447
        %908 = vmatpush.msra.mxu0 %v427
        %909 = vmatpush.msra.mxu0 %v407
        %910 = vmatpush.msra.mxu0 %v387
        %911 = vmatpush.msra.mxu0 %v367
        %912 = vmatpush.msra.mxu0 %v347
        %913 = vmatpush.msra.mxu0 %v327
        %914 = vmatpush.msra.mxu0 %v307
        %915 = vmatpush.msra.mxu0 %v287
        %916 = vmatmul.f32.gmra.mxu0 %v273
        %v917 = vpop.f32.mrf.mxu0
        %v918 = vadd.f32 %v613, %v917
        %919 = vdwg.mxu0
        %920 = vmatpush.msra.mxu0 %v588
        %921 = vmatpush.msra.mxu0 %v568
        %922 = vmatpush.msra.mxu0 %v548
        %923 = vmatpush.msra.mxu0 %v528
        %924 = vmatpush.msra.mxu0 %v508
        %925 = vmatpush.msra.mxu0 %v488
        %926 = vmatpush.msra.mxu0 %v468
        %927 = vmatpush.msra.mxu0 %v448
        %928 = vmatpush.msra.mxu0 %v428
        %929 = vmatpush.msra.mxu0 %v408
        %930 = vmatpush.msra.mxu0 %v388
        %931 = vmatpush.msra.mxu0 %v368
        %932 = vmatpush.msra.mxu0 %v348
        %933 = vmatpush.msra.mxu0 %v328
        %934 = vmatpush.msra.mxu0 %v308
        %935 = vmatpush.msra.mxu0 %v288
        %936 = vmatmul.f32.gmra.mxu0 %v273
        %v937 = vpop.f32.mrf.mxu0
        %v938 = vadd.f32 %v614, %v937
        %939 = vdwg.mxu0
        %940 = vmatpush.msra.mxu0 %v589
        %941 = vmatpush.msra.mxu0 %v569
        %942 = vmatpush.msra.mxu0 %v549
        %943 = vmatpush.msra.mxu0 %v529
        %944 = vmatpush.msra.mxu0 %v509
        %945 = vmatpush.msra.mxu0 %v489
        %946 = vmatpush.msra.mxu0 %v469
        %947 = vmatpush.msra.mxu0 %v449
        %948 = vmatpush.msra.mxu0 %v429
        %949 = vmatpush.msra.mxu0 %v409
        %950 = vmatpush.msra.mxu0 %v389
        %951 = vmatpush.msra.mxu0 %v369
        %952 = vmatpush.msra.mxu0 %v349
        %953 = vmatpush.msra.mxu0 %v329
        %954 = vmatpush.msra.mxu0 %v309
        %955 = vmatpush.msra.mxu0 %v289
        %956 = vmatmul.f32.gmra.mxu0 %v273
        %v957 = vpop.f32.mrf.mxu0
        %v958 = vadd.f32 %v615, %v957
        %959 = vdwg.mxu0
        %960 = vmatpush.msra.mxu0 %v590
        %961 = vmatpush.msra.mxu0 %v570
        %962 = vmatpush.msra.mxu0 %v550
        %963 = vmatpush.msra.mxu0 %v530
        %964 = vmatpush.msra.mxu0 %v510
        %965 = vmatpush.msra.mxu0 %v490
        %966 = vmatpush.msra.mxu0 %v470
        %967 = vmatpush.msra.mxu0 %v450
        %968 = vmatpush.msra.mxu0 %v430
        %969 = vmatpush.msra.mxu0 %v410
        %970 = vmatpush.msra.mxu0 %v390
        %971 = vmatpush.msra.mxu0 %v370
        %972 = vmatpush.msra.mxu0 %v350
        %973 = vmatpush.msra.mxu0 %v330
        %974 = vmatpush.msra.mxu0 %v310
        %975 = vmatpush.msra.mxu0 %v290
        %976 = vmatmul.f32.gmra.mxu0 %v273
        %v977 = vpop.f32.mrf.mxu0
        %v978 = vadd.f32 %v616, %v977
        %979 = vdwg.mxu0
        %980 = vmatpush.msra.mxu0 %v591
        %981 = vmatpush.msra.mxu0 %v571
        %982 = vmatpush.msra.mxu0 %v551
        %983 = vmatpush.msra.mxu0 %v531
        %984 = vmatpush.msra.mxu0 %v511
        %985 = vmatpush.msra.mxu0 %v491
        %986 = vmatpush.msra.mxu0 %v471
        %987 = vmatpush.msra.mxu0 %v451
        %988 = vmatpush.msra.mxu0 %v431
        %989 = vmatpush.msra.mxu0 %v411
        %990 = vmatpush.msra.mxu0 %v391
        %991 = vmatpush.msra.mxu0 %v371
        %992 = vmatpush.msra.mxu0 %v351
        %993 = vmatpush.msra.mxu0 %v331
        %994 = vmatpush.msra.mxu0 %v311
        %995 = vmatpush.msra.mxu0 %v291
        %996 = vmatmul.f32.gmra.mxu0 %v273
        %v997 = vpop.f32.mrf.mxu0
        %v998 = vadd.f32 %v617, %v997
        %999 = vdwg.mxu0
        %1000 = vmatpush.msra.mxu0 %v592
        %1001 = vmatpush.msra.mxu0 %v572
        %1002 = vmatpush.msra.mxu0 %v552
        %1003 = vmatpush.msra.mxu0 %v532
        %1004 = vmatpush.msra.mxu0 %v512
        %1005 = vmatpush.msra.mxu0 %v492
        %1006 = vmatpush.msra.mxu0 %v472
        %1007 = vmatpush.msra.mxu0 %v452
        %1008 = vmatpush.msra.mxu0 %v432
        %1009 = vmatpush.msra.mxu0 %v412
        %1010 = vmatpush.msra.mxu0 %v392
        %1011 = vmatpush.msra.mxu0 %v372
        %1012 = vmatpush.msra.mxu0 %v352
        %1013 = vmatpush.msra.mxu0 %v332
        %1014 = vmatpush.msra.mxu0 %v312
        %1015 = vmatpush.msra.mxu0 %v292
        %1016 = vmatmul.f32.gmra.mxu0 %v273
        %v1017 = vpop.f32.mrf.mxu0
        %v1018 = vadd.f32 %v618, %v1017
        %1019 = vdwg.mxu0
        %1020 = vmatpush.msra.mxu0 %v593
        %1021 = vmatpush.msra.mxu0 %v573
        %1022 = vmatpush.msra.mxu0 %v553
        %1023 = vmatpush.msra.mxu0 %v533
        %1024 = vmatpush.msra.mxu0 %v513
        %1025 = vmatpush.msra.mxu0 %v493
        %1026 = vmatpush.msra.mxu0 %v473
        %1027 = vmatpush.msra.mxu0 %v453
        %1028 = vmatpush.msra.mxu0 %v433
        %1029 = vmatpush.msra.mxu0 %v413
        %1030 = vmatpush.msra.mxu0 %v393
        %1031 = vmatpush.msra.mxu0 %v373
        %1032 = vmatpush.msra.mxu0 %v353
        %1033 = vmatpush.msra.mxu0 %v333
        %1034 = vmatpush.msra.mxu0 %v313
        %1035 = vmatpush.msra.mxu0 %v293
        %1036 = vmatmul.f32.gmra.mxu0 %v273
        %v1037 = vpop.f32.mrf.mxu0
        %v1038 = vadd.f32 %v619, %v1037
        %1039 = vdwg.mxu0
        %v1040 = vmax.f32 %v658, 0.0
        %v1041 = vmax.f32 %v678, 0.0
        %v1042 = vmax.f32 %v698, 0.0
        %v1043 = vmax.f32 %v718, 0.0
        %v1044 = vmax.f32 %v738, 0.0
        %v1045 = vmax.f32 %v758, 0.0
        %v1046 = vmax.f32 %v778, 0.0
        %v1047 = vmax.f32 %v798, 0.0
        %v1048 = vmax.f32 %v818, 0.0
        %v1049 = vmax.f32 %v838, 0.0
        %v1050 = vmax.f32 %v858, 0.0
        %v1051 = vmax.f32 %v878, 0.0
        %v1052 = vmax.f32 %v898, 0.0
        %v1053 = vmax.f32 %v918, 0.0
        %v1054 = vmax.f32 %v938, 0.0
        %v1055 = vmax.f32 %v958, 0.0
        %v1056 = vmax.f32 %v978, 0.0
        %v1057 = vmax.f32 %v998, 0.0
        %v1058 = vmax.f32 %v1018, 0.0
        %v1059 = vmax.f32 %v1038, 0.0
        %v1060 = vld [vmem:[%s3] sm:$0xff]
        %v1061 = vld [vmem:[%s3 + $0x8] sm:$0xff]
        %v1062 = vld [vmem:[%s3 + $0x10] sm:$0xff]
        %v1063 = vld [vmem:[%s3 + $0x18] sm:$0xff]
        %v1064 = vld [vmem:[%s3 + $0x20] sm:$0xff]
        %v1065 = vld [vmem:[%s3 + $0x28] sm:$0xff]
        %v1066 = vld [vmem:[%s3 + $0x30] sm:$0xff]
        %v1067 = vld [vmem:[%s3 + $0x38] sm:$0xff]
        %v1068 = vld [vmem:[%s3 + $0x40] sm:$0xff]
        %v1069 = vld [vmem:[%s3 + $0x48] sm:$0xff]
        %v1070 = vld [vmem:[%s3 + $0x50] sm:$0xff]
        %v1071 = vld [vmem:[%s3 + $0x58] sm:$0xff]
        %v1072 = vld [vmem:[%s3 + $0x60] sm:$0xff]
        %v1073 = vld [vmem:[%s3 + $0x68] sm:$0xff]
        %v1074 = vld [vmem:[%s3 + $0x70] sm:$0xff]
        %v1075 = vld [vmem:[%s3 + $0x78] sm:$0xff]
        %v1076 = vld [vmem:[%s3 + $0x80] sm:$0xff]
        %v1077 = vld [vmem:[%s3 + $0x88] sm:$0xff]
        %v1078 = vld [vmem:[%s3 + $0x90] sm:$0xff]
        %v1079 = vld [vmem:[%s3 + $0x98] sm:$0xff]
        %v1080 = vld [vmem:[%s3 + $0xa0] sm:$0xff]
        %v1081 = vld [vmem:[%s3 + $0xa8] sm:$0xff]
        %v1082 = vld [vmem:[%s3 + $0xb0] sm:$0xff]
        %v1083 = vld [vmem:[%s3 + $0xb8] sm:$0xff]
        %v1084 = vld [vmem:[%s3 + $0xc0] sm:$0xff]
        %v1085 = vld [vmem:[%s3 + $0xc8] sm:$0xff]
        %v1086 = vld [vmem:[%s3 + $0xd0] sm:$0xff]
        %v1087 = vld [vmem:[%s3 + $0xd8] sm:$0xff]
        %v1088 = vld [vmem:[%s3 + $0xe0] sm:$0xff]
        %v1089 = vld [vmem:[%s3 + $0xe8] sm:$0xff]
        %v1090 = vld [vmem:[%s3 + $0xf0] sm:$0xff]
        %v1091 = vld [vmem:[%s3 + $0xf8] sm:$0xff]
        %v1092 = vld [vmem:[%s3 + $0x100] sm:$0xff]
        %v1093 = vld [vmem:[%s3 + $0x108] sm:$0xff]
        %v1094 = vld [vmem:[%s3 + $0x110] sm:$0xff]
        %v1095 = vld [vmem:[%s3 + $0x118] sm:$0xff]
        %v1096 = vld [vmem:[%s3 + $0x120] sm:$0xff]
        %v1097 = vld [vmem:[%s3 + $0x128] sm:$0xff]
        %v1098 = vld [vmem:[%s3 + $0x130] sm:$0xff]
        %v1099 = vld [vmem:[%s3 + $0x138] sm:$0xff]
        %v1100 = vld [vmem:[%s3 + $0x140] sm:$0xff]
        %v1101 = vld [vmem:[%s3 + $0x148] sm:$0xff]
        %v1102 = vld [vmem:[%s3 + $0x150] sm:$0xff]
        %v1103 = vld [vmem:[%s3 + $0x158] sm:$0xff]
        %v1104 = vld [vmem:[%s3 + $0x160] sm:$0xff]
        %v1105 = vld [vmem:[%s3 + $0x168] sm:$0xff]
        %v1106 = vld [vmem:[%s3 + $0x170] sm:$0xff]
        %v1107 = vld [vmem:[%s3 + $0x178] sm:$0xff]
        %v1108 = vld [vmem:[%s3 + $0x180] sm:$0xff]
        %v1109 = vld [vmem:[%s3 + $0x188] sm:$0xff]
        %v1110 = vld [vmem:[%s3 + $0x190] sm:$0xff]
        %v1111 = vld [vmem:[%s3 + $0x198] sm:$0xff]
        %v1112 = vld [vmem:[%s3 + $0x1a0] sm:$0xff]
        %v1113 = vld [vmem:[%s3 + $0x1a8] sm:$0xff]
        %v1114 = vld [vmem:[%s3 + $0x1b0] sm:$0xff]
        %v1115 = vld [vmem:[%s3 + $0x1b8] sm:$0xff]
        %v1116 = vld [vmem:[%s3 + $0x1c0] sm:$0xff]
        %v1117 = vld [vmem:[%s3 + $0x1c8] sm:$0xff]
        %v1118 = vld [vmem:[%s3 + $0x1d0] sm:$0xff]
        %v1119 = vld [vmem:[%s3 + $0x1d8] sm:$0xff]
        %v1120 = vld [vmem:[%s3 + $0x1e0] sm:$0xff]
        %v1121 = vld [vmem:[%s3 + $0x1e8] sm:$0xff]
        %v1122 = vld [vmem:[%s3 + $0x1f0] sm:$0xff]
        %v1123 = vld [vmem:[%s3 + $0x1f8] sm:$0xff]
        %v1124 = vld [vmem:[%s3 + $0x200] sm:$0xff]
        %v1125 = vld [vmem:[%s3 + $0x208] sm:$0xff]
        %v1126 = vld [vmem:[%s3 + $0x210] sm:$0xff]
        %v1127 = vld [vmem:[%s3 + $0x218] sm:$0xff]
        %v1128 = vld [vmem:[%s3 + $0x220] sm:$0xff]
        %v1129 = vld [vmem:[%s3 + $0x228] sm:$0xff]
        %v1130 = vld [vmem:[%s3 + $0x230] sm:$0xff]
        %v1131 = vld [vmem:[%s3 + $0x238] sm:$0xff]
        %v1132 = vld [vmem:[%s3 + $0x240] sm:$0xff]
        %v1133 = vld [vmem:[%s3 + $0x248] sm:$0xff]
        %v1134 = vld [vmem:[%s3 + $0x250] sm:$0xff]
        %v1135 = vld [vmem:[%s3 + $0x258] sm:$0xff]
        %v1136 = vld [vmem:[%s3 + $0x260] sm:$0xff]
        %v1137 = vld [vmem:[%s3 + $0x268] sm:$0xff]
        %v1138 = vld [vmem:[%s3 + $0x270] sm:$0xff]
        %v1139 = vld [vmem:[%s3 + $0x278] sm:$0xff]
        %s1140 = scalar_lea.vmem %s3, 640
        %v1141 = vld [vmem:[%s1140] sm:$0xff]
        %v1142 = vld [vmem:[%s1140 + $0x8] sm:$0xff]
        %v1143 = vld [vmem:[%s1140 + $0x10] sm:$0xff]
        %v1144 = vld [vmem:[%s1140 + $0x18] sm:$0xff]
        %v1145 = vld [vmem:[%s1140 + $0x20] sm:$0xff]
        %v1146 = vld [vmem:[%s1140 + $0x28] sm:$0xff]
        %v1147 = vld [vmem:[%s1140 + $0x30] sm:$0xff]
        %v1148 = vld [vmem:[%s1140 + $0x38] sm:$0xff]
        %v1149 = vld [vmem:[%s1140 + $0x40] sm:$0xff]
        %v1150 = vld [vmem:[%s1140 + $0x48] sm:$0xff]
        %v1151 = vld [vmem:[%s1140 + $0x50] sm:$0xff]
        %v1152 = vld [vmem:[%s1140 + $0x58] sm:$0xff]
        %v1153 = vld [vmem:[%s1140 + $0x60] sm:$0xff]
        %v1154 = vld [vmem:[%s1140 + $0x68] sm:$0xff]
        %v1155 = vld [vmem:[%s1140 + $0x70] sm:$0xff]
        %v1156 = vld [vmem:[%s1140 + $0x78] sm:$0xff]
        %v1157 = vld [vmem:[%s1140 + $0x80] sm:$0xff]
        %v1158 = vld [vmem:[%s1140 + $0x88] sm:$0xff]
        %v1159 = vld [vmem:[%s1140 + $0x90] sm:$0xff]
        %v1160 = vld [vmem:[%s1140 + $0x98] sm:$0xff]
        %v1161 = vld [vmem:[%s1140 + $0xa0] sm:$0xff]
        %v1162 = vld [vmem:[%s1140 + $0xa8] sm:$0xff]
        %v1163 = vld [vmem:[%s1140 + $0xb0] sm:$0xff]
        %v1164 = vld [vmem:[%s1140 + $0xb8] sm:$0xff]
        %v1165 = vld [vmem:[%s1140 + $0xc0] sm:$0xff]
        %v1166 = vld [vmem:[%s1140 + $0xc8] sm:$0xff]
        %v1167 = vld [vmem:[%s1140 + $0xd0] sm:$0xff]
        %v1168 = vld [vmem:[%s1140 + $0xd8] sm:$0xff]
        %v1169 = vld [vmem:[%s1140 + $0xe0] sm:$0xff]
        %v1170 = vld [vmem:[%s1140 + $0xe8] sm:$0xff]
        %v1171 = vld [vmem:[%s1140 + $0xf0] sm:$0xff]
        %v1172 = vld [vmem:[%s1140 + $0xf8] sm:$0xff]
        %v1173 = vld [vmem:[%s1140 + $0x100] sm:$0xff]
        %v1174 = vld [vmem:[%s1140 + $0x108] sm:$0xff]
        %v1175 = vld [vmem:[%s1140 + $0x110] sm:$0xff]
        %v1176 = vld [vmem:[%s1140 + $0x118] sm:$0xff]
        %v1177 = vld [vmem:[%s1140 + $0x120] sm:$0xff]
        %v1178 = vld [vmem:[%s1140 + $0x128] sm:$0xff]
        %v1179 = vld [vmem:[%s1140 + $0x130] sm:$0xff]
        %v1180 = vld [vmem:[%s1140 + $0x138] sm:$0xff]
        %v1181 = vld [vmem:[%s1140 + $0x140] sm:$0xff]
        %v1182 = vld [vmem:[%s1140 + $0x148] sm:$0xff]
        %v1183 = vld [vmem:[%s1140 + $0x150] sm:$0xff]
        %v1184 = vld [vmem:[%s1140 + $0x158] sm:$0xff]
        %v1185 = vld [vmem:[%s1140 + $0x160] sm:$0xff]
        %v1186 = vld [vmem:[%s1140 + $0x168] sm:$0xff]
        %v1187 = vld [vmem:[%s1140 + $0x170] sm:$0xff]
        %v1188 = vld [vmem:[%s1140 + $0x178] sm:$0xff]
        %v1189 = vld [vmem:[%s1140 + $0x180] sm:$0xff]
        %v1190 = vld [vmem:[%s1140 + $0x188] sm:$0xff]
        %v1191 = vld [vmem:[%s1140 + $0x190] sm:$0xff]
        %v1192 = vld [vmem:[%s1140 + $0x198] sm:$0xff]
        %v1193 = vld [vmem:[%s1140 + $0x1a0] sm:$0xff]
        %v1194 = vld [vmem:[%s1140 + $0x1a8] sm:$0xff]
        %v1195 = vld [vmem:[%s1140 + $0x1b0] sm:$0xff]
        %v1196 = vld [vmem:[%s1140 + $0x1b8] sm:$0xff]
        %v1197 = vld [vmem:[%s1140 + $0x1c0] sm:$0xff]
        %v1198 = vld [vmem:[%s1140 + $0x1c8] sm:$0xff]
        %v1199 = vld [vmem:[%s1140 + $0x1d0] sm:$0xff]
        %v1200 = vld [vmem:[%s1140 + $0x1d8] sm:$0xff]
        %v1201 = vld [vmem:[%s1140 + $0x1e0] sm:$0xff]
        %v1202 = vld [vmem:[%s1140 + $0x1e8] sm:$0xff]
        %v1203 = vld [vmem:[%s1140 + $0x1f0] sm:$0xff]
        %v1204 = vld [vmem:[%s1140 + $0x1f8] sm:$0xff]
        %v1205 = vld [vmem:[%s1140 + $0x200] sm:$0xff]
        %v1206 = vld [vmem:[%s1140 + $0x208] sm:$0xff]
        %v1207 = vld [vmem:[%s1140 + $0x210] sm:$0xff]
        %v1208 = vld [vmem:[%s1140 + $0x218] sm:$0xff]
        %v1209 = vld [vmem:[%s1140 + $0x220] sm:$0xff]
        %v1210 = vld [vmem:[%s1140 + $0x228] sm:$0xff]
        %v1211 = vld [vmem:[%s1140 + $0x230] sm:$0xff]
        %v1212 = vld [vmem:[%s1140 + $0x238] sm:$0xff]
        %v1213 = vld [vmem:[%s1140 + $0x240] sm:$0xff]
        %v1214 = vld [vmem:[%s1140 + $0x248] sm:$0xff]
        %v1215 = vld [vmem:[%s1140 + $0x250] sm:$0xff]
        %v1216 = vld [vmem:[%s1140 + $0x258] sm:$0xff]
        %v1217 = vld [vmem:[%s1140 + $0x260] sm:$0xff]
        %v1218 = vld [vmem:[%s1140 + $0x268] sm:$0xff]
        %v1219 = vld [vmem:[%s1140 + $0x270] sm:$0xff]
        %v1220 = vld [vmem:[%s1140 + $0x278] sm:$0xff]
        %v1241 = vrot.slane %v1040, 1
        %v1242 = vrot.slane %v1041, 1
        %v1243 = vrot.slane %v1042, 1
        %v1244 = vrot.slane %v1043, 1
        %v1245 = vrot.slane %v1044, 1
        %v1246 = vrot.slane %v1045, 1
        %v1247 = vrot.slane %v1046, 1
        %v1248 = vrot.slane %v1047, 1
        %v1249 = vrot.slane %v1048, 1
        %v1250 = vrot.slane %v1049, 1
        %v1251 = vrot.slane %v1050, 1
        %v1252 = vrot.slane %v1051, 1
        %v1253 = vrot.slane %v1052, 1
        %v1254 = vrot.slane %v1053, 1
        %v1255 = vrot.slane %v1054, 1
        %v1256 = vrot.slane %v1055, 1
        %v1257 = vrot.slane %v1056, 1
        %v1258 = vrot.slane %v1057, 1
        %v1259 = vrot.slane %v1058, 1
        %v1260 = vrot.slane %v1059, 1
        %1281 = vmatpush.xpose.msra.mxu0 0.0
        %1282 = vmatpush.xpose.msra.mxu0 0.0
        %1283 = vmatpush.xpose.msra.mxu0 0.0
        %1284 = vmatpush.xpose.msra.mxu0 0.0
        %1285 = vmatpush.xpose.msra.mxu0 0.0
        %1286 = vmatpush.xpose.msra.mxu0 0.0
        %1287 = vmatpush.xpose.msra.mxu0 0.0
        %1288 = vmatpush.xpose.msra.mxu0 0.0
        %1289 = vmatpush.xpose.msra.mxu0 0.0
        %1290 = vmatpush.xpose.msra.mxu0 0.0
        %1291 = vmatpush.xpose.msra.mxu0 0.0
        %1292 = vmatpush.xpose.msra.mxu0 0.0
        %1293 = vmatpush.xpose.msra.mxu0 %v1201
        %1294 = vmatpush.xpose.msra.mxu0 %v1181
        %1295 = vmatpush.xpose.msra.mxu0 %v1161
        %1296 = vmatpush.xpose.msra.mxu0 %v1141
        %1297 = vmatmul.f32.gmra.mxu0 %v1241
        %v1298 = vpop.f32.mrf.mxu0
        %v1299 = vadd.f32 0.0, %v1298
        %1300 = vdwg.mxu0
        %1301 = vmatpush.xpose.msra.mxu0 0.0
        %1302 = vmatpush.xpose.msra.mxu0 0.0
        %1303 = vmatpush.xpose.msra.mxu0 0.0
        %1304 = vmatpush.xpose.msra.mxu0 0.0
        %1305 = vmatpush.xpose.msra.mxu0 0.0
        %1306 = vmatpush.xpose.msra.mxu0 0.0
        %1307 = vmatpush.xpose.msra.mxu0 0.0
        %1308 = vmatpush.xpose.msra.mxu0 0.0
        %1309 = vmatpush.xpose.msra.mxu0 0.0
        %1310 = vmatpush.xpose.msra.mxu0 0.0
        %1311 = vmatpush.xpose.msra.mxu0 0.0
        %1312 = vmatpush.xpose.msra.mxu0 0.0
        %1313 = vmatpush.xpose.msra.mxu0 %v1202
        %1314 = vmatpush.xpose.msra.mxu0 %v1182
        %1315 = vmatpush.xpose.msra.mxu0 %v1162
        %1316 = vmatpush.xpose.msra.mxu0 %v1142
        %1317 = vmatmul.f32.gmra.mxu0 %v1242
        %v1318 = vpop.f32.mrf.mxu0
        %v1319 = vadd.f32 %v1299, %v1318
        %1320 = vdwg.mxu0
        %1321 = vmatpush.xpose.msra.mxu0 0.0
        %1322 = vmatpush.xpose.msra.mxu0 0.0
        %1323 = vmatpush.xpose.msra.mxu0 0.0
        %1324 = vmatpush.xpose.msra.mxu0 0.0
        %1325 = vmatpush.xpose.msra.mxu0 0.0
        %1326 = vmatpush.xpose.msra.mxu0 0.0
        %1327 = vmatpush.xpose.msra.mxu0 0.0
        %1328 = vmatpush.xpose.msra.mxu0 0.0
        %1329 = vmatpush.xpose.msra.mxu0 0.0
        %1330 = vmatpush.xpose.msra.mxu0 0.0
        %1331 = vmatpush.xpose.msra.mxu0 0.0
        %1332 = vmatpush.xpose.msra.mxu0 0.0
        %1333 = vmatpush.xpose.msra.mxu0 %v1203
        %1334 = vmatpush.xpose.msra.mxu0 %v1183
        %1335 = vmatpush.xpose.msra.mxu0 %v1163
        %1336 = vmatpush.xpose.msra.mxu0 %v1143
        %1337 = vmatmul.f32.gmra.mxu0 %v1243
        %v1338 = vpop.f32.mrf.mxu0
        %v1339 = vadd.f32 %v1319, %v1338
        %1340 = vdwg.mxu0
        %1341 = vmatpush.xpose.msra.mxu0 0.0
        %1342 = vmatpush.xpose.msra.mxu0 0.0
        %1343 = vmatpush.xpose.msra.mxu0 0.0
        %1344 = vmatpush.xpose.msra.mxu0 0.0
        %1345 = vmatpush.xpose.msra.mxu0 0.0
        %1346 = vmatpush.xpose.msra.mxu0 0.0
        %1347 = vmatpush.xpose.msra.mxu0 0.0
        %1348 = vmatpush.xpose.msra.mxu0 0.0
        %1349 = vmatpush.xpose.msra.mxu0 0.0
        %1350 = vmatpush.xpose.msra.mxu0 0.0
        %1351 = vmatpush.xpose.msra.mxu0 0.0
        %1352 = vmatpush.xpose.msra.mxu0 0.0
        %1353 = vmatpush.xpose.msra.mxu0 %v1204
        %1354 = vmatpush.xpose.msra.mxu0 %v1184
        %1355 = vmatpush.xpose.msra.mxu0 %v1164
        %1356 = vmatpush.xpose.msra.mxu0 %v1144
        %1357 = vmatmul.f32.gmra.mxu0 %v1244
        %v1358 = vpop.f32.mrf.mxu0
        %v1359 = vadd.f32 %v1339, %v1358
        %1360 = vdwg.mxu0
        %1361 = vmatpush.xpose.msra.mxu0 0.0
        %1362 = vmatpush.xpose.msra.mxu0 0.0
        %1363 = vmatpush.xpose.msra.mxu0 0.0
        %1364 = vmatpush.xpose.msra.mxu0 0.0
        %1365 = vmatpush.xpose.msra.mxu0 0.0
        %1366 = vmatpush.xpose.msra.mxu0 0.0
        %1367 = vmatpush.xpose.msra.mxu0 0.0
        %1368 = vmatpush.xpose.msra.mxu0 0.0
        %1369 = vmatpush.xpose.msra.mxu0 0.0
        %1370 = vmatpush.xpose.msra.mxu0 0.0
        %1371 = vmatpush.xpose.msra.mxu0 0.0
        %1372 = vmatpush.xpose.msra.mxu0 0.0
        %1373 = vmatpush.xpose.msra.mxu0 %v1205
        %1374 = vmatpush.xpose.msra.mxu0 %v1185
        %1375 = vmatpush.xpose.msra.mxu0 %v1165
        %1376 = vmatpush.xpose.msra.mxu0 %v1145
        %1377 = vmatmul.f32.gmra.mxu0 %v1245
        %v1378 = vpop.f32.mrf.mxu0
        %v1379 = vadd.f32 %v1359, %v1378
        %1380 = vdwg.mxu0
        %1381 = vmatpush.xpose.msra.mxu0 0.0
        %1382 = vmatpush.xpose.msra.mxu0 0.0
        %1383 = vmatpush.xpose.msra.mxu0 0.0
        %1384 = vmatpush.xpose.msra.mxu0 0.0
        %1385 = vmatpush.xpose.msra.mxu0 0.0
        %1386 = vmatpush.xpose.msra.mxu0 0.0
        %1387 = vmatpush.xpose.msra.mxu0 0.0
        %1388 = vmatpush.xpose.msra.mxu0 0.0
        %1389 = vmatpush.xpose.msra.mxu0 0.0
        %1390 = vmatpush.xpose.msra.mxu0 0.0
        %1391 = vmatpush.xpose.msra.mxu0 0.0
        %1392 = vmatpush.xpose.msra.mxu0 0.0
        %1393 = vmatpush.xpose.msra.mxu0 %v1206
        %1394 = vmatpush.xpose.msra.mxu0 %v1186
        %1395 = vmatpush.xpose.msra.mxu0 %v1166
        %1396 = vmatpush.xpose.msra.mxu0 %v1146
        %1397 = vmatmul.f32.gmra.mxu0 %v1246
        %v1398 = vpop.f32.mrf.mxu0
        %v1399 = vadd.f32 %v1379, %v1398
        %1400 = vdwg.mxu0
        %1401 = vmatpush.xpose.msra.mxu0 0.0
        %1402 = vmatpush.xpose.msra.mxu0 0.0
        %1403 = vmatpush.xpose.msra.mxu0 0.0
        %1404 = vmatpush.xpose.msra.mxu0 0.0
        %1405 = vmatpush.xpose.msra.mxu0 0.0
        %1406 = vmatpush.xpose.msra.mxu0 0.0
        %1407 = vmatpush.xpose.msra.mxu0 0.0
        %1408 = vmatpush.xpose.msra.mxu0 0.0
        %1409 = vmatpush.xpose.msra.mxu0 0.0
        %1410 = vmatpush.xpose.msra.mxu0 0.0
        %1411 = vmatpush.xpose.msra.mxu0 0.0
        %1412 = vmatpush.xpose.msra.mxu0 0.0
        %1413 = vmatpush.xpose.msra.mxu0 %v1207
        %1414 = vmatpush.xpose.msra.mxu0 %v1187
        %1415 = vmatpush.xpose.msra.mxu0 %v1167
        %1416 = vmatpush.xpose.msra.mxu0 %v1147
        %1417 = vmatmul.f32.gmra.mxu0 %v1247
        %v1418 = vpop.f32.mrf.mxu0
        %v1419 = vadd.f32 %v1399, %v1418
        %1420 = vdwg.mxu0
        %1421 = vmatpush.xpose.msra.mxu0 0.0
        %1422 = vmatpush.xpose.msra.mxu0 0.0
        %1423 = vmatpush.xpose.msra.mxu0 0.0
        %1424 = vmatpush.xpose.msra.mxu0 0.0
        %1425 = vmatpush.xpose.msra.mxu0 0.0
        %1426 = vmatpush.xpose.msra.mxu0 0.0
        %1427 = vmatpush.xpose.msra.mxu0 0.0
        %1428 = vmatpush.xpose.msra.mxu0 0.0
        %1429 = vmatpush.xpose.msra.mxu0 0.0
        %1430 = vmatpush.xpose.msra.mxu0 0.0
        %1431 = vmatpush.xpose.msra.mxu0 0.0
        %1432 = vmatpush.xpose.msra.mxu0 0.0
        %1433 = vmatpush.xpose.msra.mxu0 %v1208
        %1434 = vmatpush.xpose.msra.mxu0 %v1188
        %1435 = vmatpush.xpose.msra.mxu0 %v1168
        %1436 = vmatpush.xpose.msra.mxu0 %v1148
        %1437 = vmatmul.f32.gmra.mxu0 %v1248
        %v1438 = vpop.f32.mrf.mxu0
        %v1439 = vadd.f32 %v1419, %v1438
        %1440 = vdwg.mxu0
        %1441 = vmatpush.xpose.msra.mxu0 0.0
        %1442 = vmatpush.xpose.msra.mxu0 0.0
        %1443 = vmatpush.xpose.msra.mxu0 0.0
        %1444 = vmatpush.xpose.msra.mxu0 0.0
        %1445 = vmatpush.xpose.msra.mxu0 0.0
        %1446 = vmatpush.xpose.msra.mxu0 0.0
        %1447 = vmatpush.xpose.msra.mxu0 0.0
        %1448 = vmatpush.xpose.msra.mxu0 0.0
        %1449 = vmatpush.xpose.msra.mxu0 0.0
        %1450 = vmatpush.xpose.msra.mxu0 0.0
        %1451 = vmatpush.xpose.msra.mxu0 0.0
        %1452 = vmatpush.xpose.msra.mxu0 0.0
        %1453 = vmatpush.xpose.msra.mxu0 %v1209
        %1454 = vmatpush.xpose.msra.mxu0 %v1189
        %1455 = vmatpush.xpose.msra.mxu0 %v1169
        %1456 = vmatpush.xpose.msra.mxu0 %v1149
        %1457 = vmatmul.f32.gmra.mxu0 %v1249
        %v1458 = vpop.f32.mrf.mxu0
        %v1459 = vadd.f32 %v1439, %v1458
        %1460 = vdwg.mxu0
        %1461 = vmatpush.xpose.msra.mxu0 0.0
        %1462 = vmatpush.xpose.msra.mxu0 0.0
        %1463 = vmatpush.xpose.msra.mxu0 0.0
        %1464 = vmatpush.xpose.msra.mxu0 0.0
        %1465 = vmatpush.xpose.msra.mxu0 0.0
        %1466 = vmatpush.xpose.msra.mxu0 0.0
        %1467 = vmatpush.xpose.msra.mxu0 0.0
        %1468 = vmatpush.xpose.msra.mxu0 0.0
        %1469 = vmatpush.xpose.msra.mxu0 0.0
        %1470 = vmatpush.xpose.msra.mxu0 0.0
        %1471 = vmatpush.xpose.msra.mxu0 0.0
        %1472 = vmatpush.xpose.msra.mxu0 0.0
        %1473 = vmatpush.xpose.msra.mxu0 %v1210
        %1474 = vmatpush.xpose.msra.mxu0 %v1190
        %1475 = vmatpush.xpose.msra.mxu0 %v1170
        %1476 = vmatpush.xpose.msra.mxu0 %v1150
        %1477 = vmatmul.f32.gmra.mxu0 %v1250
        %v1478 = vpop.f32.mrf.mxu0
        %v1479 = vadd.f32 %v1459, %v1478
        %1480 = vdwg.mxu0
        %1481 = vmatpush.xpose.msra.mxu0 0.0
        %1482 = vmatpush.xpose.msra.mxu0 0.0
        %1483 = vmatpush.xpose.msra.mxu0 0.0
        %1484 = vmatpush.xpose.msra.mxu0 0.0
        %1485 = vmatpush.xpose.msra.mxu0 0.0
        %1486 = vmatpush.xpose.msra.mxu0 0.0
        %1487 = vmatpush.xpose.msra.mxu0 0.0
        %1488 = vmatpush.xpose.msra.mxu0 0.0
        %1489 = vmatpush.xpose.msra.mxu0 0.0
        %1490 = vmatpush.xpose.msra.mxu0 0.0
        %1491 = vmatpush.xpose.msra.mxu0 0.0
        %1492 = vmatpush.xpose.msra.mxu0 0.0
        %1493 = vmatpush.xpose.msra.mxu0 %v1211
        %1494 = vmatpush.xpose.msra.mxu0 %v1191
        %1495 = vmatpush.xpose.msra.mxu0 %v1171
        %1496 = vmatpush.xpose.msra.mxu0 %v1151
        %1497 = vmatmul.f32.gmra.mxu0 %v1251
        %v1498 = vpop.f32.mrf.mxu0
        %v1499 = vadd.f32 %v1479, %v1498
        %1500 = vdwg.mxu0
        %1501 = vmatpush.xpose.msra.mxu0 0.0
        %1502 = vmatpush.xpose.msra.mxu0 0.0
        %1503 = vmatpush.xpose.msra.mxu0 0.0
        %1504 = vmatpush.xpose.msra.mxu0 0.0
        %1505 = vmatpush.xpose.msra.mxu0 0.0
        %1506 = vmatpush.xpose.msra.mxu0 0.0
        %1507 = vmatpush.xpose.msra.mxu0 0.0
        %1508 = vmatpush.xpose.msra.mxu0 0.0
        %1509 = vmatpush.xpose.msra.mxu0 0.0
        %1510 = vmatpush.xpose.msra.mxu0 0.0
        %1511 = vmatpush.xpose.msra.mxu0 0.0
        %1512 = vmatpush.xpose.msra.mxu0 0.0
        %1513 = vmatpush.xpose.msra.mxu0 %v1212
        %1514 = vmatpush.xpose.msra.mxu0 %v1192
        %1515 = vmatpush.xpose.msra.mxu0 %v1172
        %1516 = vmatpush.xpose.msra.mxu0 %v1152
        %1517 = vmatmul.f32.gmra.mxu0 %v1252
        %v1518 = vpop.f32.mrf.mxu0
        %v1519 = vadd.f32 %v1499, %v1518
        %1520 = vdwg.mxu0
        %1521 = vmatpush.xpose.msra.mxu0 0.0
        %1522 = vmatpush.xpose.msra.mxu0 0.0
        %1523 = vmatpush.xpose.msra.mxu0 0.0
        %1524 = vmatpush.xpose.msra.mxu0 0.0
        %1525 = vmatpush.xpose.msra.mxu0 0.0
        %1526 = vmatpush.xpose.msra.mxu0 0.0
        %1527 = vmatpush.xpose.msra.mxu0 0.0
        %1528 = vmatpush.xpose.msra.mxu0 0.0
        %1529 = vmatpush.xpose.msra.mxu0 0.0
        %1530 = vmatpush.xpose.msra.mxu0 0.0
        %1531 = vmatpush.xpose.msra.mxu0 0.0
        %1532 = vmatpush.xpose.msra.mxu0 0.0
        %1533 = vmatpush.xpose.msra.mxu0 %v1213
        %1534 = vmatpush.xpose.msra.mxu0 %v1193
        %1535 = vmatpush.xpose.msra.mxu0 %v1173
        %1536 = vmatpush.xpose.msra.mxu0 %v1153
        %1537 = vmatmul.f32.gmra.mxu0 %v1253
        %v1538 = vpop.f32.mrf.mxu0
        %v1539 = vadd.f32 %v1519, %v1538
        %1540 = vdwg.mxu0
        %1541 = vmatpush.xpose.msra.mxu0 0.0
        %1542 = vmatpush.xpose.msra.mxu0 0.0
        %1543 = vmatpush.xpose.msra.mxu0 0.0
        %1544 = vmatpush.xpose.msra.mxu0 0.0
        %1545 = vmatpush.xpose.msra.mxu0 0.0
        %1546 = vmatpush.xpose.msra.mxu0 0.0
        %1547 = vmatpush.xpose.msra.mxu0 0.0
        %1548 = vmatpush.xpose.msra.mxu0 0.0
        %1549 = vmatpush.xpose.msra.mxu0 0.0
        %1550 = vmatpush.xpose.msra.mxu0 0.0
        %1551 = vmatpush.xpose.msra.mxu0 0.0
        %1552 = vmatpush.xpose.msra.mxu0 0.0
        %1553 = vmatpush.xpose.msra.mxu0 %v1214
        %1554 = vmatpush.xpose.msra.mxu0 %v1194
        %1555 = vmatpush.xpose.msra.mxu0 %v1174
        %1556 = vmatpush.xpose.msra.mxu0 %v1154
        %1557 = vmatmul.f32.gmra.mxu0 %v1254
        %v1558 = vpop.f32.mrf.mxu0
        %v1559 = vadd.f32 %v1539, %v1558
        %1560 = vdwg.mxu0
        %1561 = vmatpush.xpose.msra.mxu0 0.0
        %1562 = vmatpush.xpose.msra.mxu0 0.0
        %1563 = vmatpush.xpose.msra.mxu0 0.0
        %1564 = vmatpush.xpose.msra.mxu0 0.0
        %1565 = vmatpush.xpose.msra.mxu0 0.0
        %1566 = vmatpush.xpose.msra.mxu0 0.0
        %1567 = vmatpush.xpose.msra.mxu0 0.0
        %1568 = vmatpush.xpose.msra.mxu0 0.0
        %1569 = vmatpush.xpose.msra.mxu0 0.0
        %1570 = vmatpush.xpose.msra.mxu0 0.0
        %1571 = vmatpush.xpose.msra.mxu0 0.0
        %1572 = vmatpush.xpose.msra.mxu0 0.0
        %1573 = vmatpush.xpose.msra.mxu0 %v1215
        %1574 = vmatpush.xpose.msra.mxu0 %v1195
        %1575 = vmatpush.xpose.msra.mxu0 %v1175
        %1576 = vmatpush.xpose.msra.mxu0 %v1155
        %1577 = vmatmul.f32.gmra.mxu0 %v1255
        %v1578 = vpop.f32.mrf.mxu0
        %v1579 = vadd.f32 %v1559, %v1578
        %1580 = vdwg.mxu0
        %1581 = vmatpush.xpose.msra.mxu0 0.0
        %1582 = vmatpush.xpose.msra.mxu0 0.0
        %1583 = vmatpush.xpose.msra.mxu0 0.0
        %1584 = vmatpush.xpose.msra.mxu0 0.0
        %1585 = vmatpush.xpose.msra.mxu0 0.0
        %1586 = vmatpush.xpose.msra.mxu0 0.0
        %1587 = vmatpush.xpose.msra.mxu0 0.0
        %1588 = vmatpush.xpose.msra.mxu0 0.0
        %1589 = vmatpush.xpose.msra.mxu0 0.0
        %1590 = vmatpush.xpose.msra.mxu0 0.0
        %1591 = vmatpush.xpose.msra.mxu0 0.0
        %1592 = vmatpush.xpose.msra.mxu0 0.0
        %1593 = vmatpush.xpose.msra.mxu0 %v1216
        %1594 = vmatpush.xpose.msra.mxu0 %v1196
        %1595 = vmatpush.xpose.msra.mxu0 %v1176
        %1596 = vmatpush.xpose.msra.mxu0 %v1156
        %1597 = vmatmul.f32.gmra.mxu0 %v1256
        %v1598 = vpop.f32.mrf.mxu0
        %v1599 = vadd.f32 %v1579, %v1598
        %1600 = vdwg.mxu0
        %1601 = vmatpush.xpose.msra.mxu0 0.0
        %1602 = vmatpush.xpose.msra.mxu0 0.0
        %1603 = vmatpush.xpose.msra.mxu0 0.0
        %1604 = vmatpush.xpose.msra.mxu0 0.0
        %1605 = vmatpush.xpose.msra.mxu0 0.0
        %1606 = vmatpush.xpose.msra.mxu0 0.0
        %1607 = vmatpush.xpose.msra.mxu0 0.0
        %1608 = vmatpush.xpose.msra.mxu0 0.0
        %1609 = vmatpush.xpose.msra.mxu0 0.0
        %1610 = vmatpush.xpose.msra.mxu0 0.0
        %1611 = vmatpush.xpose.msra.mxu0 0.0
        %1612 = vmatpush.xpose.msra.mxu0 0.0
        %1613 = vmatpush.xpose.msra.mxu0 %v1217
        %1614 = vmatpush.xpose.msra.mxu0 %v1197
        %1615 = vmatpush.xpose.msra.mxu0 %v1177
        %1616 = vmatpush.xpose.msra.mxu0 %v1157
        %1617 = vmatmul.f32.gmra.mxu0 %v1257
        %v1618 = vpop.f32.mrf.mxu0
        %v1619 = vadd.f32 %v1599, %v1618
        %1620 = vdwg.mxu0
        %1621 = vmatpush.xpose.msra.mxu0 0.0
        %1622 = vmatpush.xpose.msra.mxu0 0.0
        %1623 = vmatpush.xpose.msra.mxu0 0.0
        %1624 = vmatpush.xpose.msra.mxu0 0.0
        %1625 = vmatpush.xpose.msra.mxu0 0.0
        %1626 = vmatpush.xpose.msra.mxu0 0.0
        %1627 = vmatpush.xpose.msra.mxu0 0.0
        %1628 = vmatpush.xpose.msra.mxu0 0.0
        %1629 = vmatpush.xpose.msra.mxu0 0.0
        %1630 = vmatpush.xpose.msra.mxu0 0.0
        %1631 = vmatpush.xpose.msra.mxu0 0.0
        %1632 = vmatpush.xpose.msra.mxu0 0.0
        %1633 = vmatpush.xpose.msra.mxu0 %v1218
        %1634 = vmatpush.xpose.msra.mxu0 %v1198
        %1635 = vmatpush.xpose.msra.mxu0 %v1178
        %1636 = vmatpush.xpose.msra.mxu0 %v1158
        %1637 = vmatmul.f32.gmra.mxu0 %v1258
        %v1638 = vpop.f32.mrf.mxu0
        %v1639 = vadd.f32 %v1619, %v1638
        %1640 = vdwg.mxu0
        %1641 = vmatpush.xpose.msra.mxu0 0.0
        %1642 = vmatpush.xpose.msra.mxu0 0.0
        %1643 = vmatpush.xpose.msra.mxu0 0.0
        %1644 = vmatpush.xpose.msra.mxu0 0.0
        %1645 = vmatpush.xpose.msra.mxu0 0.0
        %1646 = vmatpush.xpose.msra.mxu0 0.0
        %1647 = vmatpush.xpose.msra.mxu0 0.0
        %1648 = vmatpush.xpose.msra.mxu0 0.0
        %1649 = vmatpush.xpose.msra.mxu0 0.0
        %1650 = vmatpush.xpose.msra.mxu0 0.0
        %1651 = vmatpush.xpose.msra.mxu0 0.0
        %1652 = vmatpush.xpose.msra.mxu0 0.0
        %1653 = vmatpush.xpose.msra.mxu0 %v1219
        %1654 = vmatpush.xpose.msra.mxu0 %v1199
        %1655 = vmatpush.xpose.msra.mxu0 %v1179
        %1656 = vmatpush.xpose.msra.mxu0 %v1159
        %1657 = vmatmul.f32.gmra.mxu0 %v1259
        %v1658 = vpop.f32.mrf.mxu0
        %v1659 = vadd.f32 %v1639, %v1658
        %1660 = vdwg.mxu0
        %1661 = vmatpush.xpose.msra.mxu0 0.0
        %1662 = vmatpush.xpose.msra.mxu0 0.0
        %1663 = vmatpush.xpose.msra.mxu0 0.0
        %1664 = vmatpush.xpose.msra.mxu0 0.0
        %1665 = vmatpush.xpose.msra.mxu0 0.0
        %1666 = vmatpush.xpose.msra.mxu0 0.0
        %1667 = vmatpush.xpose.msra.mxu0 0.0
        %1668 = vmatpush.xpose.msra.mxu0 0.0
        %1669 = vmatpush.xpose.msra.mxu0 0.0
        %1670 = vmatpush.xpose.msra.mxu0 0.0
        %1671 = vmatpush.xpose.msra.mxu0 0.0
        %1672 = vmatpush.xpose.msra.mxu0 0.0
        %1673 = vmatpush.xpose.msra.mxu0 %v1220
        %1674 = vmatpush.xpose.msra.mxu0 %v1200
        %1675 = vmatpush.xpose.msra.mxu0 %v1180
        %1676 = vmatpush.xpose.msra.mxu0 %v1160
        %1677 = vmatmul.f32.gmra.mxu0 %v1260
        %v1678 = vpop.f32.mrf.mxu0
        %v1679 = vadd.f32 %v1659, %v1678
        %1680 = vdwg.mxu0
        %1681 = vmatpush.xpose.msra.mxu0 0.0
        %1682 = vmatpush.xpose.msra.mxu0 0.0
        %1683 = vmatpush.xpose.msra.mxu0 0.0
        %1684 = vmatpush.xpose.msra.mxu0 0.0
        %1685 = vmatpush.xpose.msra.mxu0 0.0
        %1686 = vmatpush.xpose.msra.mxu0 0.0
        %1687 = vmatpush.xpose.msra.mxu0 0.0
        %1688 = vmatpush.xpose.msra.mxu0 0.0
        %1689 = vmatpush.xpose.msra.mxu0 0.0
        %1690 = vmatpush.xpose.msra.mxu0 0.0
        %1691 = vmatpush.xpose.msra.mxu0 0.0
        %1692 = vmatpush.xpose.msra.mxu0 0.0
        %1693 = vmatpush.xpose.msra.mxu0 %v1120
        %1694 = vmatpush.xpose.msra.mxu0 %v1100
        %1695 = vmatpush.xpose.msra.mxu0 %v1080
        %1696 = vmatpush.xpose.msra.mxu0 %v1060
        %1697 = vmatmul.f32.gmra.mxu0 %v1040
        %v1698 = vpop.f32.mrf.mxu0
        %v1699 = vadd.f32 %v1679, %v1698
        %1700 = vdwg.mxu0
        %1701 = vmatpush.xpose.msra.mxu0 0.0
        %1702 = vmatpush.xpose.msra.mxu0 0.0
        %1703 = vmatpush.xpose.msra.mxu0 0.0
        %1704 = vmatpush.xpose.msra.mxu0 0.0
        %1705 = vmatpush.xpose.msra.mxu0 0.0
        %1706 = vmatpush.xpose.msra.mxu0 0.0
        %1707 = vmatpush.xpose.msra.mxu0 0.0
        %1708 = vmatpush.xpose.msra.mxu0 0.0
        %1709 = vmatpush.xpose.msra.mxu0 0.0
        %1710 = vmatpush.xpose.msra.mxu0 0.0
        %1711 = vmatpush.xpose.msra.mxu0 0.0
        %1712 = vmatpush.xpose.msra.mxu0 0.0
        %1713 = vmatpush.xpose.msra.mxu0 %v1121
        %1714 = vmatpush.xpose.msra.mxu0 %v1101
        %1715 = vmatpush.xpose.msra.mxu0 %v1081
        %1716 = vmatpush.xpose.msra.mxu0 %v1061
        %1717 = vmatmul.f32.gmra.mxu0 %v1041
        %v1718 = vpop.f32.mrf.mxu0
        %v1719 = vadd.f32 %v1699, %v1718
        %1720 = vdwg.mxu0
        %1721 = vmatpush.xpose.msra.mxu0 0.0
        %1722 = vmatpush.xpose.msra.mxu0 0.0
        %1723 = vmatpush.xpose.msra.mxu0 0.0
        %1724 = vmatpush.xpose.msra.mxu0 0.0
        %1725 = vmatpush.xpose.msra.mxu0 0.0
        %1726 = vmatpush.xpose.msra.mxu0 0.0
        %1727 = vmatpush.xpose.msra.mxu0 0.0
        %1728 = vmatpush.xpose.msra.mxu0 0.0
        %1729 = vmatpush.xpose.msra.mxu0 0.0
        %1730 = vmatpush.xpose.msra.mxu0 0.0
        %1731 = vmatpush.xpose.msra.mxu0 0.0
        %1732 = vmatpush.xpose.msra.mxu0 0.0
        %1733 = vmatpush.xpose.msra.mxu0 %v1122
        %1734 = vmatpush.xpose.msra.mxu0 %v1102
        %1735 = vmatpush.xpose.msra.mxu0 %v1082
        %1736 = vmatpush.xpose.msra.mxu0 %v1062
        %1737 = vmatmul.f32.gmra.mxu0 %v1042
        %v1738 = vpop.f32.mrf.mxu0
        %v1739 = vadd.f32 %v1719, %v1738
        %1740 = vdwg.mxu0
        %1741 = vmatpush.xpose.msra.mxu0 0.0
        %1742 = vmatpush.xpose.msra.mxu0 0.0
        %1743 = vmatpush.xpose.msra.mxu0 0.0
        %1744 = vmatpush.xpose.msra.mxu0 0.0
        %1745 = vmatpush.xpose.msra.mxu0 0.0
        %1746 = vmatpush.xpose.msra.mxu0 0.0
        %1747 = vmatpush.xpose.msra.mxu0 0.0
        %1748 = vmatpush.xpose.msra.mxu0 0.0
        %1749 = vmatpush.xpose.msra.mxu0 0.0
        %1750 = vmatpush.xpose.msra.mxu0 0.0
        %1751 = vmatpush.xpose.msra.mxu0 0.0
        %1752 = vmatpush.xpose.msra.mxu0 0.0
        %1753 = vmatpush.xpose.msra.mxu0 %v1123
        %1754 = vmatpush.xpose.msra.mxu0 %v1103
        %1755 = vmatpush.xpose.msra.mxu0 %v1083
        %1756 = vmatpush.xpose.msra.mxu0 %v1063
        %1757 = vmatmul.f32.gmra.mxu0 %v1043
        %v1758 = vpop.f32.mrf.mxu0
        %v1759 = vadd.f32 %v1739, %v1758
        %1760 = vdwg.mxu0
        %1761 = vmatpush.xpose.msra.mxu0 0.0
        %1762 = vmatpush.xpose.msra.mxu0 0.0
        %1763 = vmatpush.xpose.msra.mxu0 0.0
        %1764 = vmatpush.xpose.msra.mxu0 0.0
        %1765 = vmatpush.xpose.msra.mxu0 0.0
        %1766 = vmatpush.xpose.msra.mxu0 0.0
        %1767 = vmatpush.xpose.msra.mxu0 0.0
        %1768 = vmatpush.xpose.msra.mxu0 0.0
        %1769 = vmatpush.xpose.msra.mxu0 0.0
        %1770 = vmatpush.xpose.msra.mxu0 0.0
        %1771 = vmatpush.xpose.msra.mxu0 0.0
        %1772 = vmatpush.xpose.msra.mxu0 0.0
        %1773 = vmatpush.xpose.msra.mxu0 %v1124
        %1774 = vmatpush.xpose.msra.mxu0 %v1104
        %1775 = vmatpush.xpose.msra.mxu0 %v1084
        %1776 = vmatpush.xpose.msra.mxu0 %v1064
        %1777 = vmatmul.f32.gmra.mxu0 %v1044
        %v1778 = vpop.f32.mrf.mxu0
        %v1779 = vadd.f32 %v1759, %v1778
        %1780 = vdwg.mxu0
        %1781 = vmatpush.xpose.msra.mxu0 0.0
        %1782 = vmatpush.xpose.msra.mxu0 0.0
        %1783 = vmatpush.xpose.msra.mxu0 0.0
        %1784 = vmatpush.xpose.msra.mxu0 0.0
        %1785 = vmatpush.xpose.msra.mxu0 0.0
        %1786 = vmatpush.xpose.msra.mxu0 0.0
        %1787 = vmatpush.xpose.msra.mxu0 0.0
        %1788 = vmatpush.xpose.msra.mxu0 0.0
        %1789 = vmatpush.xpose.msra.mxu0 0.0
        %1790 = vmatpush.xpose.msra.mxu0 0.0
        %1791 = vmatpush.xpose.msra.mxu0 0.0
        %1792 = vmatpush.xpose.msra.mxu0 0.0
        %1793 = vmatpush.xpose.msra.mxu0 %v1125
        %1794 = vmatpush.xpose.msra.mxu0 %v1105
        %1795 = vmatpush.xpose.msra.mxu0 %v1085
        %1796 = vmatpush.xpose.msra.mxu0 %v1065
        %1797 = vmatmul.f32.gmra.mxu0 %v1045
        %v1798 = vpop.f32.mrf.mxu0
        %v1799 = vadd.f32 %v1779, %v1798
        %1800 = vdwg.mxu0
        %1801 = vmatpush.xpose.msra.mxu0 0.0
        %1802 = vmatpush.xpose.msra.mxu0 0.0
        %1803 = vmatpush.xpose.msra.mxu0 0.0
        %1804 = vmatpush.xpose.msra.mxu0 0.0
        %1805 = vmatpush.xpose.msra.mxu0 0.0
        %1806 = vmatpush.xpose.msra.mxu0 0.0
        %1807 = vmatpush.xpose.msra.mxu0 0.0
        %1808 = vmatpush.xpose.msra.mxu0 0.0
        %1809 = vmatpush.xpose.msra.mxu0 0.0
        %1810 = vmatpush.xpose.msra.mxu0 0.0
        %1811 = vmatpush.xpose.msra.mxu0 0.0
        %1812 = vmatpush.xpose.msra.mxu0 0.0
        %1813 = vmatpush.xpose.msra.mxu0 %v1126
        %1814 = vmatpush.xpose.msra.mxu0 %v1106
        %1815 = vmatpush.xpose.msra.mxu0 %v1086
        %1816 = vmatpush.xpose.msra.mxu0 %v1066
        %1817 = vmatmul.f32.gmra.mxu0 %v1046
        %v1818 = vpop.f32.mrf.mxu0
        %v1819 = vadd.f32 %v1799, %v1818
        %1820 = vdwg.mxu0
        %1821 = vmatpush.xpose.msra.mxu0 0.0
        %1822 = vmatpush.xpose.msra.mxu0 0.0
        %1823 = vmatpush.xpose.msra.mxu0 0.0
        %1824 = vmatpush.xpose.msra.mxu0 0.0
        %1825 = vmatpush.xpose.msra.mxu0 0.0
        %1826 = vmatpush.xpose.msra.mxu0 0.0
        %1827 = vmatpush.xpose.msra.mxu0 0.0
        %1828 = vmatpush.xpose.msra.mxu0 0.0
        %1829 = vmatpush.xpose.msra.mxu0 0.0
        %1830 = vmatpush.xpose.msra.mxu0 0.0
        %1831 = vmatpush.xpose.msra.mxu0 0.0
        %1832 = vmatpush.xpose.msra.mxu0 0.0
        %1833 = vmatpush.xpose.msra.mxu0 %v1127
        %1834 = vmatpush.xpose.msra.mxu0 %v1107
        %1835 = vmatpush.xpose.msra.mxu0 %v1087
        %1836 = vmatpush.xpose.msra.mxu0 %v1067
        %1837 = vmatmul.f32.gmra.mxu0 %v1047
        %v1838 = vpop.f32.mrf.mxu0
        %v1839 = vadd.f32 %v1819, %v1838
        %1840 = vdwg.mxu0
        %1841 = vmatpush.xpose.msra.mxu0 0.0
        %1842 = vmatpush.xpose.msra.mxu0 0.0
        %1843 = vmatpush.xpose.msra.mxu0 0.0
        %1844 = vmatpush.xpose.msra.mxu0 0.0
        %1845 = vmatpush.xpose.msra.mxu0 0.0
        %1846 = vmatpush.xpose.msra.mxu0 0.0
        %1847 = vmatpush.xpose.msra.mxu0 0.0
        %1848 = vmatpush.xpose.msra.mxu0 0.0
        %1849 = vmatpush.xpose.msra.mxu0 0.0
        %1850 = vmatpush.xpose.msra.mxu0 0.0
        %1851 = vmatpush.xpose.msra.mxu0 0.0
        %1852 = vmatpush.xpose.msra.mxu0 0.0
        %1853 = vmatpush.xpose.msra.mxu0 %v1128
        %1854 = vmatpush.xpose.msra.mxu0 %v1108
        %1855 = vmatpush.xpose.msra.mxu0 %v1088
        %1856 = vmatpush.xpose.msra.mxu0 %v1068
        %1857 = vmatmul.f32.gmra.mxu0 %v1048
        %v1858 = vpop.f32.mrf.mxu0
        %v1859 = vadd.f32 %v1839, %v1858
        %1860 = vdwg.mxu0
        %1861 = vmatpush.xpose.msra.mxu0 0.0
        %1862 = vmatpush.xpose.msra.mxu0 0.0
        %1863 = vmatpush.xpose.msra.mxu0 0.0
        %1864 = vmatpush.xpose.msra.mxu0 0.0
        %1865 = vmatpush.xpose.msra.mxu0 0.0
        %1866 = vmatpush.xpose.msra.mxu0 0.0
        %1867 = vmatpush.xpose.msra.mxu0 0.0
        %1868 = vmatpush.xpose.msra.mxu0 0.0
        %1869 = vmatpush.xpose.msra.mxu0 0.0
        %1870 = vmatpush.xpose.msra.mxu0 0.0
        %1871 = vmatpush.xpose.msra.mxu0 0.0
        %1872 = vmatpush.xpose.msra.mxu0 0.0
        %1873 = vmatpush.xpose.msra.mxu0 %v1129
        %1874 = vmatpush.xpose.msra.mxu0 %v1109
        %1875 = vmatpush.xpose.msra.mxu0 %v1089
        %1876 = vmatpush.xpose.msra.mxu0 %v1069
        %1877 = vmatmul.f32.gmra.mxu0 %v1049
        %v1878 = vpop.f32.mrf.mxu0
        %v1879 = vadd.f32 %v1859, %v1878
        %1880 = vdwg.mxu0
        %1881 = vmatpush.xpose.msra.mxu0 0.0
        %1882 = vmatpush.xpose.msra.mxu0 0.0
        %1883 = vmatpush.xpose.msra.mxu0 0.0
        %1884 = vmatpush.xpose.msra.mxu0 0.0
        %1885 = vmatpush.xpose.msra.mxu0 0.0
        %1886 = vmatpush.xpose.msra.mxu0 0.0
        %1887 = vmatpush.xpose.msra.mxu0 0.0
        %1888 = vmatpush.xpose.msra.mxu0 0.0
        %1889 = vmatpush.xpose.msra.mxu0 0.0
        %1890 = vmatpush.xpose.msra.mxu0 0.0
        %1891 = vmatpush.xpose.msra.mxu0 0.0
        %1892 = vmatpush.xpose.msra.mxu0 0.0
        %1893 = vmatpush.xpose.msra.mxu0 %v1130
        %1894 = vmatpush.xpose.msra.mxu0 %v1110
        %1895 = vmatpush.xpose.msra.mxu0 %v1090
        %1896 = vmatpush.xpose.msra.mxu0 %v1070
        %1897 = vmatmul.f32.gmra.mxu0 %v1050
        %v1898 = vpop.f32.mrf.mxu0
        %v1899 = vadd.f32 %v1879, %v1898
        %1900 = vdwg.mxu0
        %1901 = vmatpush.xpose.msra.mxu0 0.0
        %1902 = vmatpush.xpose.msra.mxu0 0.0
        %1903 = vmatpush.xpose.msra.mxu0 0.0
        %1904 = vmatpush.xpose.msra.mxu0 0.0
        %1905 = vmatpush.xpose.msra.mxu0 0.0
        %1906 = vmatpush.xpose.msra.mxu0 0.0
        %1907 = vmatpush.xpose.msra.mxu0 0.0
        %1908 = vmatpush.xpose.msra.mxu0 0.0
        %1909 = vmatpush.xpose.msra.mxu0 0.0
        %1910 = vmatpush.xpose.msra.mxu0 0.0
        %1911 = vmatpush.xpose.msra.mxu0 0.0
        %1912 = vmatpush.xpose.msra.mxu0 0.0
        %1913 = vmatpush.xpose.msra.mxu0 %v1131
        %1914 = vmatpush.xpose.msra.mxu0 %v1111
        %1915 = vmatpush.xpose.msra.mxu0 %v1091
        %1916 = vmatpush.xpose.msra.mxu0 %v1071
        %1917 = vmatmul.f32.gmra.mxu0 %v1051
        %v1918 = vpop.f32.mrf.mxu0
        %v1919 = vadd.f32 %v1899, %v1918
        %1920 = vdwg.mxu0
        %1921 = vmatpush.xpose.msra.mxu0 0.0
        %1922 = vmatpush.xpose.msra.mxu0 0.0
        %1923 = vmatpush.xpose.msra.mxu0 0.0
        %1924 = vmatpush.xpose.msra.mxu0 0.0
        %1925 = vmatpush.xpose.msra.mxu0 0.0
        %1926 = vmatpush.xpose.msra.mxu0 0.0
        %1927 = vmatpush.xpose.msra.mxu0 0.0
        %1928 = vmatpush.xpose.msra.mxu0 0.0
        %1929 = vmatpush.xpose.msra.mxu0 0.0
        %1930 = vmatpush.xpose.msra.mxu0 0.0
        %1931 = vmatpush.xpose.msra.mxu0 0.0
        %1932 = vmatpush.xpose.msra.mxu0 0.0
        %1933 = vmatpush.xpose.msra.mxu0 %v1132
        %1934 = vmatpush.xpose.msra.mxu0 %v1112
        %1935 = vmatpush.xpose.msra.mxu0 %v1092
        %1936 = vmatpush.xpose.msra.mxu0 %v1072
        %1937 = vmatmul.f32.gmra.mxu0 %v1052
        %v1938 = vpop.f32.mrf.mxu0
        %v1939 = vadd.f32 %v1919, %v1938
        %1940 = vdwg.mxu0
        %1941 = vmatpush.xpose.msra.mxu0 0.0
        %1942 = vmatpush.xpose.msra.mxu0 0.0
        %1943 = vmatpush.xpose.msra.mxu0 0.0
        %1944 = vmatpush.xpose.msra.mxu0 0.0
        %1945 = vmatpush.xpose.msra.mxu0 0.0
        %1946 = vmatpush.xpose.msra.mxu0 0.0
        %1947 = vmatpush.xpose.msra.mxu0 0.0
        %1948 = vmatpush.xpose.msra.mxu0 0.0
        %1949 = vmatpush.xpose.msra.mxu0 0.0
        %1950 = vmatpush.xpose.msra.mxu0 0.0
        %1951 = vmatpush.xpose.msra.mxu0 0.0
        %1952 = vmatpush.xpose.msra.mxu0 0.0
        %1953 = vmatpush.xpose.msra.mxu0 %v1133
        %1954 = vmatpush.xpose.msra.mxu0 %v1113
        %1955 = vmatpush.xpose.msra.mxu0 %v1093
        %1956 = vmatpush.xpose.msra.mxu0 %v1073
        %1957 = vmatmul.f32.gmra.mxu0 %v1053
        %v1958 = vpop.f32.mrf.mxu0
        %v1959 = vadd.f32 %v1939, %v1958
        %1960 = vdwg.mxu0
        %1961 = vmatpush.xpose.msra.mxu0 0.0
        %1962 = vmatpush.xpose.msra.mxu0 0.0
        %1963 = vmatpush.xpose.msra.mxu0 0.0
        %1964 = vmatpush.xpose.msra.mxu0 0.0
        %1965 = vmatpush.xpose.msra.mxu0 0.0
        %1966 = vmatpush.xpose.msra.mxu0 0.0
        %1967 = vmatpush.xpose.msra.mxu0 0.0
        %1968 = vmatpush.xpose.msra.mxu0 0.0
        %1969 = vmatpush.xpose.msra.mxu0 0.0
        %1970 = vmatpush.xpose.msra.mxu0 0.0
        %1971 = vmatpush.xpose.msra.mxu0 0.0
        %1972 = vmatpush.xpose.msra.mxu0 0.0
        %1973 = vmatpush.xpose.msra.mxu0 %v1134
        %1974 = vmatpush.xpose.msra.mxu0 %v1114
        %1975 = vmatpush.xpose.msra.mxu0 %v1094
        %1976 = vmatpush.xpose.msra.mxu0 %v1074
        %1977 = vmatmul.f32.gmra.mxu0 %v1054
        %v1978 = vpop.f32.mrf.mxu0
        %v1979 = vadd.f32 %v1959, %v1978
        %1980 = vdwg.mxu0
        %1981 = vmatpush.xpose.msra.mxu0 0.0
        %1982 = vmatpush.xpose.msra.mxu0 0.0
        %1983 = vmatpush.xpose.msra.mxu0 0.0
        %1984 = vmatpush.xpose.msra.mxu0 0.0
        %1985 = vmatpush.xpose.msra.mxu0 0.0
        %1986 = vmatpush.xpose.msra.mxu0 0.0
        %1987 = vmatpush.xpose.msra.mxu0 0.0
        %1988 = vmatpush.xpose.msra.mxu0 0.0
        %1989 = vmatpush.xpose.msra.mxu0 0.0
        %1990 = vmatpush.xpose.msra.mxu0 0.0
        %1991 = vmatpush.xpose.msra.mxu0 0.0
        %1992 = vmatpush.xpose.msra.mxu0 0.0
        %1993 = vmatpush.xpose.msra.mxu0 %v1135
        %1994 = vmatpush.xpose.msra.mxu0 %v1115
        %1995 = vmatpush.xpose.msra.mxu0 %v1095
        %1996 = vmatpush.xpose.msra.mxu0 %v1075
        %1997 = vmatmul.f32.gmra.mxu0 %v1055
        %v1998 = vpop.f32.mrf.mxu0
        %v1999 = vadd.f32 %v1979, %v1998
        %2000 = vdwg.mxu0
        %2001 = vmatpush.xpose.msra.mxu0 0.0
        %2002 = vmatpush.xpose.msra.mxu0 0.0
        %2003 = vmatpush.xpose.msra.mxu0 0.0
        %2004 = vmatpush.xpose.msra.mxu0 0.0
        %2005 = vmatpush.xpose.msra.mxu0 0.0
        %2006 = vmatpush.xpose.msra.mxu0 0.0
        %2007 = vmatpush.xpose.msra.mxu0 0.0
        %2008 = vmatpush.xpose.msra.mxu0 0.0
        %2009 = vmatpush.xpose.msra.mxu0 0.0
        %2010 = vmatpush.xpose.msra.mxu0 0.0
        %2011 = vmatpush.xpose.msra.mxu0 0.0
        %2012 = vmatpush.xpose.msra.mxu0 0.0
        %2013 = vmatpush.xpose.msra.mxu0 %v1136
        %2014 = vmatpush.xpose.msra.mxu0 %v1116
        %2015 = vmatpush.xpose.msra.mxu0 %v1096
        %2016 = vmatpush.xpose.msra.mxu0 %v1076
        %2017 = vmatmul.f32.gmra.mxu0 %v1056
        %v2018 = vpop.f32.mrf.mxu0
        %v2019 = vadd.f32 %v1999, %v2018
        %2020 = vdwg.mxu0
        %2021 = vmatpush.xpose.msra.mxu0 0.0
        %2022 = vmatpush.xpose.msra.mxu0 0.0
        %2023 = vmatpush.xpose.msra.mxu0 0.0
        %2024 = vmatpush.xpose.msra.mxu0 0.0
        %2025 = vmatpush.xpose.msra.mxu0 0.0
        %2026 = vmatpush.xpose.msra.mxu0 0.0
        %2027 = vmatpush.xpose.msra.mxu0 0.0
        %2028 = vmatpush.xpose.msra.mxu0 0.0
        %2029 = vmatpush.xpose.msra.mxu0 0.0
        %2030 = vmatpush.xpose.msra.mxu0 0.0
        %2031 = vmatpush.xpose.msra.mxu0 0.0
        %2032 = vmatpush.xpose.msra.mxu0 0.0
        %2033 = vmatpush.xpose.msra.mxu0 %v1137
        %2034 = vmatpush.xpose.msra.mxu0 %v1117
        %2035 = vmatpush.xpose.msra.mxu0 %v1097
        %2036 = vmatpush.xpose.msra.mxu0 %v1077
        %2037 = vmatmul.f32.gmra.mxu0 %v1057
        %v2038 = vpop.f32.mrf.mxu0
        %v2039 = vadd.f32 %v2019, %v2038
        %2040 = vdwg.mxu0
        %2041 = vmatpush.xpose.msra.mxu0 0.0
        %2042 = vmatpush.xpose.msra.mxu0 0.0
        %2043 = vmatpush.xpose.msra.mxu0 0.0
        %2044 = vmatpush.xpose.msra.mxu0 0.0
        %2045 = vmatpush.xpose.msra.mxu0 0.0
        %2046 = vmatpush.xpose.msra.mxu0 0.0
        %2047 = vmatpush.xpose.msra.mxu0 0.0
        %2048 = vmatpush.xpose.msra.mxu0 0.0
        %2049 = vmatpush.xpose.msra.mxu0 0.0
        %2050 = vmatpush.xpose.msra.mxu0 0.0
        %2051 = vmatpush.xpose.msra.mxu0 0.0
        %2052 = vmatpush.xpose.msra.mxu0 0.0
        %2053 = vmatpush.xpose.msra.mxu0 %v1138
        %2054 = vmatpush.xpose.msra.mxu0 %v1118
        %2055 = vmatpush.xpose.msra.mxu0 %v1098
        %2056 = vmatpush.xpose.msra.mxu0 %v1078
        %2057 = vmatmul.f32.gmra.mxu0 %v1058
        %v2058 = vpop.f32.mrf.mxu0
        %v2059 = vadd.f32 %v2039, %v2058
        %2060 = vdwg.mxu0
        %2061 = vmatpush.xpose.msra.mxu0 0.0
        %2062 = vmatpush.xpose.msra.mxu0 0.0
        %2063 = vmatpush.xpose.msra.mxu0 0.0
        %2064 = vmatpush.xpose.msra.mxu0 0.0
        %2065 = vmatpush.xpose.msra.mxu0 0.0
        %2066 = vmatpush.xpose.msra.mxu0 0.0
        %2067 = vmatpush.xpose.msra.mxu0 0.0
        %2068 = vmatpush.xpose.msra.mxu0 0.0
        %2069 = vmatpush.xpose.msra.mxu0 0.0
        %2070 = vmatpush.xpose.msra.mxu0 0.0
        %2071 = vmatpush.xpose.msra.mxu0 0.0
        %2072 = vmatpush.xpose.msra.mxu0 0.0
        %2073 = vmatpush.xpose.msra.mxu0 %v1139
        %2074 = vmatpush.xpose.msra.mxu0 %v1119
        %2075 = vmatpush.xpose.msra.mxu0 %v1099
        %2076 = vmatpush.xpose.msra.mxu0 %v1079
        %2077 = vmatmul.f32.gmra.mxu0 %v1059
        %v2078 = vpop.f32.mrf.mxu0
        %v2079 = vadd.f32 %v2059, %v2078
        %2080 = vdwg.mxu0
        %s2081 = scalar_lea.vmem %s3, 1280
        %v2082 = vld [vmem:[%s2081] sm:$0xff]
        %v2083 = vld [vmem:[%s2081 + $0x8] sm:$0xff]
        %v2084 = vld [vmem:[%s2081 + $0x10] sm:$0xff]
        %v2085 = vld [vmem:[%s2081 + $0x18] sm:$0xff]
        %v2086 = vld [vmem:[%s2081 + $0x20] sm:$0xff]
        %v2087 = vld [vmem:[%s2081 + $0x28] sm:$0xff]
        %v2088 = vld [vmem:[%s2081 + $0x30] sm:$0xff]
        %v2089 = vld [vmem:[%s2081 + $0x38] sm:$0xff]
        %v2090 = vld [vmem:[%s2081 + $0x40] sm:$0xff]
        %v2091 = vld [vmem:[%s2081 + $0x48] sm:$0xff]
        %v2092 = vld [vmem:[%s2081 + $0x50] sm:$0xff]
        %v2093 = vld [vmem:[%s2081 + $0x58] sm:$0xff]
        %v2094 = vld [vmem:[%s2081 + $0x60] sm:$0xff]
        %v2095 = vld [vmem:[%s2081 + $0x68] sm:$0xff]
        %v2096 = vld [vmem:[%s2081 + $0x70] sm:$0xff]
        %v2097 = vld [vmem:[%s2081 + $0x78] sm:$0xff]
        %v2098 = vld [vmem:[%s2081 + $0x80] sm:$0xff]
        %v2099 = vld [vmem:[%s2081 + $0x88] sm:$0xff]
        %v2100 = vld [vmem:[%s2081 + $0x90] sm:$0xff]
        %v2101 = vld [vmem:[%s2081 + $0x98] sm:$0xff]
        %v2102 = vld [vmem:[%s2081 + $0xa0] sm:$0xff]
        %v2103 = vld [vmem:[%s2081 + $0xa8] sm:$0xff]
        %v2104 = vld [vmem:[%s2081 + $0xb0] sm:$0xff]
        %v2105 = vld [vmem:[%s2081 + $0xb8] sm:$0xff]
        %v2106 = vld [vmem:[%s2081 + $0xc0] sm:$0xff]
        %v2107 = vld [vmem:[%s2081 + $0xc8] sm:$0xff]
        %v2108 = vld [vmem:[%s2081 + $0xd0] sm:$0xff]
        %v2109 = vld [vmem:[%s2081 + $0xd8] sm:$0xff]
        %v2110 = vld [vmem:[%s2081 + $0xe0] sm:$0xff]
        %v2111 = vld [vmem:[%s2081 + $0xe8] sm:$0xff]
        %v2112 = vld [vmem:[%s2081 + $0xf0] sm:$0xff]
        %v2113 = vld [vmem:[%s2081 + $0xf8] sm:$0xff]
        %v2114 = vld [vmem:[%s2081 + $0x100] sm:$0xff]
        %v2115 = vld [vmem:[%s2081 + $0x108] sm:$0xff]
        %v2116 = vld [vmem:[%s2081 + $0x110] sm:$0xff]
        %v2117 = vld [vmem:[%s2081 + $0x118] sm:$0xff]
        %v2118 = vld [vmem:[%s2081 + $0x120] sm:$0xff]
        %v2119 = vld [vmem:[%s2081 + $0x128] sm:$0xff]
        %v2120 = vld [vmem:[%s2081 + $0x130] sm:$0xff]
        %v2121 = vld [vmem:[%s2081 + $0x138] sm:$0xff]
        %v2122 = vld [vmem:[%s2081 + $0x140] sm:$0xff]
        %v2123 = vld [vmem:[%s2081 + $0x148] sm:$0xff]
        %v2124 = vld [vmem:[%s2081 + $0x150] sm:$0xff]
        %v2125 = vld [vmem:[%s2081 + $0x158] sm:$0xff]
        %v2126 = vld [vmem:[%s2081 + $0x160] sm:$0xff]
        %v2127 = vld [vmem:[%s2081 + $0x168] sm:$0xff]
        %v2128 = vld [vmem:[%s2081 + $0x170] sm:$0xff]
        %v2129 = vld [vmem:[%s2081 + $0x178] sm:$0xff]
        %v2130 = vld [vmem:[%s2081 + $0x180] sm:$0xff]
        %v2131 = vld [vmem:[%s2081 + $0x188] sm:$0xff]
        %v2132 = vld [vmem:[%s2081 + $0x190] sm:$0xff]
        %v2133 = vld [vmem:[%s2081 + $0x198] sm:$0xff]
        %v2134 = vld [vmem:[%s2081 + $0x1a0] sm:$0xff]
        %v2135 = vld [vmem:[%s2081 + $0x1a8] sm:$0xff]
        %v2136 = vld [vmem:[%s2081 + $0x1b0] sm:$0xff]
        %v2137 = vld [vmem:[%s2081 + $0x1b8] sm:$0xff]
        %v2138 = vld [vmem:[%s2081 + $0x1c0] sm:$0xff]
        %v2139 = vld [vmem:[%s2081 + $0x1c8] sm:$0xff]
        %v2140 = vld [vmem:[%s2081 + $0x1d0] sm:$0xff]
        %v2141 = vld [vmem:[%s2081 + $0x1d8] sm:$0xff]
        %v2142 = vld [vmem:[%s2081 + $0x1e0] sm:$0xff]
        %v2143 = vld [vmem:[%s2081 + $0x1e8] sm:$0xff]
        %v2144 = vld [vmem:[%s2081 + $0x1f0] sm:$0xff]
        %v2145 = vld [vmem:[%s2081 + $0x1f8] sm:$0xff]
        %v2146 = vld [vmem:[%s2081 + $0x200] sm:$0xff]
        %v2147 = vld [vmem:[%s2081 + $0x208] sm:$0xff]
        %v2148 = vld [vmem:[%s2081 + $0x210] sm:$0xff]
        %v2149 = vld [vmem:[%s2081 + $0x218] sm:$0xff]
        %v2150 = vld [vmem:[%s2081 + $0x220] sm:$0xff]
        %v2151 = vld [vmem:[%s2081 + $0x228] sm:$0xff]
        %v2152 = vld [vmem:[%s2081 + $0x230] sm:$0xff]
        %v2153 = vld [vmem:[%s2081 + $0x238] sm:$0xff]
        %v2154 = vld [vmem:[%s2081 + $0x240] sm:$0xff]
        %v2155 = vld [vmem:[%s2081 + $0x248] sm:$0xff]
        %v2156 = vld [vmem:[%s2081 + $0x250] sm:$0xff]
        %v2157 = vld [vmem:[%s2081 + $0x258] sm:$0xff]
        %v2158 = vld [vmem:[%s2081 + $0x260] sm:$0xff]
        %v2159 = vld [vmem:[%s2081 + $0x268] sm:$0xff]
        %v2160 = vld [vmem:[%s2081 + $0x270] sm:$0xff]
        %v2161 = vld [vmem:[%s2081 + $0x278] sm:$0xff]
        %v2162 = vrot.slane %v1040, 2
        %v2163 = vrot.slane %v1041, 2
        %v2164 = vrot.slane %v1042, 2
        %v2165 = vrot.slane %v1043, 2
        %v2166 = vrot.slane %v1044, 2
        %v2167 = vrot.slane %v1045, 2
        %v2168 = vrot.slane %v1046, 2
        %v2169 = vrot.slane %v1047, 2
        %v2170 = vrot.slane %v1048, 2
        %v2171 = vrot.slane %v1049, 2
        %v2172 = vrot.slane %v1050, 2
        %v2173 = vrot.slane %v1051, 2
        %v2174 = vrot.slane %v1052, 2
        %v2175 = vrot.slane %v1053, 2
        %v2176 = vrot.slane %v1054, 2
        %v2177 = vrot.slane %v1055, 2
        %v2178 = vrot.slane %v1056, 2
        %v2179 = vrot.slane %v1057, 2
        %v2180 = vrot.slane %v1058, 2
        %v2181 = vrot.slane %v1059, 2
        %2202 = vmatpush.xpose.msra.mxu0 0.0
        %2203 = vmatpush.xpose.msra.mxu0 0.0
        %2204 = vmatpush.xpose.msra.mxu0 0.0
        %2205 = vmatpush.xpose.msra.mxu0 0.0
        %2206 = vmatpush.xpose.msra.mxu0 0.0
        %2207 = vmatpush.xpose.msra.mxu0 0.0
        %2208 = vmatpush.xpose.msra.mxu0 0.0
        %2209 = vmatpush.xpose.msra.mxu0 0.0
        %2210 = vmatpush.xpose.msra.mxu0 0.0
        %2211 = vmatpush.xpose.msra.mxu0 0.0
        %2212 = vmatpush.xpose.msra.mxu0 0.0
        %2213 = vmatpush.xpose.msra.mxu0 0.0
        %2214 = vmatpush.xpose.msra.mxu0 %v2142
        %2215 = vmatpush.xpose.msra.mxu0 %v2122
        %2216 = vmatpush.xpose.msra.mxu0 %v2102
        %2217 = vmatpush.xpose.msra.mxu0 %v2082
        %2218 = vmatmul.f32.gmra.mxu0 %v2162
        %v2219 = vpop.f32.mrf.mxu0
        %v2220 = vadd.f32 0.0, %v2219
        %2221 = vdwg.mxu0
        %2222 = vmatpush.xpose.msra.mxu0 0.0
        %2223 = vmatpush.xpose.msra.mxu0 0.0
        %2224 = vmatpush.xpose.msra.mxu0 0.0
        %2225 = vmatpush.xpose.msra.mxu0 0.0
        %2226 = vmatpush.xpose.msra.mxu0 0.0
        %2227 = vmatpush.xpose.msra.mxu0 0.0
        %2228 = vmatpush.xpose.msra.mxu0 0.0
        %2229 = vmatpush.xpose.msra.mxu0 0.0
        %2230 = vmatpush.xpose.msra.mxu0 0.0
        %2231 = vmatpush.xpose.msra.mxu0 0.0
        %2232 = vmatpush.xpose.msra.mxu0 0.0
        %2233 = vmatpush.xpose.msra.mxu0 0.0
        %2234 = vmatpush.xpose.msra.mxu0 %v2143
        %2235 = vmatpush.xpose.msra.mxu0 %v2123
        %2236 = vmatpush.xpose.msra.mxu0 %v2103
        %2237 = vmatpush.xpose.msra.mxu0 %v2083
        %2238 = vmatmul.f32.gmra.mxu0 %v2163
        %v2239 = vpop.f32.mrf.mxu0
        %v2240 = vadd.f32 %v2220, %v2239
        %2241 = vdwg.mxu0
        %2242 = vmatpush.xpose.msra.mxu0 0.0
        %2243 = vmatpush.xpose.msra.mxu0 0.0
        %2244 = vmatpush.xpose.msra.mxu0 0.0
        %2245 = vmatpush.xpose.msra.mxu0 0.0
        %2246 = vmatpush.xpose.msra.mxu0 0.0
        %2247 = vmatpush.xpose.msra.mxu0 0.0
        %2248 = vmatpush.xpose.msra.mxu0 0.0
        %2249 = vmatpush.xpose.msra.mxu0 0.0
        %2250 = vmatpush.xpose.msra.mxu0 0.0
        %2251 = vmatpush.xpose.msra.mxu0 0.0
        %2252 = vmatpush.xpose.msra.mxu0 0.0
        %2253 = vmatpush.xpose.msra.mxu0 0.0
        %2254 = vmatpush.xpose.msra.mxu0 %v2144
        %2255 = vmatpush.xpose.msra.mxu0 %v2124
        %2256 = vmatpush.xpose.msra.mxu0 %v2104
        %2257 = vmatpush.xpose.msra.mxu0 %v2084
        %2258 = vmatmul.f32.gmra.mxu0 %v2164
        %v2259 = vpop.f32.mrf.mxu0
        %v2260 = vadd.f32 %v2240, %v2259
        %2261 = vdwg.mxu0
        %2262 = vmatpush.xpose.msra.mxu0 0.0
        %2263 = vmatpush.xpose.msra.mxu0 0.0
        %2264 = vmatpush.xpose.msra.mxu0 0.0
        %2265 = vmatpush.xpose.msra.mxu0 0.0
        %2266 = vmatpush.xpose.msra.mxu0 0.0
        %2267 = vmatpush.xpose.msra.mxu0 0.0
        %2268 = vmatpush.xpose.msra.mxu0 0.0
        %2269 = vmatpush.xpose.msra.mxu0 0.0
        %2270 = vmatpush.xpose.msra.mxu0 0.0
        %2271 = vmatpush.xpose.msra.mxu0 0.0
        %2272 = vmatpush.xpose.msra.mxu0 0.0
        %2273 = vmatpush.xpose.msra.mxu0 0.0
        %2274 = vmatpush.xpose.msra.mxu0 %v2145
        %2275 = vmatpush.xpose.msra.mxu0 %v2125
        %2276 = vmatpush.xpose.msra.mxu0 %v2105
        %2277 = vmatpush.xpose.msra.mxu0 %v2085
        %2278 = vmatmul.f32.gmra.mxu0 %v2165
        %v2279 = vpop.f32.mrf.mxu0
        %v2280 = vadd.f32 %v2260, %v2279
        %2281 = vdwg.mxu0
        %2282 = vmatpush.xpose.msra.mxu0 0.0
        %2283 = vmatpush.xpose.msra.mxu0 0.0
        %2284 = vmatpush.xpose.msra.mxu0 0.0
        %2285 = vmatpush.xpose.msra.mxu0 0.0
        %2286 = vmatpush.xpose.msra.mxu0 0.0
        %2287 = vmatpush.xpose.msra.mxu0 0.0
        %2288 = vmatpush.xpose.msra.mxu0 0.0
        %2289 = vmatpush.xpose.msra.mxu0 0.0
        %2290 = vmatpush.xpose.msra.mxu0 0.0
        %2291 = vmatpush.xpose.msra.mxu0 0.0
        %2292 = vmatpush.xpose.msra.mxu0 0.0
        %2293 = vmatpush.xpose.msra.mxu0 0.0
        %2294 = vmatpush.xpose.msra.mxu0 %v2146
        %2295 = vmatpush.xpose.msra.mxu0 %v2126
        %2296 = vmatpush.xpose.msra.mxu0 %v2106
        %2297 = vmatpush.xpose.msra.mxu0 %v2086
        %2298 = vmatmul.f32.gmra.mxu0 %v2166
        %v2299 = vpop.f32.mrf.mxu0
        %v2300 = vadd.f32 %v2280, %v2299
        %2301 = vdwg.mxu0
        %2302 = vmatpush.xpose.msra.mxu0 0.0
        %2303 = vmatpush.xpose.msra.mxu0 0.0
        %2304 = vmatpush.xpose.msra.mxu0 0.0
        %2305 = vmatpush.xpose.msra.mxu0 0.0
        %2306 = vmatpush.xpose.msra.mxu0 0.0
        %2307 = vmatpush.xpose.msra.mxu0 0.0
        %2308 = vmatpush.xpose.msra.mxu0 0.0
        %2309 = vmatpush.xpose.msra.mxu0 0.0
        %2310 = vmatpush.xpose.msra.mxu0 0.0
        %2311 = vmatpush.xpose.msra.mxu0 0.0
        %2312 = vmatpush.xpose.msra.mxu0 0.0
        %2313 = vmatpush.xpose.msra.mxu0 0.0
        %2314 = vmatpush.xpose.msra.mxu0 %v2147
        %2315 = vmatpush.xpose.msra.mxu0 %v2127
        %2316 = vmatpush.xpose.msra.mxu0 %v2107
        %2317 = vmatpush.xpose.msra.mxu0 %v2087
        %2318 = vmatmul.f32.gmra.mxu0 %v2167
        %v2319 = vpop.f32.mrf.mxu0
        %v2320 = vadd.f32 %v2300, %v2319
        %2321 = vdwg.mxu0
        %2322 = vmatpush.xpose.msra.mxu0 0.0
        %2323 = vmatpush.xpose.msra.mxu0 0.0
        %2324 = vmatpush.xpose.msra.mxu0 0.0
        %2325 = vmatpush.xpose.msra.mxu0 0.0
        %2326 = vmatpush.xpose.msra.mxu0 0.0
        %2327 = vmatpush.xpose.msra.mxu0 0.0
        %2328 = vmatpush.xpose.msra.mxu0 0.0
        %2329 = vmatpush.xpose.msra.mxu0 0.0
        %2330 = vmatpush.xpose.msra.mxu0 0.0
        %2331 = vmatpush.xpose.msra.mxu0 0.0
        %2332 = vmatpush.xpose.msra.mxu0 0.0
        %2333 = vmatpush.xpose.msra.mxu0 0.0
        %2334 = vmatpush.xpose.msra.mxu0 %v2148
        %2335 = vmatpush.xpose.msra.mxu0 %v2128
        %2336 = vmatpush.xpose.msra.mxu0 %v2108
        %2337 = vmatpush.xpose.msra.mxu0 %v2088
        %2338 = vmatmul.f32.gmra.mxu0 %v2168
        %v2339 = vpop.f32.mrf.mxu0
        %v2340 = vadd.f32 %v2320, %v2339
        %2341 = vdwg.mxu0
        %2342 = vmatpush.xpose.msra.mxu0 0.0
        %2343 = vmatpush.xpose.msra.mxu0 0.0
        %2344 = vmatpush.xpose.msra.mxu0 0.0
        %2345 = vmatpush.xpose.msra.mxu0 0.0
        %2346 = vmatpush.xpose.msra.mxu0 0.0
        %2347 = vmatpush.xpose.msra.mxu0 0.0
        %2348 = vmatpush.xpose.msra.mxu0 0.0
        %2349 = vmatpush.xpose.msra.mxu0 0.0
        %2350 = vmatpush.xpose.msra.mxu0 0.0
        %2351 = vmatpush.xpose.msra.mxu0 0.0
        %2352 = vmatpush.xpose.msra.mxu0 0.0
        %2353 = vmatpush.xpose.msra.mxu0 0.0
        %2354 = vmatpush.xpose.msra.mxu0 %v2149
        %2355 = vmatpush.xpose.msra.mxu0 %v2129
        %2356 = vmatpush.xpose.msra.mxu0 %v2109
        %2357 = vmatpush.xpose.msra.mxu0 %v2089
        %2358 = vmatmul.f32.gmra.mxu0 %v2169
        %v2359 = vpop.f32.mrf.mxu0
        %v2360 = vadd.f32 %v2340, %v2359
        %2361 = vdwg.mxu0
        %2362 = vmatpush.xpose.msra.mxu0 0.0
        %2363 = vmatpush.xpose.msra.mxu0 0.0
        %2364 = vmatpush.xpose.msra.mxu0 0.0
        %2365 = vmatpush.xpose.msra.mxu0 0.0
        %2366 = vmatpush.xpose.msra.mxu0 0.0
        %2367 = vmatpush.xpose.msra.mxu0 0.0
        %2368 = vmatpush.xpose.msra.mxu0 0.0
        %2369 = vmatpush.xpose.msra.mxu0 0.0
        %2370 = vmatpush.xpose.msra.mxu0 0.0
        %2371 = vmatpush.xpose.msra.mxu0 0.0
        %2372 = vmatpush.xpose.msra.mxu0 0.0
        %2373 = vmatpush.xpose.msra.mxu0 0.0
        %2374 = vmatpush.xpose.msra.mxu0 %v2150
        %2375 = vmatpush.xpose.msra.mxu0 %v2130
        %2376 = vmatpush.xpose.msra.mxu0 %v2110
        %2377 = vmatpush.xpose.msra.mxu0 %v2090
        %2378 = vmatmul.f32.gmra.mxu0 %v2170
        %v2379 = vpop.f32.mrf.mxu0
        %v2380 = vadd.f32 %v2360, %v2379
        %2381 = vdwg.mxu0
        %2382 = vmatpush.xpose.msra.mxu0 0.0
        %2383 = vmatpush.xpose.msra.mxu0 0.0
        %2384 = vmatpush.xpose.msra.mxu0 0.0
        %2385 = vmatpush.xpose.msra.mxu0 0.0
        %2386 = vmatpush.xpose.msra.mxu0 0.0
        %2387 = vmatpush.xpose.msra.mxu0 0.0
        %2388 = vmatpush.xpose.msra.mxu0 0.0
        %2389 = vmatpush.xpose.msra.mxu0 0.0
        %2390 = vmatpush.xpose.msra.mxu0 0.0
        %2391 = vmatpush.xpose.msra.mxu0 0.0
        %2392 = vmatpush.xpose.msra.mxu0 0.0
        %2393 = vmatpush.xpose.msra.mxu0 0.0
        %2394 = vmatpush.xpose.msra.mxu0 %v2151
        %2395 = vmatpush.xpose.msra.mxu0 %v2131
        %2396 = vmatpush.xpose.msra.mxu0 %v2111
        %2397 = vmatpush.xpose.msra.mxu0 %v2091
        %2398 = vmatmul.f32.gmra.mxu0 %v2171
        %v2399 = vpop.f32.mrf.mxu0
        %v2400 = vadd.f32 %v2380, %v2399
        %2401 = vdwg.mxu0
        %2402 = vmatpush.xpose.msra.mxu0 0.0
        %2403 = vmatpush.xpose.msra.mxu0 0.0
        %2404 = vmatpush.xpose.msra.mxu0 0.0
        %2405 = vmatpush.xpose.msra.mxu0 0.0
        %2406 = vmatpush.xpose.msra.mxu0 0.0
        %2407 = vmatpush.xpose.msra.mxu0 0.0
        %2408 = vmatpush.xpose.msra.mxu0 0.0
        %2409 = vmatpush.xpose.msra.mxu0 0.0
        %2410 = vmatpush.xpose.msra.mxu0 0.0
        %2411 = vmatpush.xpose.msra.mxu0 0.0
        %2412 = vmatpush.xpose.msra.mxu0 0.0
        %2413 = vmatpush.xpose.msra.mxu0 0.0
        %2414 = vmatpush.xpose.msra.mxu0 %v2152
        %2415 = vmatpush.xpose.msra.mxu0 %v2132
        %2416 = vmatpush.xpose.msra.mxu0 %v2112
        %2417 = vmatpush.xpose.msra.mxu0 %v2092
        %2418 = vmatmul.f32.gmra.mxu0 %v2172
        %v2419 = vpop.f32.mrf.mxu0
        %v2420 = vadd.f32 %v2400, %v2419
        %2421 = vdwg.mxu0
        %2422 = vmatpush.xpose.msra.mxu0 0.0
        %2423 = vmatpush.xpose.msra.mxu0 0.0
        %2424 = vmatpush.xpose.msra.mxu0 0.0
        %2425 = vmatpush.xpose.msra.mxu0 0.0
        %2426 = vmatpush.xpose.msra.mxu0 0.0
        %2427 = vmatpush.xpose.msra.mxu0 0.0
        %2428 = vmatpush.xpose.msra.mxu0 0.0
        %2429 = vmatpush.xpose.msra.mxu0 0.0
        %2430 = vmatpush.xpose.msra.mxu0 0.0
        %2431 = vmatpush.xpose.msra.mxu0 0.0
        %2432 = vmatpush.xpose.msra.mxu0 0.0
        %2433 = vmatpush.xpose.msra.mxu0 0.0
        %2434 = vmatpush.xpose.msra.mxu0 %v2153
        %2435 = vmatpush.xpose.msra.mxu0 %v2133
        %2436 = vmatpush.xpose.msra.mxu0 %v2113
        %2437 = vmatpush.xpose.msra.mxu0 %v2093
        %2438 = vmatmul.f32.gmra.mxu0 %v2173
        %v2439 = vpop.f32.mrf.mxu0
        %v2440 = vadd.f32 %v2420, %v2439
        %2441 = vdwg.mxu0
        %2442 = vmatpush.xpose.msra.mxu0 0.0
        %2443 = vmatpush.xpose.msra.mxu0 0.0
        %2444 = vmatpush.xpose.msra.mxu0 0.0
        %2445 = vmatpush.xpose.msra.mxu0 0.0
        %2446 = vmatpush.xpose.msra.mxu0 0.0
        %2447 = vmatpush.xpose.msra.mxu0 0.0
        %2448 = vmatpush.xpose.msra.mxu0 0.0
        %2449 = vmatpush.xpose.msra.mxu0 0.0
        %2450 = vmatpush.xpose.msra.mxu0 0.0
        %2451 = vmatpush.xpose.msra.mxu0 0.0
        %2452 = vmatpush.xpose.msra.mxu0 0.0
        %2453 = vmatpush.xpose.msra.mxu0 0.0
        %2454 = vmatpush.xpose.msra.mxu0 %v2154
        %2455 = vmatpush.xpose.msra.mxu0 %v2134
        %2456 = vmatpush.xpose.msra.mxu0 %v2114
        %2457 = vmatpush.xpose.msra.mxu0 %v2094
        %2458 = vmatmul.f32.gmra.mxu0 %v2174
        %v2459 = vpop.f32.mrf.mxu0
        %v2460 = vadd.f32 %v2440, %v2459
        %2461 = vdwg.mxu0
        %2462 = vmatpush.xpose.msra.mxu0 0.0
        %2463 = vmatpush.xpose.msra.mxu0 0.0
        %2464 = vmatpush.xpose.msra.mxu0 0.0
        %2465 = vmatpush.xpose.msra.mxu0 0.0
        %2466 = vmatpush.xpose.msra.mxu0 0.0
        %2467 = vmatpush.xpose.msra.mxu0 0.0
        %2468 = vmatpush.xpose.msra.mxu0 0.0
        %2469 = vmatpush.xpose.msra.mxu0 0.0
        %2470 = vmatpush.xpose.msra.mxu0 0.0
        %2471 = vmatpush.xpose.msra.mxu0 0.0
        %2472 = vmatpush.xpose.msra.mxu0 0.0
        %2473 = vmatpush.xpose.msra.mxu0 0.0
        %2474 = vmatpush.xpose.msra.mxu0 %v2155
        %2475 = vmatpush.xpose.msra.mxu0 %v2135
        %2476 = vmatpush.xpose.msra.mxu0 %v2115
        %2477 = vmatpush.xpose.msra.mxu0 %v2095
        %2478 = vmatmul.f32.gmra.mxu0 %v2175
        %v2479 = vpop.f32.mrf.mxu0
        %v2480 = vadd.f32 %v2460, %v2479
        %2481 = vdwg.mxu0
        %2482 = vmatpush.xpose.msra.mxu0 0.0
        %2483 = vmatpush.xpose.msra.mxu0 0.0
        %2484 = vmatpush.xpose.msra.mxu0 0.0
        %2485 = vmatpush.xpose.msra.mxu0 0.0
        %2486 = vmatpush.xpose.msra.mxu0 0.0
        %2487 = vmatpush.xpose.msra.mxu0 0.0
        %2488 = vmatpush.xpose.msra.mxu0 0.0
        %2489 = vmatpush.xpose.msra.mxu0 0.0
        %2490 = vmatpush.xpose.msra.mxu0 0.0
        %2491 = vmatpush.xpose.msra.mxu0 0.0
        %2492 = vmatpush.xpose.msra.mxu0 0.0
        %2493 = vmatpush.xpose.msra.mxu0 0.0
        %2494 = vmatpush.xpose.msra.mxu0 %v2156
        %2495 = vmatpush.xpose.msra.mxu0 %v2136
        %2496 = vmatpush.xpose.msra.mxu0 %v2116
        %2497 = vmatpush.xpose.msra.mxu0 %v2096
        %2498 = vmatmul.f32.gmra.mxu0 %v2176
        %v2499 = vpop.f32.mrf.mxu0
        %v2500 = vadd.f32 %v2480, %v2499
        %2501 = vdwg.mxu0
        %2502 = vmatpush.xpose.msra.mxu0 0.0
        %2503 = vmatpush.xpose.msra.mxu0 0.0
        %2504 = vmatpush.xpose.msra.mxu0 0.0
        %2505 = vmatpush.xpose.msra.mxu0 0.0
        %2506 = vmatpush.xpose.msra.mxu0 0.0
        %2507 = vmatpush.xpose.msra.mxu0 0.0
        %2508 = vmatpush.xpose.msra.mxu0 0.0
        %2509 = vmatpush.xpose.msra.mxu0 0.0
        %2510 = vmatpush.xpose.msra.mxu0 0.0
        %2511 = vmatpush.xpose.msra.mxu0 0.0
        %2512 = vmatpush.xpose.msra.mxu0 0.0
        %2513 = vmatpush.xpose.msra.mxu0 0.0
        %2514 = vmatpush.xpose.msra.mxu0 %v2157
        %2515 = vmatpush.xpose.msra.mxu0 %v2137
        %2516 = vmatpush.xpose.msra.mxu0 %v2117
        %2517 = vmatpush.xpose.msra.mxu0 %v2097
        %2518 = vmatmul.f32.gmra.mxu0 %v2177
        %v2519 = vpop.f32.mrf.mxu0
        %v2520 = vadd.f32 %v2500, %v2519
        %2521 = vdwg.mxu0
        %2522 = vmatpush.xpose.msra.mxu0 0.0
        %2523 = vmatpush.xpose.msra.mxu0 0.0
        %2524 = vmatpush.xpose.msra.mxu0 0.0
        %2525 = vmatpush.xpose.msra.mxu0 0.0
        %2526 = vmatpush.xpose.msra.mxu0 0.0
        %2527 = vmatpush.xpose.msra.mxu0 0.0
        %2528 = vmatpush.xpose.msra.mxu0 0.0
        %2529 = vmatpush.xpose.msra.mxu0 0.0
        %2530 = vmatpush.xpose.msra.mxu0 0.0
        %2531 = vmatpush.xpose.msra.mxu0 0.0
        %2532 = vmatpush.xpose.msra.mxu0 0.0
        %2533 = vmatpush.xpose.msra.mxu0 0.0
        %2534 = vmatpush.xpose.msra.mxu0 %v2158
        %2535 = vmatpush.xpose.msra.mxu0 %v2138
        %2536 = vmatpush.xpose.msra.mxu0 %v2118
        %2537 = vmatpush.xpose.msra.mxu0 %v2098
        %2538 = vmatmul.f32.gmra.mxu0 %v2178
        %v2539 = vpop.f32.mrf.mxu0
        %v2540 = vadd.f32 %v2520, %v2539
        %2541 = vdwg.mxu0
        %2542 = vmatpush.xpose.msra.mxu0 0.0
        %2543 = vmatpush.xpose.msra.mxu0 0.0
        %2544 = vmatpush.xpose.msra.mxu0 0.0
        %2545 = vmatpush.xpose.msra.mxu0 0.0
        %2546 = vmatpush.xpose.msra.mxu0 0.0
        %2547 = vmatpush.xpose.msra.mxu0 0.0
        %2548 = vmatpush.xpose.msra.mxu0 0.0
        %2549 = vmatpush.xpose.msra.mxu0 0.0
        %2550 = vmatpush.xpose.msra.mxu0 0.0
        %2551 = vmatpush.xpose.msra.mxu0 0.0
        %2552 = vmatpush.xpose.msra.mxu0 0.0
        %2553 = vmatpush.xpose.msra.mxu0 0.0
        %2554 = vmatpush.xpose.msra.mxu0 %v2159
        %2555 = vmatpush.xpose.msra.mxu0 %v2139
        %2556 = vmatpush.xpose.msra.mxu0 %v2119
        %2557 = vmatpush.xpose.msra.mxu0 %v2099
        %2558 = vmatmul.f32.gmra.mxu0 %v2179
        %v2559 = vpop.f32.mrf.mxu0
        %v2560 = vadd.f32 %v2540, %v2559
        %2561 = vdwg.mxu0
        %2562 = vmatpush.xpose.msra.mxu0 0.0
        %2563 = vmatpush.xpose.msra.mxu0 0.0
        %2564 = vmatpush.xpose.msra.mxu0 0.0
        %2565 = vmatpush.xpose.msra.mxu0 0.0
        %2566 = vmatpush.xpose.msra.mxu0 0.0
        %2567 = vmatpush.xpose.msra.mxu0 0.0
        %2568 = vmatpush.xpose.msra.mxu0 0.0
        %2569 = vmatpush.xpose.msra.mxu0 0.0
        %2570 = vmatpush.xpose.msra.mxu0 0.0
        %2571 = vmatpush.xpose.msra.mxu0 0.0
        %2572 = vmatpush.xpose.msra.mxu0 0.0
        %2573 = vmatpush.xpose.msra.mxu0 0.0
        %2574 = vmatpush.xpose.msra.mxu0 %v2160
        %2575 = vmatpush.xpose.msra.mxu0 %v2140
        %2576 = vmatpush.xpose.msra.mxu0 %v2120
        %2577 = vmatpush.xpose.msra.mxu0 %v2100
        %2578 = vmatmul.f32.gmra.mxu0 %v2180
        %v2579 = vpop.f32.mrf.mxu0
        %v2580 = vadd.f32 %v2560, %v2579
        %2581 = vdwg.mxu0
        %2582 = vmatpush.xpose.msra.mxu0 0.0
        %2583 = vmatpush.xpose.msra.mxu0 0.0
        %2584 = vmatpush.xpose.msra.mxu0 0.0
        %2585 = vmatpush.xpose.msra.mxu0 0.0
        %2586 = vmatpush.xpose.msra.mxu0 0.0
        %2587 = vmatpush.xpose.msra.mxu0 0.0
        %2588 = vmatpush.xpose.msra.mxu0 0.0
        %2589 = vmatpush.xpose.msra.mxu0 0.0
        %2590 = vmatpush.xpose.msra.mxu0 0.0
        %2591 = vmatpush.xpose.msra.mxu0 0.0
        %2592 = vmatpush.xpose.msra.mxu0 0.0
        %2593 = vmatpush.xpose.msra.mxu0 0.0
        %2594 = vmatpush.xpose.msra.mxu0 %v2161
        %2595 = vmatpush.xpose.msra.mxu0 %v2141
        %2596 = vmatpush.xpose.msra.mxu0 %v2121
        %2597 = vmatpush.xpose.msra.mxu0 %v2101
        %2598 = vmatmul.f32.gmra.mxu0 %v2181
        %v2599 = vpop.f32.mrf.mxu0
        %v2600 = vadd.f32 %v2580, %v2599
        %2601 = vdwg.mxu0
        %v2602 = vadd.f32 %v2079, %v2600
        %s2603 = scalar_lea.vmem %s3, 1920
        %v2604 = vld [vmem:[%s2603] sm:$0xff]
        %v2605 = vld [vmem:[%s2603 + $0x8] sm:$0xff]
        %v2606 = vld [vmem:[%s2603 + $0x10] sm:$0xff]
        %v2607 = vld [vmem:[%s2603 + $0x18] sm:$0xff]
        %v2608 = vld [vmem:[%s2603 + $0x20] sm:$0xff]
        %v2609 = vld [vmem:[%s2603 + $0x28] sm:$0xff]
        %v2610 = vld [vmem:[%s2603 + $0x30] sm:$0xff]
        %v2611 = vld [vmem:[%s2603 + $0x38] sm:$0xff]
        %v2612 = vld [vmem:[%s2603 + $0x40] sm:$0xff]
        %v2613 = vld [vmem:[%s2603 + $0x48] sm:$0xff]
        %v2614 = vld [vmem:[%s2603 + $0x50] sm:$0xff]
        %v2615 = vld [vmem:[%s2603 + $0x58] sm:$0xff]
        %v2616 = vld [vmem:[%s2603 + $0x60] sm:$0xff]
        %v2617 = vld [vmem:[%s2603 + $0x68] sm:$0xff]
        %v2618 = vld [vmem:[%s2603 + $0x70] sm:$0xff]
        %v2619 = vld [vmem:[%s2603 + $0x78] sm:$0xff]
        %v2620 = vld [vmem:[%s2603 + $0x80] sm:$0xff]
        %v2621 = vld [vmem:[%s2603 + $0x88] sm:$0xff]
        %v2622 = vld [vmem:[%s2603 + $0x90] sm:$0xff]
        %v2623 = vld [vmem:[%s2603 + $0x98] sm:$0xff]
        %v2624 = vld [vmem:[%s2603 + $0xa0] sm:$0xff]
        %v2625 = vld [vmem:[%s2603 + $0xa8] sm:$0xff]
        %v2626 = vld [vmem:[%s2603 + $0xb0] sm:$0xff]
        %v2627 = vld [vmem:[%s2603 + $0xb8] sm:$0xff]
        %v2628 = vld [vmem:[%s2603 + $0xc0] sm:$0xff]
        %v2629 = vld [vmem:[%s2603 + $0xc8] sm:$0xff]
        %v2630 = vld [vmem:[%s2603 + $0xd0] sm:$0xff]
        %v2631 = vld [vmem:[%s2603 + $0xd8] sm:$0xff]
        %v2632 = vld [vmem:[%s2603 + $0xe0] sm:$0xff]
        %v2633 = vld [vmem:[%s2603 + $0xe8] sm:$0xff]
        %v2634 = vld [vmem:[%s2603 + $0xf0] sm:$0xff]
        %v2635 = vld [vmem:[%s2603 + $0xf8] sm:$0xff]
        %v2636 = vld [vmem:[%s2603 + $0x100] sm:$0xff]
        %v2637 = vld [vmem:[%s2603 + $0x108] sm:$0xff]
        %v2638 = vld [vmem:[%s2603 + $0x110] sm:$0xff]
        %v2639 = vld [vmem:[%s2603 + $0x118] sm:$0xff]
        %v2640 = vld [vmem:[%s2603 + $0x120] sm:$0xff]
        %v2641 = vld [vmem:[%s2603 + $0x128] sm:$0xff]
        %v2642 = vld [vmem:[%s2603 + $0x130] sm:$0xff]
        %v2643 = vld [vmem:[%s2603 + $0x138] sm:$0xff]
        %v2644 = vld [vmem:[%s2603 + $0x140] sm:$0xff]
        %v2645 = vld [vmem:[%s2603 + $0x148] sm:$0xff]
        %v2646 = vld [vmem:[%s2603 + $0x150] sm:$0xff]
        %v2647 = vld [vmem:[%s2603 + $0x158] sm:$0xff]
        %v2648 = vld [vmem:[%s2603 + $0x160] sm:$0xff]
        %v2649 = vld [vmem:[%s2603 + $0x168] sm:$0xff]
        %v2650 = vld [vmem:[%s2603 + $0x170] sm:$0xff]
        %v2651 = vld [vmem:[%s2603 + $0x178] sm:$0xff]
        %v2652 = vld [vmem:[%s2603 + $0x180] sm:$0xff]
        %v2653 = vld [vmem:[%s2603 + $0x188] sm:$0xff]
        %v2654 = vld [vmem:[%s2603 + $0x190] sm:$0xff]
        %v2655 = vld [vmem:[%s2603 + $0x198] sm:$0xff]
        %v2656 = vld [vmem:[%s2603 + $0x1a0] sm:$0xff]
        %v2657 = vld [vmem:[%s2603 + $0x1a8] sm:$0xff]
        %v2658 = vld [vmem:[%s2603 + $0x1b0] sm:$0xff]
        %v2659 = vld [vmem:[%s2603 + $0x1b8] sm:$0xff]
        %v2660 = vld [vmem:[%s2603 + $0x1c0] sm:$0xff]
        %v2661 = vld [vmem:[%s2603 + $0x1c8] sm:$0xff]
        %v2662 = vld [vmem:[%s2603 + $0x1d0] sm:$0xff]
        %v2663 = vld [vmem:[%s2603 + $0x1d8] sm:$0xff]
        %v2664 = vld [vmem:[%s2603 + $0x1e0] sm:$0xff]
        %v2665 = vld [vmem:[%s2603 + $0x1e8] sm:$0xff]
        %v2666 = vld [vmem:[%s2603 + $0x1f0] sm:$0xff]
        %v2667 = vld [vmem:[%s2603 + $0x1f8] sm:$0xff]
        %v2668 = vld [vmem:[%s2603 + $0x200] sm:$0xff]
        %v2669 = vld [vmem:[%s2603 + $0x208] sm:$0xff]
        %v2670 = vld [vmem:[%s2603 + $0x210] sm:$0xff]
        %v2671 = vld [vmem:[%s2603 + $0x218] sm:$0xff]
        %v2672 = vld [vmem:[%s2603 + $0x220] sm:$0xff]
        %v2673 = vld [vmem:[%s2603 + $0x228] sm:$0xff]
        %v2674 = vld [vmem:[%s2603 + $0x230] sm:$0xff]
        %v2675 = vld [vmem:[%s2603 + $0x238] sm:$0xff]
        %v2676 = vld [vmem:[%s2603 + $0x240] sm:$0xff]
        %v2677 = vld [vmem:[%s2603 + $0x248] sm:$0xff]
        %v2678 = vld [vmem:[%s2603 + $0x250] sm:$0xff]
        %v2679 = vld [vmem:[%s2603 + $0x258] sm:$0xff]
        %v2680 = vld [vmem:[%s2603 + $0x260] sm:$0xff]
        %v2681 = vld [vmem:[%s2603 + $0x268] sm:$0xff]
        %v2682 = vld [vmem:[%s2603 + $0x270] sm:$0xff]
        %v2683 = vld [vmem:[%s2603 + $0x278] sm:$0xff]
        %v2684 = vrot.slane %v1040, 3
        %v2685 = vrot.slane %v1041, 3
        %v2686 = vrot.slane %v1042, 3
        %v2687 = vrot.slane %v1043, 3
        %v2688 = vrot.slane %v1044, 3
        %v2689 = vrot.slane %v1045, 3
        %v2690 = vrot.slane %v1046, 3
        %v2691 = vrot.slane %v1047, 3
        %v2692 = vrot.slane %v1048, 3
        %v2693 = vrot.slane %v1049, 3
        %v2694 = vrot.slane %v1050, 3
        %v2695 = vrot.slane %v1051, 3
        %v2696 = vrot.slane %v1052, 3
        %v2697 = vrot.slane %v1053, 3
        %v2698 = vrot.slane %v1054, 3
        %v2699 = vrot.slane %v1055, 3
        %v2700 = vrot.slane %v1056, 3
        %v2701 = vrot.slane %v1057, 3
        %v2702 = vrot.slane %v1058, 3
        %v2703 = vrot.slane %v1059, 3
        %2724 = vmatpush.xpose.msra.mxu0 0.0
        %2725 = vmatpush.xpose.msra.mxu0 0.0
        %2726 = vmatpush.xpose.msra.mxu0 0.0
        %2727 = vmatpush.xpose.msra.mxu0 0.0
        %2728 = vmatpush.xpose.msra.mxu0 0.0
        %2729 = vmatpush.xpose.msra.mxu0 0.0
        %2730 = vmatpush.xpose.msra.mxu0 0.0
        %2731 = vmatpush.xpose.msra.mxu0 0.0
        %2732 = vmatpush.xpose.msra.mxu0 0.0
        %2733 = vmatpush.xpose.msra.mxu0 0.0
        %2734 = vmatpush.xpose.msra.mxu0 0.0
        %2735 = vmatpush.xpose.msra.mxu0 0.0
        %2736 = vmatpush.xpose.msra.mxu0 %v2664
        %2737 = vmatpush.xpose.msra.mxu0 %v2644
        %2738 = vmatpush.xpose.msra.mxu0 %v2624
        %2739 = vmatpush.xpose.msra.mxu0 %v2604
        %2740 = vmatmul.f32.gmra.mxu0 %v2684
        %v2741 = vpop.f32.mrf.mxu0
        %v2742 = vadd.f32 0.0, %v2741
        %2743 = vdwg.mxu0
        %2744 = vmatpush.xpose.msra.mxu0 0.0
        %2745 = vmatpush.xpose.msra.mxu0 0.0
        %2746 = vmatpush.xpose.msra.mxu0 0.0
        %2747 = vmatpush.xpose.msra.mxu0 0.0
        %2748 = vmatpush.xpose.msra.mxu0 0.0
        %2749 = vmatpush.xpose.msra.mxu0 0.0
        %2750 = vmatpush.xpose.msra.mxu0 0.0
        %2751 = vmatpush.xpose.msra.mxu0 0.0
        %2752 = vmatpush.xpose.msra.mxu0 0.0
        %2753 = vmatpush.xpose.msra.mxu0 0.0
        %2754 = vmatpush.xpose.msra.mxu0 0.0
        %2755 = vmatpush.xpose.msra.mxu0 0.0
        %2756 = vmatpush.xpose.msra.mxu0 %v2665
        %2757 = vmatpush.xpose.msra.mxu0 %v2645
        %2758 = vmatpush.xpose.msra.mxu0 %v2625
        %2759 = vmatpush.xpose.msra.mxu0 %v2605
        %2760 = vmatmul.f32.gmra.mxu0 %v2685
        %v2761 = vpop.f32.mrf.mxu0
        %v2762 = vadd.f32 %v2742, %v2761
        %2763 = vdwg.mxu0
        %2764 = vmatpush.xpose.msra.mxu0 0.0
        %2765 = vmatpush.xpose.msra.mxu0 0.0
        %2766 = vmatpush.xpose.msra.mxu0 0.0
        %2767 = vmatpush.xpose.msra.mxu0 0.0
        %2768 = vmatpush.xpose.msra.mxu0 0.0
        %2769 = vmatpush.xpose.msra.mxu0 0.0
        %2770 = vmatpush.xpose.msra.mxu0 0.0
        %2771 = vmatpush.xpose.msra.mxu0 0.0
        %2772 = vmatpush.xpose.msra.mxu0 0.0
        %2773 = vmatpush.xpose.msra.mxu0 0.0
        %2774 = vmatpush.xpose.msra.mxu0 0.0
        %2775 = vmatpush.xpose.msra.mxu0 0.0
        %2776 = vmatpush.xpose.msra.mxu0 %v2666
        %2777 = vmatpush.xpose.msra.mxu0 %v2646
        %2778 = vmatpush.xpose.msra.mxu0 %v2626
        %2779 = vmatpush.xpose.msra.mxu0 %v2606
        %2780 = vmatmul.f32.gmra.mxu0 %v2686
        %v2781 = vpop.f32.mrf.mxu0
        %v2782 = vadd.f32 %v2762, %v2781
        %2783 = vdwg.mxu0
        %2784 = vmatpush.xpose.msra.mxu0 0.0
        %2785 = vmatpush.xpose.msra.mxu0 0.0
        %2786 = vmatpush.xpose.msra.mxu0 0.0
        %2787 = vmatpush.xpose.msra.mxu0 0.0
        %2788 = vmatpush.xpose.msra.mxu0 0.0
        %2789 = vmatpush.xpose.msra.mxu0 0.0
        %2790 = vmatpush.xpose.msra.mxu0 0.0
        %2791 = vmatpush.xpose.msra.mxu0 0.0
        %2792 = vmatpush.xpose.msra.mxu0 0.0
        %2793 = vmatpush.xpose.msra.mxu0 0.0
        %2794 = vmatpush.xpose.msra.mxu0 0.0
        %2795 = vmatpush.xpose.msra.mxu0 0.0
        %2796 = vmatpush.xpose.msra.mxu0 %v2667
        %2797 = vmatpush.xpose.msra.mxu0 %v2647
        %2798 = vmatpush.xpose.msra.mxu0 %v2627
        %2799 = vmatpush.xpose.msra.mxu0 %v2607
        %2800 = vmatmul.f32.gmra.mxu0 %v2687
        %v2801 = vpop.f32.mrf.mxu0
        %v2802 = vadd.f32 %v2782, %v2801
        %2803 = vdwg.mxu0
        %2804 = vmatpush.xpose.msra.mxu0 0.0
        %2805 = vmatpush.xpose.msra.mxu0 0.0
        %2806 = vmatpush.xpose.msra.mxu0 0.0
        %2807 = vmatpush.xpose.msra.mxu0 0.0
        %2808 = vmatpush.xpose.msra.mxu0 0.0
        %2809 = vmatpush.xpose.msra.mxu0 0.0
        %2810 = vmatpush.xpose.msra.mxu0 0.0
        %2811 = vmatpush.xpose.msra.mxu0 0.0
        %2812 = vmatpush.xpose.msra.mxu0 0.0
        %2813 = vmatpush.xpose.msra.mxu0 0.0
        %2814 = vmatpush.xpose.msra.mxu0 0.0
        %2815 = vmatpush.xpose.msra.mxu0 0.0
        %2816 = vmatpush.xpose.msra.mxu0 %v2668
        %2817 = vmatpush.xpose.msra.mxu0 %v2648
        %2818 = vmatpush.xpose.msra.mxu0 %v2628
        %2819 = vmatpush.xpose.msra.mxu0 %v2608
        %2820 = vmatmul.f32.gmra.mxu0 %v2688
        %v2821 = vpop.f32.mrf.mxu0
        %v2822 = vadd.f32 %v2802, %v2821
        %2823 = vdwg.mxu0
        %2824 = vmatpush.xpose.msra.mxu0 0.0
        %2825 = vmatpush.xpose.msra.mxu0 0.0
        %2826 = vmatpush.xpose.msra.mxu0 0.0
        %2827 = vmatpush.xpose.msra.mxu0 0.0
        %2828 = vmatpush.xpose.msra.mxu0 0.0
        %2829 = vmatpush.xpose.msra.mxu0 0.0
        %2830 = vmatpush.xpose.msra.mxu0 0.0
        %2831 = vmatpush.xpose.msra.mxu0 0.0
        %2832 = vmatpush.xpose.msra.mxu0 0.0
        %2833 = vmatpush.xpose.msra.mxu0 0.0
        %2834 = vmatpush.xpose.msra.mxu0 0.0
        %2835 = vmatpush.xpose.msra.mxu0 0.0
        %2836 = vmatpush.xpose.msra.mxu0 %v2669
        %2837 = vmatpush.xpose.msra.mxu0 %v2649
        %2838 = vmatpush.xpose.msra.mxu0 %v2629
        %2839 = vmatpush.xpose.msra.mxu0 %v2609
        %2840 = vmatmul.f32.gmra.mxu0 %v2689
        %v2841 = vpop.f32.mrf.mxu0
        %v2842 = vadd.f32 %v2822, %v2841
        %2843 = vdwg.mxu0
        %2844 = vmatpush.xpose.msra.mxu0 0.0
        %2845 = vmatpush.xpose.msra.mxu0 0.0
        %2846 = vmatpush.xpose.msra.mxu0 0.0
        %2847 = vmatpush.xpose.msra.mxu0 0.0
        %2848 = vmatpush.xpose.msra.mxu0 0.0
        %2849 = vmatpush.xpose.msra.mxu0 0.0
        %2850 = vmatpush.xpose.msra.mxu0 0.0
        %2851 = vmatpush.xpose.msra.mxu0 0.0
        %2852 = vmatpush.xpose.msra.mxu0 0.0
        %2853 = vmatpush.xpose.msra.mxu0 0.0
        %2854 = vmatpush.xpose.msra.mxu0 0.0
        %2855 = vmatpush.xpose.msra.mxu0 0.0
        %2856 = vmatpush.xpose.msra.mxu0 %v2670
        %2857 = vmatpush.xpose.msra.mxu0 %v2650
        %2858 = vmatpush.xpose.msra.mxu0 %v2630
        %2859 = vmatpush.xpose.msra.mxu0 %v2610
        %2860 = vmatmul.f32.gmra.mxu0 %v2690
        %v2861 = vpop.f32.mrf.mxu0
        %v2862 = vadd.f32 %v2842, %v2861
        %2863 = vdwg.mxu0
        %2864 = vmatpush.xpose.msra.mxu0 0.0
        %2865 = vmatpush.xpose.msra.mxu0 0.0
        %2866 = vmatpush.xpose.msra.mxu0 0.0
        %2867 = vmatpush.xpose.msra.mxu0 0.0
        %2868 = vmatpush.xpose.msra.mxu0 0.0
        %2869 = vmatpush.xpose.msra.mxu0 0.0
        %2870 = vmatpush.xpose.msra.mxu0 0.0
        %2871 = vmatpush.xpose.msra.mxu0 0.0
        %2872 = vmatpush.xpose.msra.mxu0 0.0
        %2873 = vmatpush.xpose.msra.mxu0 0.0
        %2874 = vmatpush.xpose.msra.mxu0 0.0
        %2875 = vmatpush.xpose.msra.mxu0 0.0
        %2876 = vmatpush.xpose.msra.mxu0 %v2671
        %2877 = vmatpush.xpose.msra.mxu0 %v2651
        %2878 = vmatpush.xpose.msra.mxu0 %v2631
        %2879 = vmatpush.xpose.msra.mxu0 %v2611
        %2880 = vmatmul.f32.gmra.mxu0 %v2691
        %v2881 = vpop.f32.mrf.mxu0
        %v2882 = vadd.f32 %v2862, %v2881
        %2883 = vdwg.mxu0
        %2884 = vmatpush.xpose.msra.mxu0 0.0
        %2885 = vmatpush.xpose.msra.mxu0 0.0
        %2886 = vmatpush.xpose.msra.mxu0 0.0
        %2887 = vmatpush.xpose.msra.mxu0 0.0
        %2888 = vmatpush.xpose.msra.mxu0 0.0
        %2889 = vmatpush.xpose.msra.mxu0 0.0
        %2890 = vmatpush.xpose.msra.mxu0 0.0
        %2891 = vmatpush.xpose.msra.mxu0 0.0
        %2892 = vmatpush.xpose.msra.mxu0 0.0
        %2893 = vmatpush.xpose.msra.mxu0 0.0
        %2894 = vmatpush.xpose.msra.mxu0 0.0
        %2895 = vmatpush.xpose.msra.mxu0 0.0
        %2896 = vmatpush.xpose.msra.mxu0 %v2672
        %2897 = vmatpush.xpose.msra.mxu0 %v2652
        %2898 = vmatpush.xpose.msra.mxu0 %v2632
        %2899 = vmatpush.xpose.msra.mxu0 %v2612
        %2900 = vmatmul.f32.gmra.mxu0 %v2692
        %v2901 = vpop.f32.mrf.mxu0
        %v2902 = vadd.f32 %v2882, %v2901
        %2903 = vdwg.mxu0
        %2904 = vmatpush.xpose.msra.mxu0 0.0
        %2905 = vmatpush.xpose.msra.mxu0 0.0
        %2906 = vmatpush.xpose.msra.mxu0 0.0
        %2907 = vmatpush.xpose.msra.mxu0 0.0
        %2908 = vmatpush.xpose.msra.mxu0 0.0
        %2909 = vmatpush.xpose.msra.mxu0 0.0
        %2910 = vmatpush.xpose.msra.mxu0 0.0
        %2911 = vmatpush.xpose.msra.mxu0 0.0
        %2912 = vmatpush.xpose.msra.mxu0 0.0
        %2913 = vmatpush.xpose.msra.mxu0 0.0
        %2914 = vmatpush.xpose.msra.mxu0 0.0
        %2915 = vmatpush.xpose.msra.mxu0 0.0
        %2916 = vmatpush.xpose.msra.mxu0 %v2673
        %2917 = vmatpush.xpose.msra.mxu0 %v2653
        %2918 = vmatpush.xpose.msra.mxu0 %v2633
        %2919 = vmatpush.xpose.msra.mxu0 %v2613
        %2920 = vmatmul.f32.gmra.mxu0 %v2693
        %v2921 = vpop.f32.mrf.mxu0
        %v2922 = vadd.f32 %v2902, %v2921
        %2923 = vdwg.mxu0
        %2924 = vmatpush.xpose.msra.mxu0 0.0
        %2925 = vmatpush.xpose.msra.mxu0 0.0
        %2926 = vmatpush.xpose.msra.mxu0 0.0
        %2927 = vmatpush.xpose.msra.mxu0 0.0
        %2928 = vmatpush.xpose.msra.mxu0 0.0
        %2929 = vmatpush.xpose.msra.mxu0 0.0
        %2930 = vmatpush.xpose.msra.mxu0 0.0
        %2931 = vmatpush.xpose.msra.mxu0 0.0
        %2932 = vmatpush.xpose.msra.mxu0 0.0
        %2933 = vmatpush.xpose.msra.mxu0 0.0
        %2934 = vmatpush.xpose.msra.mxu0 0.0
        %2935 = vmatpush.xpose.msra.mxu0 0.0
        %2936 = vmatpush.xpose.msra.mxu0 %v2674
        %2937 = vmatpush.xpose.msra.mxu0 %v2654
        %2938 = vmatpush.xpose.msra.mxu0 %v2634
        %2939 = vmatpush.xpose.msra.mxu0 %v2614
        %2940 = vmatmul.f32.gmra.mxu0 %v2694
        %v2941 = vpop.f32.mrf.mxu0
        %v2942 = vadd.f32 %v2922, %v2941
        %2943 = vdwg.mxu0
        %2944 = vmatpush.xpose.msra.mxu0 0.0
        %2945 = vmatpush.xpose.msra.mxu0 0.0
        %2946 = vmatpush.xpose.msra.mxu0 0.0
        %2947 = vmatpush.xpose.msra.mxu0 0.0
        %2948 = vmatpush.xpose.msra.mxu0 0.0
        %2949 = vmatpush.xpose.msra.mxu0 0.0
        %2950 = vmatpush.xpose.msra.mxu0 0.0
        %2951 = vmatpush.xpose.msra.mxu0 0.0
        %2952 = vmatpush.xpose.msra.mxu0 0.0
        %2953 = vmatpush.xpose.msra.mxu0 0.0
        %2954 = vmatpush.xpose.msra.mxu0 0.0
        %2955 = vmatpush.xpose.msra.mxu0 0.0
        %2956 = vmatpush.xpose.msra.mxu0 %v2675
        %2957 = vmatpush.xpose.msra.mxu0 %v2655
        %2958 = vmatpush.xpose.msra.mxu0 %v2635
        %2959 = vmatpush.xpose.msra.mxu0 %v2615
        %2960 = vmatmul.f32.gmra.mxu0 %v2695
        %v2961 = vpop.f32.mrf.mxu0
        %v2962 = vadd.f32 %v2942, %v2961
        %2963 = vdwg.mxu0
        %2964 = vmatpush.xpose.msra.mxu0 0.0
        %2965 = vmatpush.xpose.msra.mxu0 0.0
        %2966 = vmatpush.xpose.msra.mxu0 0.0
        %2967 = vmatpush.xpose.msra.mxu0 0.0
        %2968 = vmatpush.xpose.msra.mxu0 0.0
        %2969 = vmatpush.xpose.msra.mxu0 0.0
        %2970 = vmatpush.xpose.msra.mxu0 0.0
        %2971 = vmatpush.xpose.msra.mxu0 0.0
        %2972 = vmatpush.xpose.msra.mxu0 0.0
        %2973 = vmatpush.xpose.msra.mxu0 0.0
        %2974 = vmatpush.xpose.msra.mxu0 0.0
        %2975 = vmatpush.xpose.msra.mxu0 0.0
        %2976 = vmatpush.xpose.msra.mxu0 %v2676
        %2977 = vmatpush.xpose.msra.mxu0 %v2656
        %2978 = vmatpush.xpose.msra.mxu0 %v2636
        %2979 = vmatpush.xpose.msra.mxu0 %v2616
        %2980 = vmatmul.f32.gmra.mxu0 %v2696
        %v2981 = vpop.f32.mrf.mxu0
        %v2982 = vadd.f32 %v2962, %v2981
        %2983 = vdwg.mxu0
        %2984 = vmatpush.xpose.msra.mxu0 0.0
        %2985 = vmatpush.xpose.msra.mxu0 0.0
        %2986 = vmatpush.xpose.msra.mxu0 0.0
        %2987 = vmatpush.xpose.msra.mxu0 0.0
        %2988 = vmatpush.xpose.msra.mxu0 0.0
        %2989 = vmatpush.xpose.msra.mxu0 0.0
        %2990 = vmatpush.xpose.msra.mxu0 0.0
        %2991 = vmatpush.xpose.msra.mxu0 0.0
        %2992 = vmatpush.xpose.msra.mxu0 0.0
        %2993 = vmatpush.xpose.msra.mxu0 0.0
        %2994 = vmatpush.xpose.msra.mxu0 0.0
        %2995 = vmatpush.xpose.msra.mxu0 0.0
        %2996 = vmatpush.xpose.msra.mxu0 %v2677
        %2997 = vmatpush.xpose.msra.mxu0 %v2657
        %2998 = vmatpush.xpose.msra.mxu0 %v2637
        %2999 = vmatpush.xpose.msra.mxu0 %v2617
        %3000 = vmatmul.f32.gmra.mxu0 %v2697
        %v3001 = vpop.f32.mrf.mxu0
        %v3002 = vadd.f32 %v2982, %v3001
        %3003 = vdwg.mxu0
        %3004 = vmatpush.xpose.msra.mxu0 0.0
        %3005 = vmatpush.xpose.msra.mxu0 0.0
        %3006 = vmatpush.xpose.msra.mxu0 0.0
        %3007 = vmatpush.xpose.msra.mxu0 0.0
        %3008 = vmatpush.xpose.msra.mxu0 0.0
        %3009 = vmatpush.xpose.msra.mxu0 0.0
        %3010 = vmatpush.xpose.msra.mxu0 0.0
        %3011 = vmatpush.xpose.msra.mxu0 0.0
        %3012 = vmatpush.xpose.msra.mxu0 0.0
        %3013 = vmatpush.xpose.msra.mxu0 0.0
        %3014 = vmatpush.xpose.msra.mxu0 0.0
        %3015 = vmatpush.xpose.msra.mxu0 0.0
        %3016 = vmatpush.xpose.msra.mxu0 %v2678
        %3017 = vmatpush.xpose.msra.mxu0 %v2658
        %3018 = vmatpush.xpose.msra.mxu0 %v2638
        %3019 = vmatpush.xpose.msra.mxu0 %v2618
        %3020 = vmatmul.f32.gmra.mxu0 %v2698
        %v3021 = vpop.f32.mrf.mxu0
        %v3022 = vadd.f32 %v3002, %v3021
        %3023 = vdwg.mxu0
        %3024 = vmatpush.xpose.msra.mxu0 0.0
        %3025 = vmatpush.xpose.msra.mxu0 0.0
        %3026 = vmatpush.xpose.msra.mxu0 0.0
        %3027 = vmatpush.xpose.msra.mxu0 0.0
        %3028 = vmatpush.xpose.msra.mxu0 0.0
        %3029 = vmatpush.xpose.msra.mxu0 0.0
        %3030 = vmatpush.xpose.msra.mxu0 0.0
        %3031 = vmatpush.xpose.msra.mxu0 0.0
        %3032 = vmatpush.xpose.msra.mxu0 0.0
        %3033 = vmatpush.xpose.msra.mxu0 0.0
        %3034 = vmatpush.xpose.msra.mxu0 0.0
        %3035 = vmatpush.xpose.msra.mxu0 0.0
        %3036 = vmatpush.xpose.msra.mxu0 %v2679
        %3037 = vmatpush.xpose.msra.mxu0 %v2659
        %3038 = vmatpush.xpose.msra.mxu0 %v2639
        %3039 = vmatpush.xpose.msra.mxu0 %v2619
        %3040 = vmatmul.f32.gmra.mxu0 %v2699
        %v3041 = vpop.f32.mrf.mxu0
        %v3042 = vadd.f32 %v3022, %v3041
        %3043 = vdwg.mxu0
        %3044 = vmatpush.xpose.msra.mxu0 0.0
        %3045 = vmatpush.xpose.msra.mxu0 0.0
        %3046 = vmatpush.xpose.msra.mxu0 0.0
        %3047 = vmatpush.xpose.msra.mxu0 0.0
        %3048 = vmatpush.xpose.msra.mxu0 0.0
        %3049 = vmatpush.xpose.msra.mxu0 0.0
        %3050 = vmatpush.xpose.msra.mxu0 0.0
        %3051 = vmatpush.xpose.msra.mxu0 0.0
        %3052 = vmatpush.xpose.msra.mxu0 0.0
        %3053 = vmatpush.xpose.msra.mxu0 0.0
        %3054 = vmatpush.xpose.msra.mxu0 0.0
        %3055 = vmatpush.xpose.msra.mxu0 0.0
        %3056 = vmatpush.xpose.msra.mxu0 %v2680
        %3057 = vmatpush.xpose.msra.mxu0 %v2660
        %3058 = vmatpush.xpose.msra.mxu0 %v2640
        %3059 = vmatpush.xpose.msra.mxu0 %v2620
        %3060 = vmatmul.f32.gmra.mxu0 %v2700
        %v3061 = vpop.f32.mrf.mxu0
        %v3062 = vadd.f32 %v3042, %v3061
        %3063 = vdwg.mxu0
        %3064 = vmatpush.xpose.msra.mxu0 0.0
        %3065 = vmatpush.xpose.msra.mxu0 0.0
        %3066 = vmatpush.xpose.msra.mxu0 0.0
        %3067 = vmatpush.xpose.msra.mxu0 0.0
        %3068 = vmatpush.xpose.msra.mxu0 0.0
        %3069 = vmatpush.xpose.msra.mxu0 0.0
        %3070 = vmatpush.xpose.msra.mxu0 0.0
        %3071 = vmatpush.xpose.msra.mxu0 0.0
        %3072 = vmatpush.xpose.msra.mxu0 0.0
        %3073 = vmatpush.xpose.msra.mxu0 0.0
        %3074 = vmatpush.xpose.msra.mxu0 0.0
        %3075 = vmatpush.xpose.msra.mxu0 0.0
        %3076 = vmatpush.xpose.msra.mxu0 %v2681
        %3077 = vmatpush.xpose.msra.mxu0 %v2661
        %3078 = vmatpush.xpose.msra.mxu0 %v2641
        %3079 = vmatpush.xpose.msra.mxu0 %v2621
        %3080 = vmatmul.f32.gmra.mxu0 %v2701
        %v3081 = vpop.f32.mrf.mxu0
        %v3082 = vadd.f32 %v3062, %v3081
        %3083 = vdwg.mxu0
        %3084 = vmatpush.xpose.msra.mxu0 0.0
        %3085 = vmatpush.xpose.msra.mxu0 0.0
        %3086 = vmatpush.xpose.msra.mxu0 0.0
        %3087 = vmatpush.xpose.msra.mxu0 0.0
        %3088 = vmatpush.xpose.msra.mxu0 0.0
        %3089 = vmatpush.xpose.msra.mxu0 0.0
        %3090 = vmatpush.xpose.msra.mxu0 0.0
        %3091 = vmatpush.xpose.msra.mxu0 0.0
        %3092 = vmatpush.xpose.msra.mxu0 0.0
        %3093 = vmatpush.xpose.msra.mxu0 0.0
        %3094 = vmatpush.xpose.msra.mxu0 0.0
        %3095 = vmatpush.xpose.msra.mxu0 0.0
        %3096 = vmatpush.xpose.msra.mxu0 %v2682
        %3097 = vmatpush.xpose.msra.mxu0 %v2662
        %3098 = vmatpush.xpose.msra.mxu0 %v2642
        %3099 = vmatpush.xpose.msra.mxu0 %v2622
        %3100 = vmatmul.f32.gmra.mxu0 %v2702
        %v3101 = vpop.f32.mrf.mxu0
        %v3102 = vadd.f32 %v3082, %v3101
        %3103 = vdwg.mxu0
        %3104 = vmatpush.xpose.msra.mxu0 0.0
        %3105 = vmatpush.xpose.msra.mxu0 0.0
        %3106 = vmatpush.xpose.msra.mxu0 0.0
        %3107 = vmatpush.xpose.msra.mxu0 0.0
        %3108 = vmatpush.xpose.msra.mxu0 0.0
        %3109 = vmatpush.xpose.msra.mxu0 0.0
        %3110 = vmatpush.xpose.msra.mxu0 0.0
        %3111 = vmatpush.xpose.msra.mxu0 0.0
        %3112 = vmatpush.xpose.msra.mxu0 0.0
        %3113 = vmatpush.xpose.msra.mxu0 0.0
        %3114 = vmatpush.xpose.msra.mxu0 0.0
        %3115 = vmatpush.xpose.msra.mxu0 0.0
        %3116 = vmatpush.xpose.msra.mxu0 %v2683
        %3117 = vmatpush.xpose.msra.mxu0 %v2663
        %3118 = vmatpush.xpose.msra.mxu0 %v2643
        %3119 = vmatpush.xpose.msra.mxu0 %v2623
        %3120 = vmatmul.f32.gmra.mxu0 %v2703
        %v3121 = vpop.f32.mrf.mxu0
        %v3122 = vadd.f32 %v3102, %v3121
        %3123 = vdwg.mxu0
        %v3124 = vadd.f32 %v2602, %v3122
        %v3125 = vld [vmem:[%s4] sm:$0x1]
        %v3126 = vadd.f32 %v3124, %v3125
        %v3127 = vmax.f32 %v3126, 0.0
        %v3128 = vld [vmem:[%s5] sm:$0xff]
        %v3129 = vld [vmem:[%s5 + $0x8] sm:$0xff]
        %v3130 = vld [vmem:[%s5 + $0x10] sm:$0xff]
        %v3131 = vld [vmem:[%s5 + $0x18] sm:$0xff]
        %v3132 = vld [vmem:[%s6] sm:$0x1]
        %vm3133 = vcmask 261120
        %v3135 = vsel %vm3133, %v3127, 0
        %3137 = vmatpush.msra.mxu0 0.0
        %3138 = vmatpush.msra.mxu0 0.0
        %3139 = vmatpush.msra.mxu0 0.0
        %3140 = vmatpush.msra.mxu0 0.0
        %3141 = vmatpush.msra.mxu0 0.0
        %3142 = vmatpush.msra.mxu0 0.0
        %3143 = vmatpush.msra.mxu0 0.0
        %3144 = vmatpush.msra.mxu0 0.0
        %3145 = vmatpush.msra.mxu0 0.0
        %3146 = vmatpush.msra.mxu0 0.0
        %3147 = vmatpush.msra.mxu0 0.0
        %3148 = vmatpush.msra.mxu0 0.0
        %3149 = vmatpush.msra.mxu0 %v3131
        %3150 = vmatpush.msra.mxu0 %v3130
        %3151 = vmatpush.msra.mxu0 %v3129
        %3152 = vmatpush.msra.mxu0 %v3128
        %3153 = vmatmul.f32.gmra.mxu0 %v3135
        %v3154 = vpop.f32.mrf.mxu0
        %v3155 = vadd.f32 %v3132, %v3154
        %3156 = vdwg.mxu0
        %vm3157 = vcmask 16384
        %3158 = vst.msk [vmem:[%s268] sm:$0x1] %vm3157, %v3155
        %s3159 = sand.u32 %s181, 1
        %s3160 = scalar_lea.sflag [#allocation3], %s3159
        %s3161 = sand.u32 %s181, 1
        %s3162 = scalar_lea.vmem [#allocation2], %s3161
        // Predicated region
        $region49: #{tception_forward.1} parent=47 // pred_check
          %p3163 = pneg %p191
        $region50: #{tception_forward.1} parent=47 // pred_check_branch
          %3165 = sbr.rel (%p3163) target = $region52
        $region51: #{tception_forward.1} parent=47 // pred_region
          %3167 = vsyncadd %s3160, 0
          %s3168 = scalar_lea.hbm %s7, %s21
          %s3170 = sshll.u32 %s3162, 4
          %s3171 = int_to_ptr.vmem [resolvable:$true] %s3170
          %s3172 = sshll.u32 %s3168, 4
          %s3173 = int_to_ptr.hbm [resolvable:$true] %s3172
          %3175 = dma.vmem_to_hbm [thread:$0]  %s3171, 16, %s3173, %s3160
        $region52: #{tception_forward.1} parent=47 // pred_fallthru
          _
      $region48: #{tception_forward.1} parent=5 // pred_fallthru
        _
      %p3176 = scmp.le.s32.totalorder 2, %s16
      // Predicated region
      $region53: #{tception_forward.1} parent=5 // pred_check
        %p3177 = pneg %p3176
      $region54: #{tception_forward.1} parent=5 // pred_check_branch
        %3179 = sbr.rel (%p3177) target = $region56
      $region55: #{tception_forward.1} parent=5 // pred_region
        %s3180 = ssub.s32 %s16, 2
        // Predicated region
        $region57: #{tception_forward.1} parent=55 // pred_check
          %p3181 = pneg %p197
        $region58: #{tception_forward.1} parent=55 // pred_check_branch
          %3183 = sbr.rel (%p3181) target = $region60
        $region59: #{tception_forward.1} parent=55 // pred_region
          %s3184 = sand.u32 %s182, 1
          %s3185 = scalar_lea.sflag [#allocation3], %s3184
          %s3186 = sand.u32 %s182, 1
          %s3187 = scalar_lea.vmem [#allocation2], %s3186
          %3189 = dma.done %s3185, 16
        $region60: #{tception_forward.1} parent=55 // pred_fallthru
          _
      $region56: #{tception_forward.1} parent=5 // pred_fallthru
        _
    $region6: #{tception_forward.1} parent=1 // loop_footer
      %s20 = sadd.s32 1, %s16
    $region7: #{tception_forward.1} parent=1 // loop_footer_branch
      %15 = sbr.rel target = $region3
    $region8: #{tception_forward.1} parent=1 // loop_exit
      _
    %3190 = vsyncpa [#allocation3], 1
    %s3191 = scalar_lea.sflag [#allocation3], 1
    %3192 = vsyncpa %s3191, 1

</llo_original>
